<compile_context>
chip_gen: v5e
topology: v5e:2x2
jax: 0.10.0
libtpu: 0.0.40
codegen_flags: <defaults>
</compile_context>

<pallas_src>
import jax
import jax.numpy as jnp
from jax.experimental import pallas as pl
from jax.experimental.pallas import tpu as pltpu

NEG_SLOPE = 0.2     # LeakyReLU negative slope
BN_EPS = 1e-5       # PyTorch BatchNorm2d default eps


# ------------------------------ helpers -------------------------------------

def _block_m(m, target=512):
    """Largest multiple-of-8 divisor of m that is <= target (else full m)."""
    if m <= target:
        return m
    for bm in range(target, 7, -8):
        if m % bm == 0:
            return bm
    return m


# --------------------------- Pallas kernels ---------------------------------

def _matmul_lrelu_kernel(x_ref, w_ref, o_ref):
    acc = jnp.dot(x_ref[...], w_ref[...], preferred_element_type=jnp.float32)
    o_ref[...] = jnp.maximum(acc, NEG_SLOPE * acc)


def _matmul_stats_kernel(x_ref, w_ref, o_ref, s_ref):
    # Conv-as-matmul block plus fused per-channel sum / sum-of-squares
    # accumulation for the following BatchNorm (accumulator output resident
    # across the "arbitrary" M grid axis).
    y = jnp.dot(x_ref[...], w_ref[...], preferred_element_type=jnp.float32)
    o_ref[...] = y
    upd = jnp.concatenate(
        [jnp.sum(y, axis=0, keepdims=True),
         jnp.sum(y * y, axis=0, keepdims=True)], axis=0)

    @pl.when(pl.program_id(0) == 0)
    def _():
        s_ref[...] = upd

    @pl.when(pl.program_id(0) != 0)
    def _():
        s_ref[...] = s_ref[...] + upd


def _affine_lrelu_kernel(x_ref, sc_ref, sh_ref, o_ref):
    z = x_ref[...] * sc_ref[...] + sh_ref[...]
    o_ref[...] = jnp.maximum(z, NEG_SLOPE * z)


def _matmul_sigmoid_kernel(x_ref, w_ref, o_ref):
    acc = jnp.dot(x_ref[...], w_ref[...], preferred_element_type=jnp.float32)
    o_ref[...] = 1.0 / (1.0 + jnp.exp(-acc))


# --------------------------- Pallas wrappers --------------------------------

def conv_matmul_lrelu(patches, w2d):
    """(M, K)bf16 @ (K, Cout)bf16 -> LeakyReLU -> (M, Cout)f32."""
    M, K = patches.shape
    _, N = w2d.shape
    bm = _block_m(M)
    return pl.pallas_call(
        _matmul_lrelu_kernel,
        grid=(M // bm,),
        in_specs=[pl.BlockSpec((bm, K), lambda i: (i, 0)),
                  pl.BlockSpec((K, N), lambda i: (0, 0))],
        out_specs=pl.BlockSpec((bm, N), lambda i: (i, 0)),
        out_shape=jax.ShapeDtypeStruct((M, N), jnp.float32),
        compiler_params=pltpu.CompilerParams(
            dimension_semantics=("parallel",)),
    )(patches, w2d)


def conv_matmul_with_stats(patches, w2d):
    """Conv matmul plus fused per-channel (sum, sumsq) for BatchNorm."""
    M, K = patches.shape
    _, N = w2d.shape
    bm = _block_m(M)
    y, stats = pl.pallas_call(
        _matmul_stats_kernel,
        grid=(M // bm,),
        in_specs=[pl.BlockSpec((bm, K), lambda i: (i, 0)),
                  pl.BlockSpec((K, N), lambda i: (0, 0))],
        out_specs=[pl.BlockSpec((bm, N), lambda i: (i, 0)),
                   pl.BlockSpec((2, N), lambda i: (0, 0))],
        out_shape=[jax.ShapeDtypeStruct((M, N), jnp.float32),
                   jax.ShapeDtypeStruct((2, N), jnp.float32)],
        compiler_params=pltpu.CompilerParams(
            dimension_semantics=("arbitrary",)),   # accumulator across M
    )(patches, w2d)
    return y, stats


def affine_lrelu(x2d, scale, shift):
    """y = LeakyReLU(x * scale + shift), streamed over M tiles."""
    M, C = x2d.shape
    bm = _block_m(M, target=1024)
    sc = scale.reshape(1, C).astype(jnp.float32)
    sh = shift.reshape(1, C).astype(jnp.float32)
    return pl.pallas_call(
        _affine_lrelu_kernel,
        grid=(M // bm,),
        in_specs=[pl.BlockSpec((bm, C), lambda i: (i, 0)),
                  pl.BlockSpec((1, C), lambda i: (0, 0)),
                  pl.BlockSpec((1, C), lambda i: (0, 0))],
        out_specs=pl.BlockSpec((bm, C), lambda i: (i, 0)),
        out_shape=jax.ShapeDtypeStruct((M, C), jnp.float32),
        compiler_params=pltpu.CompilerParams(
            dimension_semantics=("parallel",)),
    )(x2d, sc, sh)


def matmul_sigmoid(x2d, w2d):
    """Final 4x4 conv collapsed to (N, 16*C) @ (16*C, 1) + Sigmoid. Tiny."""
    M, K = x2d.shape
    _, N = w2d.shape
    return pl.pallas_call(
        _matmul_sigmoid_kernel,
        grid=(1,),
        in_specs=[pl.BlockSpec((M, K), lambda i: (0, 0)),
                  pl.BlockSpec((K, N), lambda i: (0, 0))],
        out_specs=pl.BlockSpec((M, N), lambda i: (0, 0)),
        out_shape=jax.ShapeDtypeStruct((M, N), jnp.float32),
    )(x2d, w2d)


# --------------------------- conv building blocks ---------------------------

def im2col_s2p1(x_nhwc):
    """4x4 patches, stride 2, pad 1 (pure-JAX data-movement glue).

    Returns (N*Ho*Wo, 16*C) with (kh, kw, cin) ordering along the last axis,
    matching the weight reshape below, plus the output spatial dims.
    """
    N, H, W, C = x_nhwc.shape
    Ho, Wo = H // 2, W // 2
    xp = jnp.pad(x_nhwc, ((0, 0), (1, 1), (1, 1), (0, 0)))
    cols = [xp[:, kh:kh + 2 * Ho:2, kw:kw + 2 * Wo:2, :]
            for kh in range(4) for kw in range(4)]
    patches = jnp.concatenate(cols, axis=-1)          # (N, Ho, Wo, 16*C)
    return patches.reshape(N * Ho * Wo, 16 * C), (N, Ho, Wo)


def bn_scale_shift(stats, m_rows, gamma, beta):
    """Training-mode batch-norm: biased variance over N*H*W per channel."""
    mean = stats[0] / m_rows
    var = stats[1] / m_rows - mean * mean
    inv = jax.lax.rsqrt(var + BN_EPS)
    scale = gamma * inv
    shift = beta - mean * scale
    return scale, shift


# ------------------------------ Discriminator -------------------------------

def init_discriminator_params(key, nc, ndf):
    """Matches weights_init(): Conv weights ~ N(0, 0.02),
    BatchNorm weight ~ N(1, 0.02), BatchNorm bias = 0."""
    ks = jax.random.split(key, 8)
    chans = [nc, ndf, ndf * 2, ndf * 4, ndf * 8, 1]
    params = {}
    for i in range(5):
        cout, cin = chans[i + 1], chans[i]
        w = 0.02 * jax.random.normal(ks[i], (cout, cin, 4, 4), jnp.float32)
        # (Cout, Cin, kh, kw) -> (kh*kw*Cin, Cout), matching im2col ordering;
        # stored in bf16 for the MXU (f32 accumulation inside the kernels).
        params[f"w{i + 1}"] = jnp.transpose(w, (2, 3, 1, 0)).reshape(
            16 * cin, cout).astype(jnp.bfloat16)
    for i in (2, 3, 4):
        c = chans[i]
        params[f"g{i}"] = 1.0 + 0.02 * jax.random.normal(
            ks[5 + (i - 2)], (c,), jnp.float32)
        params[f"b{i}"] = jnp.zeros((c,), jnp.float32)
    return params


def discriminator_forward(x_nchw, params):
    """x_nchw: (N, nc, 64, 64) -> (N,), matching the PyTorch Discriminator
    in its default (training-mode BatchNorm) forward.
    """
    # TODO(synk): BatchNorm running_mean/running_var are not tracked, so only
    # the training-mode forward (batch statistics) is reproduced here.
    x = jnp.transpose(x_nchw.astype(jnp.float32), (0, 2, 3, 1))  # NHWC
    N, H, W, _ = x.shape
    assert H == 64 and W == 64, "DCGAN discriminator expects 64x64 input"

    # Layer 1: Conv(nc -> ndf, 4, 2, 1) + LeakyReLU(0.2)          64 -> 32
    p, (n, Ho, Wo) = im2col_s2p1(x.astype(jnp.bfloat16))
    h = conv_matmul_lrelu(p, params["w1"]).reshape(n, Ho, Wo, -1)

    # Layers 2-4: Conv(.., 4, 2, 1) + BN + LeakyReLU      32 -> 16 -> 8 -> 4
    for i in (2, 3, 4):
        p, (n, Ho, Wo) = im2col_s2p1(h.astype(jnp.bfloat16))
        y, stats = conv_matmul_with_stats(p, params[f"w{i}"])
        scale, shift = bn_scale_shift(stats, y.shape[0],
                                      params[f"g{i}"], params[f"b{i}"])
        h = affine_lrelu(y, scale, shift).reshape(n, Ho, Wo, -1)

    # Layer 5: Conv(ndf*8 -> 1, 4, 1, 0) on the 4x4 map + Sigmoid
    n, Hf, Wf, C = h.shape
    flat = h.astype(jnp.bfloat16).reshape(n, Hf * Wf * C)  # (kh, kw, cin)
    out = matmul_sigmoid(flat, params["w5"])                # (N, 1)
    return out.reshape(-1)                                  # .view(-1,1).squeeze(1)


# ---------------------------------- main -------------------------------------

if __name__ == "__main__":
    nc, ndf = 3, 16
    batch = 2

    key = jax.random.PRNGKey(0)
    k_in, k_par = jax.random.split(key)

    params = init_discriminator_params(k_par, nc, ndf)
    x = jax.random.normal(k_in, (batch, nc, 64, 64), jnp.float32)

    fwd = jax.jit(lambda z: discriminator_forward(z, params))
    out = fwd(x)
    out = jax.block_until_ready(out)

    assert out.shape == (batch,), out.shape
    assert bool(jnp.all(jnp.isfinite(out)))
    assert bool(jnp.all((out >= 0.0) & (out <= 1.0)))   # sigmoid range
    print("KERNEL_OK")
</pallas_src>

<mosaic_0001>
module attributes {stable_mosaic.version = 11 : i64} {
  func.func @_matmul_lrelu_kernel(%arg0: i32, %arg1: memref<512x48xbf16, #tpu.memory_space<vmem>>, %arg2: memref<48x16xbf16, #tpu.memory_space<vmem>>, %arg3: memref<512x16xf32, #tpu.memory_space<vmem>>) attributes {dimension_semantics = [#tpu.dimension_semantics<parallel>], iteration_bounds = array<i64: 4>, scalar_prefetch = 0 : i64, scratch_operands = 0 : i64, tpu.core_type = #tpu.core_type<tc>, window_params = [{transform_indices = @transform_0, window_bounds = array<i64: 512, 48>}, {pipeline_mode = #tpu.pipeline_mode<synchronous>, transform_indices = @transform_1, window_bounds = array<i64: 48, 16>}, {transform_indices = @transform_2, window_bounds = array<i64: 512, 16>}]} {
    %c0 = arith.constant 0 : index
    %c0_0 = arith.constant 0 : index
    %0 = vector.load %arg1[%c0, %c0_0] : memref<512x48xbf16, #tpu.memory_space<vmem>>, vector<512x48xbf16>
    %c0_1 = arith.constant 0 : index
    %c0_2 = arith.constant 0 : index
    %1 = vector.load %arg2[%c0_1, %c0_2] : memref<48x16xbf16, #tpu.memory_space<vmem>>, vector<48x16xbf16>
    %cst = arith.constant dense<0.000000e+00> : vector<512x16xf32>
    %2 = tpu.matmul %0, %1, %cst {dimension_numbers = #tpu.dot_dimension_numbers<[1], [0], [0], [1], [0, 0, 1, 1], [], []>} : vector<512x48xbf16>, vector<48x16xbf16>, vector<512x16xf32> -> vector<512x16xf32>
    %cst_3 = arith.constant 2.000000e-01 : f32
    %3 = vector.broadcast %cst_3 : f32 to vector<512x16xf32>
    %4 = arith.mulf %3, %2 : vector<512x16xf32>
    %5 = arith.maximumf %2, %4 : vector<512x16xf32>
    %c0_4 = arith.constant 0 : index
    %c0_5 = arith.constant 0 : index
    %6 = vector.load %arg3[%c0_4, %c0_5] : memref<512x16xf32, #tpu.memory_space<vmem>>, vector<512x16xf32>
    tpu.vector_store %arg3[%c0_4, %c0_5], %5 {strides = array<i32>} : memref<512x16xf32, #tpu.memory_space<vmem>>, vector<512x16xf32>,
    return
  }
  func.func @transform_0(%arg0: i32) -> (i32, i32) {
    %c0_i32 = arith.constant 0 : i32
    %c0_i32_0 = arith.constant 0 : i32
    return %arg0, %c0_i32 : i32, i32
  }
  func.func @transform_1(%arg0: i32) -> (i32, i32) {
    %c0_i32 = arith.constant 0 : i32
    %c0_i32_0 = arith.constant 0 : i32
    %c0_i32_1 = arith.constant 0 : i32
    return %c0_i32, %c0_i32_0 : i32, i32
  }
  func.func @transform_2(%arg0: i32) -> (i32, i32) {
    %c0_i32 = arith.constant 0 : i32
    %c0_i32_0 = arith.constant 0 : i32
    return %arg0, %c0_i32 : i32, i32
  }
}

module attributes {stable_mosaic.version = 11 : i64} {
  func.func @_affine_lrelu_kernel(%arg0: i32, %arg1: memref<512x32xf32, #tpu.memory_space<vmem>>, %arg2: memref<1x32xf32, #tpu.memory_space<vmem>>, %arg3: memref<1x32xf32, #tpu.memory_space<vmem>>, %arg4: memref<512x32xf32, #tpu.memory_space<vmem>>) attributes {dimension_semantics = [#tpu.dimension_semantics<parallel>], iteration_bounds = array<i64: 1>, scalar_prefetch = 0 : i64, scratch_operands = 0 : i64, tpu.core_type = #tpu.core_type<tc>, window_params = [{transform_indices = @transform_0, window_bounds = array<i64: 512, 32>}, {pipeline_mode = #tpu.pipeline_mode<synchronous>, transform_indices = @transform_1, window_bounds = array<i64: 1, 32>}, {pipeline_mode = #tpu.pipeline_mode<synchronous>, transform_indices = @transform_2, window_bounds = array<i64: 1, 32>}, {transform_indices = @transform_3, window_bounds = array<i64: 512, 32>}]} {
    %c0 = arith.constant 0 : index
    %c0_0 = arith.constant 0 : index
    %0 = vector.load %arg1[%c0, %c0_0] : memref<512x32xf32, #tpu.memory_space<vmem>>, vector<512x32xf32>
    %c0_1 = arith.constant 0 : index
    %c0_2 = arith.constant 0 : index
    %1 = vector.load %arg2[%c0_1, %c0_2] : memref<1x32xf32, #tpu.memory_space<vmem>>, vector<1x32xf32>
    %2 = vector.broadcast %1 : vector<1x32xf32> to vector<512x32xf32>
    %3 = arith.mulf %0, %2 : vector<512x32xf32>
    %c0_3 = arith.constant 0 : index
    %c0_4 = arith.constant 0 : index
    %4 = vector.load %arg3[%c0_3, %c0_4] : memref<1x32xf32, #tpu.memory_space<vmem>>, vector<1x32xf32>
    %5 = vector.broadcast %4 : vector<1x32xf32> to vector<512x32xf32>
    %6 = arith.addf %3, %5 : vector<512x32xf32>
    %cst = arith.constant 2.000000e-01 : f32
    %7 = vector.broadcast %cst : f32 to vector<512x32xf32>
    %8 = arith.mulf %7, %6 : vector<512x32xf32>
    %9 = arith.maximumf %6, %8 : vector<512x32xf32>
    %c0_5 = arith.constant 0 : index
    %c0_6 = arith.constant 0 : index
    %10 = vector.load %arg4[%c0_5, %c0_6] : memref<512x32xf32, #tpu.memory_space<vmem>>, vector<512x32xf32>
    tpu.vector_store %arg4[%c0_5, %c0_6], %9 {strides = array<i32>} : memref<512x32xf32, #tpu.memory_space<vmem>>, vector<512x32xf32>,
    return
  }
  func.func @transform_0(%arg0: i32) -> (i32, i32) {
    %c0_i32 = arith.constant 0 : i32
    %c0_i32_0 = arith.constant 0 : i32
    return %arg0, %c0_i32 : i32, i32
  }
  func.func @transform_1(%arg0: i32) -> (i32, i32) {
    %c0_i32 = arith.constant 0 : i32
    %c0_i32_0 = arith.constant 0 : i32
    %c0_i32_1 = arith.constant 0 : i32
    return %c0_i32, %c0_i32_0 : i32, i32
  }
  func.func @transform_2(%arg0: i32) -> (i32, i32) {
    %c0_i32 = arith.constant 0 : i32
    %c0_i32_0 = arith.constant 0 : i32
    %c0_i32_1 = arith.constant 0 : i32
    return %c0_i32, %c0_i32_0 : i32, i32
  }
  func.func @transform_3(%arg0: i32) -> (i32, i32) {
    %c0_i32 = arith.constant 0 : i32
    %c0_i32_0 = arith.constant 0 : i32
    return %arg0, %c0_i32 : i32, i32
  }
}

module attributes {stable_mosaic.version = 11 : i64} {
  func.func @_matmul_stats_kernel(%arg0: i32, %arg1: memref<512x256xbf16, #tpu.memory_space<vmem>>, %arg2: memref<256x32xbf16, #tpu.memory_space<vmem>>, %arg3: memref<512x32xf32, #tpu.memory_space<vmem>>, %arg4: memref<2x32xf32, #tpu.memory_space<vmem>>) attributes {dimension_semantics = [#tpu.dimension_semantics<arbitrary>], iteration_bounds = array<i64: 1>, scalar_prefetch = 0 : i64, scratch_operands = 0 : i64, tpu.core_type = #tpu.core_type<tc>, window_params = [{transform_indices = @transform_0, window_bounds = array<i64: 512, 256>}, {pipeline_mode = #tpu.pipeline_mode<synchronous>, transform_indices = @transform_1, window_bounds = array<i64: 256, 32>}, {transform_indices = @transform_2, window_bounds = array<i64: 512, 32>}, {pipeline_mode = #tpu.pipeline_mode<synchronous>, transform_indices = @transform_3, window_bounds = array<i64: 2, 32>}]} {
    %c0 = arith.constant 0 : index
    %c0_0 = arith.constant 0 : index
    %0 = vector.load %arg1[%c0, %c0_0] : memref<512x256xbf16, #tpu.memory_space<vmem>>, vector<512x256xbf16>
    %c0_1 = arith.constant 0 : index
    %c0_2 = arith.constant 0 : index
    %1 = vector.load %arg2[%c0_1, %c0_2] : memref<256x32xbf16, #tpu.memory_space<vmem>>, vector<256x32xbf16>
    %cst = arith.constant dense<0.000000e+00> : vector<512x32xf32>
    %2 = tpu.matmul %0, %1, %cst {dimension_numbers = #tpu.dot_dimension_numbers<[1], [0], [0], [1], [0, 0, 1, 1], [], []>} : vector<512x256xbf16>, vector<256x32xbf16>, vector<512x32xf32> -> vector<512x32xf32>
    %c0_3 = arith.constant 0 : index
    %c0_4 = arith.constant 0 : index
    %3 = vector.load %arg3[%c0_3, %c0_4] : memref<512x32xf32, #tpu.memory_space<vmem>>, vector<512x32xf32>
    tpu.vector_store %arg3[%c0_3, %c0_4], %2 {strides = array<i32>} : memref<512x32xf32, #tpu.memory_space<vmem>>, vector<512x32xf32>,
    %cst_5 = arith.constant dense<0.000000e+00> : vector<32xf32>
    %4 = vector.multi_reduction <add>, %2, %cst_5 [0] : vector<512x32xf32> to vector<32xf32>
    %5 = vector.shape_cast %4 : vector<32xf32> to vector<1x32xf32>
    %6 = arith.mulf %2, %2 : vector<512x32xf32>
    %cst_6 = arith.constant dense<0.000000e+00> : vector<32xf32>
    %7 = vector.multi_reduction <add>, %6, %cst_6 [0] : vector<512x32xf32> to vector<32xf32>
    %8 = vector.shape_cast %7 : vector<32xf32> to vector<1x32xf32>
    %9 = tpu.concatenate %5, %8 in 0 : vector<1x32xf32>, vector<1x32xf32> -> vector<2x32xf32>
    %c0_i32 = arith.constant 0 : i32
    %10 = arith.cmpi eq, %arg0, %c0_i32 : i32
    %11 = arith.extui %10 : i1 to i32
    %c0_i32_7 = arith.constant 0 : i32
    %12 = arith.cmpi ne, %11, %c0_i32_7 : i32
    scf.if %12 {
      %c0_10 = arith.constant 0 : index
      %c0_11 = arith.constant 0 : index
      %16 = vector.load %arg4[%c0_10, %c0_11] : memref<2x32xf32, #tpu.memory_space<vmem>>, vector<2x32xf32>
      tpu.vector_store %arg4[%c0_10, %c0_11], %9 {strides = array<i32>} : memref<2x32xf32, #tpu.memory_space<vmem>>, vector<2x32xf32>,
    } else {
    }
    %c0_i32_8 = arith.constant 0 : i32
    %13 = arith.cmpi ne, %arg0, %c0_i32_8 : i32
    %14 = arith.extui %13 : i1 to i32
    %c0_i32_9 = arith.constant 0 : i32
    %15 = arith.cmpi ne, %14, %c0_i32_9 : i32
    scf.if %15 {
      %c0_10 = arith.constant 0 : index
      %c0_11 = arith.constant 0 : index
      %16 = vector.load %arg4[%c0_10, %c0_11] : memref<2x32xf32, #tpu.memory_space<vmem>>, vector<2x32xf32>
      %17 = arith.addf %16, %9 : vector<2x32xf32>
      %c0_12 = arith.constant 0 : index
      %c0_13 = arith.constant 0 : index
      %18 = vector.load %arg4[%c0_12, %c0_13] : memref<2x32xf32, #tpu.memory_space<vmem>>, vector<2x32xf32>
      tpu.vector_store %arg4[%c0_12, %c0_13], %17 {strides = array<i32>} : memref<2x32xf32, #tpu.memory_space<vmem>>, vector<2x32xf32>,
    } else {
    }
    return
  }
  func.func @transform_0(%arg0: i32) -> (i32, i32) {
    %c0_i32 = arith.constant 0 : i32
    %c0_i32_0 = arith.constant 0 : i32
    return %arg0, %c0_i32 : i32, i32
  }
  func.func @transform_1(%arg0: i32) -> (i32, i32) {
    %c0_i32 = arith.constant 0 : i32
    %c0_i32_0 = arith.constant 0 : i32
    %c0_i32_1 = arith.constant 0 : i32
    return %c0_i32, %c0_i32_0 : i32, i32
  }
  func.func @transform_2(%arg0: i32) -> (i32, i32) {
    %c0_i32 = arith.constant 0 : i32
    %c0_i32_0 = arith.constant 0 : i32
    return %arg0, %c0_i32 : i32, i32
  }
  func.func @transform_3(%arg0: i32) -> (i32, i32) {
    %c0_i32 = arith.constant 0 : i32
    %c0_i32_0 = arith.constant 0 : i32
    %c0_i32_1 = arith.constant 0 : i32
    return %c0_i32, %c0_i32_0 : i32, i32
  }
}

module attributes {stable_mosaic.version = 11 : i64} {
  func.func @_matmul_stats_kernel(%arg0: i32, %arg1: memref<128x512xbf16, #tpu.memory_space<vmem>>, %arg2: memref<512x64xbf16, #tpu.memory_space<vmem>>, %arg3: memref<128x64xf32, #tpu.memory_space<vmem>>, %arg4: memref<2x64xf32, #tpu.memory_space<vmem>>) attributes {dimension_semantics = [#tpu.dimension_semantics<arbitrary>], iteration_bounds = array<i64: 1>, scalar_prefetch = 0 : i64, scratch_operands = 0 : i64, tpu.core_type = #tpu.core_type<tc>, window_params = [{transform_indices = @transform_0, window_bounds = array<i64: 128, 512>}, {pipeline_mode = #tpu.pipeline_mode<synchronous>, transform_indices = @transform_1, window_bounds = array<i64: 512, 64>}, {transform_indices = @transform_2, window_bounds = array<i64: 128, 64>}, {pipeline_mode = #tpu.pipeline_mode<synchronous>, transform_indices = @transform_3, window_bounds = array<i64: 2, 64>}]} {
    %c0 = arith.constant 0 : index
    %c0_0 = arith.constant 0 : index
    %0 = vector.load %arg1[%c0, %c0_0] : memref<128x512xbf16, #tpu.memory_space<vmem>>, vector<128x512xbf16>
    %c0_1 = arith.constant 0 : index
    %c0_2 = arith.constant 0 : index
    %1 = vector.load %arg2[%c0_1, %c0_2] : memref<512x64xbf16, #tpu.memory_space<vmem>>, vector<512x64xbf16>
    %cst = arith.constant dense<0.000000e+00> : vector<128x64xf32>
    %2 = tpu.matmul %0, %1, %cst {dimension_numbers = #tpu.dot_dimension_numbers<[1], [0], [0], [1], [0, 0, 1, 1], [], []>} : vector<128x512xbf16>, vector<512x64xbf16>, vector<128x64xf32> -> vector<128x64xf32>
    %c0_3 = arith.constant 0 : index
    %c0_4 = arith.constant 0 : index
    %3 = vector.load %arg3[%c0_3, %c0_4] : memref<128x64xf32, #tpu.memory_space<vmem>>, vector<128x64xf32>
    tpu.vector_store %arg3[%c0_3, %c0_4], %2 {strides = array<i32>} : memref<128x64xf32, #tpu.memory_space<vmem>>, vector<128x64xf32>,
    %cst_5 = arith.constant dense<0.000000e+00> : vector<64xf32>
    %4 = vector.multi_reduction <add>, %2, %cst_5 [0] : vector<128x64xf32> to vector<64xf32>
    %5 = vector.shape_cast %4 : vector<64xf32> to vector<1x64xf32>
    %6 = arith.mulf %2, %2 : vector<128x64xf32>
    %cst_6 = arith.constant dense<0.000000e+00> : vector<64xf32>
    %7 = vector.multi_reduction <add>, %6, %cst_6 [0] : vector<128x64xf32> to vector<64xf32>
    %8 = vector.shape_cast %7 : vector<64xf32> to vector<1x64xf32>
    %9 = tpu.concatenate %5, %8 in 0 : vector<1x64xf32>, vector<1x64xf32> -> vector<2x64xf32>
    %c0_i32 = arith.constant 0 : i32
    %10 = arith.cmpi eq, %arg0, %c0_i32 : i32
    %11 = arith.extui %10 : i1 to i32
    %c0_i32_7 = arith.constant 0 : i32
    %12 = arith.cmpi ne, %11, %c0_i32_7 : i32
    scf.if %12 {
      %c0_10 = arith.constant 0 : index
      %c0_11 = arith.constant 0 : index
      %16 = vector.load %arg4[%c0_10, %c0_11] : memref<2x64xf32, #tpu.memory_space<vmem>>, vector<2x64xf32>
      tpu.vector_store %arg4[%c0_10, %c0_11], %9 {strides = array<i32>} : memref<2x64xf32, #tpu.memory_space<vmem>>, vector<2x64xf32>,
    } else {
    }
    %c0_i32_8 = arith.constant 0 : i32
    %13 = arith.cmpi ne, %arg0, %c0_i32_8 : i32
    %14 = arith.extui %13 : i1 to i32
    %c0_i32_9 = arith.constant 0 : i32
    %15 = arith.cmpi ne, %14, %c0_i32_9 : i32
    scf.if %15 {
      %c0_10 = arith.constant 0 : index
      %c0_11 = arith.constant 0 : index
      %16 = vector.load %arg4[%c0_10, %c0_11] : memref<2x64xf32, #tpu.memory_space<vmem>>, vector<2x64xf32>
      %17 = arith.addf %16, %9 : vector<2x64xf32>
      %c0_12 = arith.constant 0 : index
      %c0_13 = arith.constant 0 : index
      %18 = vector.load %arg4[%c0_12, %c0_13] : memref<2x64xf32, #tpu.memory_space<vmem>>, vector<2x64xf32>
      tpu.vector_store %arg4[%c0_12, %c0_13], %17 {strides = array<i32>} : memref<2x64xf32, #tpu.memory_space<vmem>>, vector<2x64xf32>,
    } else {
    }
    return
  }
  func.func @transform_0(%arg0: i32) -> (i32, i32) {
    %c0_i32 = arith.constant 0 : i32
    %c0_i32_0 = arith.constant 0 : i32
    return %arg0, %c0_i32 : i32, i32
  }
  func.func @transform_1(%arg0: i32) -> (i32, i32) {
    %c0_i32 = arith.constant 0 : i32
    %c0_i32_0 = arith.constant 0 : i32
    %c0_i32_1 = arith.constant 0 : i32
    return %c0_i32, %c0_i32_0 : i32, i32
  }
  func.func @transform_2(%arg0: i32) -> (i32, i32) {
    %c0_i32 = arith.constant 0 : i32
    %c0_i32_0 = arith.constant 0 : i32
    return %arg0, %c0_i32 : i32, i32
  }
  func.func @transform_3(%arg0: i32) -> (i32, i32) {
    %c0_i32 = arith.constant 0 : i32
    %c0_i32_0 = arith.constant 0 : i32
    %c0_i32_1 = arith.constant 0 : i32
    return %c0_i32, %c0_i32_0 : i32, i32
  }
}

module attributes {stable_mosaic.version = 11 : i64} {
  func.func @_affine_lrelu_kernel(%arg0: i32, %arg1: memref<128x64xf32, #tpu.memory_space<vmem>>, %arg2: memref<1x64xf32, #tpu.memory_space<vmem>>, %arg3: memref<1x64xf32, #tpu.memory_space<vmem>>, %arg4: memref<128x64xf32, #tpu.memory_space<vmem>>) attributes {dimension_semantics = [#tpu.dimension_semantics<parallel>], iteration_bounds = array<i64: 1>, scalar_prefetch = 0 : i64, scratch_operands = 0 : i64, tpu.core_type = #tpu.core_type<tc>, window_params = [{transform_indices = @transform_0, window_bounds = array<i64: 128, 64>}, {pipeline_mode = #tpu.pipeline_mode<synchronous>, transform_indices = @transform_1, window_bounds = array<i64: 1, 64>}, {pipeline_mode = #tpu.pipeline_mode<synchronous>, transform_indices = @transform_2, window_bounds = array<i64: 1, 64>}, {transform_indices = @transform_3, window_bounds = array<i64: 128, 64>}]} {
    %c0 = arith.constant 0 : index
    %c0_0 = arith.constant 0 : index
    %0 = vector.load %arg1[%c0, %c0_0] : memref<128x64xf32, #tpu.memory_space<vmem>>, vector<128x64xf32>
    %c0_1 = arith.constant 0 : index
    %c0_2 = arith.constant 0 : index
    %1 = vector.load %arg2[%c0_1, %c0_2] : memref<1x64xf32, #tpu.memory_space<vmem>>, vector<1x64xf32>
    %2 = vector.broadcast %1 : vector<1x64xf32> to vector<128x64xf32>
    %3 = arith.mulf %0, %2 : vector<128x64xf32>
    %c0_3 = arith.constant 0 : index
    %c0_4 = arith.constant 0 : index
    %4 = vector.load %arg3[%c0_3, %c0_4] : memref<1x64xf32, #tpu.memory_space<vmem>>, vector<1x64xf32>
    %5 = vector.broadcast %4 : vector<1x64xf32> to vector<128x64xf32>
    %6 = arith.addf %3, %5 : vector<128x64xf32>
    %cst = arith.constant 2.000000e-01 : f32
    %7 = vector.broadcast %cst : f32 to vector<128x64xf32>
    %8 = arith.mulf %7, %6 : vector<128x64xf32>
    %9 = arith.maximumf %6, %8 : vector<128x64xf32>
    %c0_5 = arith.constant 0 : index
    %c0_6 = arith.constant 0 : index
    %10 = vector.load %arg4[%c0_5, %c0_6] : memref<128x64xf32, #tpu.memory_space<vmem>>, vector<128x64xf32>
    tpu.vector_store %arg4[%c0_5, %c0_6], %9 {strides = array<i32>} : memref<128x64xf32, #tpu.memory_space<vmem>>, vector<128x64xf32>,
    return
  }
  func.func @transform_0(%arg0: i32) -> (i32, i32) {
    %c0_i32 = arith.constant 0 : i32
    %c0_i32_0 = arith.constant 0 : i32
    return %arg0, %c0_i32 : i32, i32
  }
  func.func @transform_1(%arg0: i32) -> (i32, i32) {
    %c0_i32 = arith.constant 0 : i32
    %c0_i32_0 = arith.constant 0 : i32
    %c0_i32_1 = arith.constant 0 : i32
    return %c0_i32, %c0_i32_0 : i32, i32
  }
  func.func @transform_2(%arg0: i32) -> (i32, i32) {
    %c0_i32 = arith.constant 0 : i32
    %c0_i32_0 = arith.constant 0 : i32
    %c0_i32_1 = arith.constant 0 : i32
    return %c0_i32, %c0_i32_0 : i32, i32
  }
  func.func @transform_3(%arg0: i32) -> (i32, i32) {
    %c0_i32 = arith.constant 0 : i32
    %c0_i32_0 = arith.constant 0 : i32
    return %arg0, %c0_i32 : i32, i32
  }
}

module attributes {stable_mosaic.version = 11 : i64} {
  func.func @_matmul_stats_kernel(%arg0: i32, %arg1: memref<32x1024xbf16, #tpu.memory_space<vmem>>, %arg2: memref<1024x128xbf16, #tpu.memory_space<vmem>>, %arg3: memref<32x128xf32, #tpu.memory_space<vmem>>, %arg4: memref<2x128xf32, #tpu.memory_space<vmem>>) attributes {dimension_semantics = [#tpu.dimension_semantics<arbitrary>], iteration_bounds = array<i64: 1>, scalar_prefetch = 0 : i64, scratch_operands = 0 : i64, tpu.core_type = #tpu.core_type<tc>, window_params = [{transform_indices = @transform_0, window_bounds = array<i64: 32, 1024>}, {pipeline_mode = #tpu.pipeline_mode<synchronous>, transform_indices = @transform_1, window_bounds = array<i64: 1024, 128>}, {transform_indices = @transform_2, window_bounds = array<i64: 32, 128>}, {pipeline_mode = #tpu.pipeline_mode<synchronous>, transform_indices = @transform_3, window_bounds = array<i64: 2, 128>}]} {
    %c0 = arith.constant 0 : index
    %c0_0 = arith.constant 0 : index
    %0 = vector.load %arg1[%c0, %c0_0] : memref<32x1024xbf16, #tpu.memory_space<vmem>>, vector<32x1024xbf16>
    %c0_1 = arith.constant 0 : index
    %c0_2 = arith.constant 0 : index
    %1 = vector.load %arg2[%c0_1, %c0_2] : memref<1024x128xbf16, #tpu.memory_space<vmem>>, vector<1024x128xbf16>
    %cst = arith.constant dense<0.000000e+00> : vector<32x128xf32>
    %2 = tpu.matmul %0, %1, %cst {dimension_numbers = #tpu.dot_dimension_numbers<[1], [0], [0], [1], [0, 0, 1, 1], [], []>} : vector<32x1024xbf16>, vector<1024x128xbf16>, vector<32x128xf32> -> vector<32x128xf32>
    %c0_3 = arith.constant 0 : index
    %c0_4 = arith.constant 0 : index
    %3 = vector.load %arg3[%c0_3, %c0_4] : memref<32x128xf32, #tpu.memory_space<vmem>>, vector<32x128xf32>
    tpu.vector_store %arg3[%c0_3, %c0_4], %2 {strides = array<i32>} : memref<32x128xf32, #tpu.memory_space<vmem>>, vector<32x128xf32>,
    %cst_5 = arith.constant dense<0.000000e+00> : vector<128xf32>
    %4 = vector.multi_reduction <add>, %2, %cst_5 [0] : vector<32x128xf32> to vector<128xf32>
    %5 = vector.shape_cast %4 : vector<128xf32> to vector<1x128xf32>
    %6 = arith.mulf %2, %2 : vector<32x128xf32>
    %cst_6 = arith.constant dense<0.000000e+00> : vector<128xf32>
    %7 = vector.multi_reduction <add>, %6, %cst_6 [0] : vector<32x128xf32> to vector<128xf32>
    %8 = vector.shape_cast %7 : vector<128xf32> to vector<1x128xf32>
    %9 = tpu.concatenate %5, %8 in 0 : vector<1x128xf32>, vector<1x128xf32> -> vector<2x128xf32>
    %c0_i32 = arith.constant 0 : i32
    %10 = arith.cmpi eq, %arg0, %c0_i32 : i32
    %11 = arith.extui %10 : i1 to i32
    %c0_i32_7 = arith.constant 0 : i32
    %12 = arith.cmpi ne, %11, %c0_i32_7 : i32
    scf.if %12 {
      %c0_10 = arith.constant 0 : index
      %c0_11 = arith.constant 0 : index
      %16 = vector.load %arg4[%c0_10, %c0_11] : memref<2x128xf32, #tpu.memory_space<vmem>>, vector<2x128xf32>
      tpu.vector_store %arg4[%c0_10, %c0_11], %9 {strides = array<i32>} : memref<2x128xf32, #tpu.memory_space<vmem>>, vector<2x128xf32>,
    } else {
    }
    %c0_i32_8 = arith.constant 0 : i32
    %13 = arith.cmpi ne, %arg0, %c0_i32_8 : i32
    %14 = arith.extui %13 : i1 to i32
    %c0_i32_9 = arith.constant 0 : i32
    %15 = arith.cmpi ne, %14, %c0_i32_9 : i32
    scf.if %15 {
      %c0_10 = arith.constant 0 : index
      %c0_11 = arith.constant 0 : index
      %16 = vector.load %arg4[%c0_10, %c0_11] : memref<2x128xf32, #tpu.memory_space<vmem>>, vector<2x128xf32>
      %17 = arith.addf %16, %9 : vector<2x128xf32>
      %c0_12 = arith.constant 0 : index
      %c0_13 = arith.constant 0 : index
      %18 = vector.load %arg4[%c0_12, %c0_13] : memref<2x128xf32, #tpu.memory_space<vmem>>, vector<2x128xf32>
      tpu.vector_store %arg4[%c0_12, %c0_13], %17 {strides = array<i32>} : memref<2x128xf32, #tpu.memory_space<vmem>>, vector<2x128xf32>,
    } else {
    }
    return
  }
  func.func @transform_0(%arg0: i32) -> (i32, i32) {
    %c0_i32 = arith.constant 0 : i32
    %c0_i32_0 = arith.constant 0 : i32
    return %arg0, %c0_i32 : i32, i32
  }
  func.func @transform_1(%arg0: i32) -> (i32, i32) {
    %c0_i32 = arith.constant 0 : i32
    %c0_i32_0 = arith.constant 0 : i32
    %c0_i32_1 = arith.constant 0 : i32
    return %c0_i32, %c0_i32_0 : i32, i32
  }
  func.func @transform_2(%arg0: i32) -> (i32, i32) {
    %c0_i32 = arith.constant 0 : i32
    %c0_i32_0 = arith.constant 0 : i32
    return %arg0, %c0_i32 : i32, i32
  }
  func.func @transform_3(%arg0: i32) -> (i32, i32) {
    %c0_i32 = arith.constant 0 : i32
    %c0_i32_0 = arith.constant 0 : i32
    %c0_i32_1 = arith.constant 0 : i32
    return %c0_i32, %c0_i32_0 : i32, i32
  }
}

module attributes {stable_mosaic.version = 11 : i64} {
  func.func @_affine_lrelu_kernel(%arg0: i32, %arg1: memref<32x128xf32, #tpu.memory_space<vmem>>, %arg2: memref<1x128xf32, #tpu.memory_space<vmem>>, %arg3: memref<1x128xf32, #tpu.memory_space<vmem>>, %arg4: memref<32x128xf32, #tpu.memory_space<vmem>>) attributes {dimension_semantics = [#tpu.dimension_semantics<parallel>], iteration_bounds = array<i64: 1>, scalar_prefetch = 0 : i64, scratch_operands = 0 : i64, tpu.core_type = #tpu.core_type<tc>, window_params = [{transform_indices = @transform_0, window_bounds = array<i64: 32, 128>}, {pipeline_mode = #tpu.pipeline_mode<synchronous>, transform_indices = @transform_1, window_bounds = array<i64: 1, 128>}, {pipeline_mode = #tpu.pipeline_mode<synchronous>, transform_indices = @transform_2, window_bounds = array<i64: 1, 128>}, {transform_indices = @transform_3, window_bounds = array<i64: 32, 128>}]} {
    %c0 = arith.constant 0 : index
    %c0_0 = arith.constant 0 : index
    %0 = vector.load %arg1[%c0, %c0_0] : memref<32x128xf32, #tpu.memory_space<vmem>>, vector<32x128xf32>
    %c0_1 = arith.constant 0 : index
    %c0_2 = arith.constant 0 : index
    %1 = vector.load %arg2[%c0_1, %c0_2] : memref<1x128xf32, #tpu.memory_space<vmem>>, vector<1x128xf32>
    %2 = vector.broadcast %1 : vector<1x128xf32> to vector<32x128xf32>
    %3 = arith.mulf %0, %2 : vector<32x128xf32>
    %c0_3 = arith.constant 0 : index
    %c0_4 = arith.constant 0 : index
    %4 = vector.load %arg3[%c0_3, %c0_4] : memref<1x128xf32, #tpu.memory_space<vmem>>, vector<1x128xf32>
    %5 = vector.broadcast %4 : vector<1x128xf32> to vector<32x128xf32>
    %6 = arith.addf %3, %5 : vector<32x128xf32>
    %cst = arith.constant 2.000000e-01 : f32
    %7 = vector.broadcast %cst : f32 to vector<32x128xf32>
    %8 = arith.mulf %7, %6 : vector<32x128xf32>
    %9 = arith.maximumf %6, %8 : vector<32x128xf32>
    %c0_5 = arith.constant 0 : index
    %c0_6 = arith.constant 0 : index
    %10 = vector.load %arg4[%c0_5, %c0_6] : memref<32x128xf32, #tpu.memory_space<vmem>>, vector<32x128xf32>
    tpu.vector_store %arg4[%c0_5, %c0_6], %9 {strides = array<i32>} : memref<32x128xf32, #tpu.memory_space<vmem>>, vector<32x128xf32>,
    return
  }
  func.func @transform_0(%arg0: i32) -> (i32, i32) {
    %c0_i32 = arith.constant 0 : i32
    %c0_i32_0 = arith.constant 0 : i32
    return %arg0, %c0_i32 : i32, i32
  }
  func.func @transform_1(%arg0: i32) -> (i32, i32) {
    %c0_i32 = arith.constant 0 : i32
    %c0_i32_0 = arith.constant 0 : i32
    %c0_i32_1 = arith.constant 0 : i32
    return %c0_i32, %c0_i32_0 : i32, i32
  }
  func.func @transform_2(%arg0: i32) -> (i32, i32) {
    %c0_i32 = arith.constant 0 : i32
    %c0_i32_0 = arith.constant 0 : i32
    %c0_i32_1 = arith.constant 0 : i32
    return %c0_i32, %c0_i32_0 : i32, i32
  }
  func.func @transform_3(%arg0: i32) -> (i32, i32) {
    %c0_i32 = arith.constant 0 : i32
    %c0_i32_0 = arith.constant 0 : i32
    return %arg0, %c0_i32 : i32, i32
  }
}

module attributes {stable_mosaic.version = 11 : i64} {
  func.func @_matmul_sigmoid_kernel(%arg0: i32, %arg1: memref<2x2048xbf16, #tpu.memory_space<vmem>>, %arg2: memref<2048x1xbf16, #tpu.memory_space<vmem>>, %arg3: memref<2x1xf32, #tpu.memory_space<vmem>>) attributes {dimension_semantics = [#tpu.dimension_semantics<arbitrary>], iteration_bounds = array<i64: 1>, scalar_prefetch = 0 : i64, scratch_operands = 0 : i64, tpu.core_type = #tpu.core_type<tc>, window_params = [{pipeline_mode = #tpu.pipeline_mode<synchronous>, transform_indices = @transform_0, window_bounds = array<i64: 2, 2048>}, {pipeline_mode = #tpu.pipeline_mode<synchronous>, transform_indices = @transform_1, window_bounds = array<i64: 2048, 1>}, {pipeline_mode = #tpu.pipeline_mode<synchronous>, transform_indices = @transform_2, window_bounds = array<i64: 2, 1>}]} {
    %c0 = arith.constant 0 : index
    %c0_0 = arith.constant 0 : index
    %0 = vector.load %arg1[%c0, %c0_0] : memref<2x2048xbf16, #tpu.memory_space<vmem>>, vector<2x2048xbf16>
    %c0_1 = arith.constant 0 : index
    %c0_2 = arith.constant 0 : index
    %1 = vector.load %arg2[%c0_1, %c0_2] : memref<2048x1xbf16, #tpu.memory_space<vmem>>, vector<2048x1xbf16>
    %cst = arith.constant dense<0.000000e+00> : vector<2x1xf32>
    %2 = tpu.matmul %0, %1, %cst {dimension_numbers = #tpu.dot_dimension_numbers<[1], [0], [0], [1], [0, 0, 1, 1], [], []>} : vector<2x2048xbf16>, vector<2048x1xbf16>, vector<2x1xf32> -> vector<2x1xf32>
    %cst_3 = arith.constant 0.000000e+00 : f32
    %3 = vector.broadcast %cst_3 : f32 to vector<2x1xf32>
    %4 = arith.subf %3, %2 : vector<2x1xf32>
    %5 = math.exp %4 : vector<2x1xf32>
    %cst_4 = arith.constant 1.000000e+00 : f32
    %6 = vector.broadcast %cst_4 : f32 to vector<2x1xf32>
    %7 = arith.addf %6, %5 : vector<2x1xf32>
    %cst_5 = arith.constant 1.000000e+00 : f32
    %8 = vector.broadcast %cst_5 : f32 to vector<2x1xf32>
    %9 = arith.divf %8, %7 : vector<2x1xf32>
    %c0_6 = arith.constant 0 : index
    %c0_7 = arith.constant 0 : index
    %10 = vector.load %arg3[%c0_6, %c0_7] : memref<2x1xf32, #tpu.memory_space<vmem>>, vector<2x1xf32>
    tpu.vector_store %arg3[%c0_6, %c0_7], %9 {strides = array<i32>} : memref<2x1xf32, #tpu.memory_space<vmem>>, vector<2x1xf32>,
    return
  }
  func.func @transform_0(%arg0: i32) -> (i32, i32) {
    %c0_i32 = arith.constant 0 : i32
    %c0_i32_0 = arith.constant 0 : i32
    %c0_i32_1 = arith.constant 0 : i32
    return %c0_i32, %c0_i32_0 : i32, i32
  }
  func.func @transform_1(%arg0: i32) -> (i32, i32) {
    %c0_i32 = arith.constant 0 : i32
    %c0_i32_0 = arith.constant 0 : i32
    %c0_i32_1 = arith.constant 0 : i32
    return %c0_i32, %c0_i32_0 : i32, i32
  }
  func.func @transform_2(%arg0: i32) -> (i32, i32) {
    %c0_i32 = arith.constant 0 : i32
    %c0_i32_0 = arith.constant 0 : i32
    %c0_i32_1 = arith.constant 0 : i32
    return %c0_i32, %c0_i32_0 : i32, i32
  }
}

</mosaic_0001>

<llo_original>
// kernel: _lambda_.8
$region0: #{_lambda_.8}
  #allocation0 [shape = 'u32[]', space=smem, size = 0x4, offset = 0x4, fixed_abs, tag = 'smem constant byte address 0x4 - core index']
  #allocation1 [shape = 'u32[72,128]{1,0:T(1,128)}', space=vmem, size = 0x9000, scoped, tag = 'internal scratch']
  %s0 = inlined_call_operand.vmem [shape: bf16[2048,48], index: 0, kind: input, shape index: {}]
  %s1 = inlined_call_operand.vmem [shape: bf16[48,16], index: 1, kind: input, shape index: {}]
  %s2 = inlined_call_operand.vmem [shape: f32[2048,16], index: 2, kind: output, shape index: {}]
  %s3 = sld [smem:[#allocation0]]
  $region41: #{_lambda_.8} parent=0
    _
  %s5 = ssub.s32 1, %s3
  %s6 = scalar_select 0, %s5, %s3
  loop: start=0, step=1, limit=6
  $region2: #{_lambda_.8} parent=0 // loop_pre_header
    _
  $region3: #{_lambda_.8} parent=0 // loop_header
    %s8 = sphi 0, %s12
    %p9 = scmp.ge.s32.totalorder %s8, 6
    %s18 = sphi 0, %s20
    %s21 = sphi 0, %s18
    %s22 = sphi 0, %s21
    %s38 = sphi 0, %s22
    %s42 = sphi 0, %s42
    %s44 = sphi 0, %s42
    %s45 = sphi 0, %s44
    %s59 = sphi 0, %s45
    %s65 = sphi 0, %s67
    %s68 = sphi 0, %s65
    %s69 = sphi 0, %s68
    %s85 = sphi 0, %s69
  $region4: #{_lambda_.8} parent=0 // loop_header_branch
    %11 = sbr.rel (%p9) target = $region8
  $region5: #{_lambda_.8} parent=0 // loop_body
    %s13 = ssub.s32 %s8, 1
    %s14 = ssub.s32 %s8, 2
    %s15 = sadd.s32 %s8, 1
    %s16 = ssub.s32 %s8, %s15
    %p17 = scmp.eq.s32.totalorder %s16, 0
    %s19 = sadd.s32 %s18, 1
    %s20 = scalar_select %p17, %s18, %s19
    %p23 = pneg %p17
    %p24 = scmp.eq.s32.totalorder %s8, 3
    %p25 = por %p23, %p24
    %p26 = scmp.ne.s32.totalorder %s18, %s21
    %p27 = scmp.eq.s32.totalorder %s8, 0
    %p28 = por %p26, %p27
    %p29 = scmp.ne.s32.totalorder %s18, %s21
    %p30 = scmp.eq.s32.totalorder %s13, 3
    %p31 = por %p29, %p30
    %p32 = scmp.ne.s32.totalorder %s21, %s22
    %p33 = scmp.eq.s32.totalorder %s13, 0
    %p34 = por %p32, %p33
    %p35 = scmp.ne.s32.totalorder %s21, %s22
    %p36 = scmp.eq.s32.totalorder %s14, 3
    %p37 = por %p35, %p36
    %p39 = scmp.ne.s32.totalorder %s22, %s38
    %p40 = scmp.eq.s32.totalorder %s14, 0
    %p41 = por %p39, %p40
    %s43 = sadd.s32 %s42, 1
    %p46 = scmp.eq.s32.totalorder %s8, 3
    %p47 = scmp.ne.s32.totalorder %s42, %s44
    %p48 = scmp.eq.s32.totalorder %s8, 0
    %p49 = por %p47, %p48
    %p50 = scmp.ne.s32.totalorder %s42, %s44
    %p51 = scmp.eq.s32.totalorder %s13, 3
    %p52 = por %p50, %p51
    %p53 = scmp.ne.s32.totalorder %s44, %s45
    %p54 = scmp.eq.s32.totalorder %s13, 0
    %p55 = por %p53, %p54
    %p56 = scmp.ne.s32.totalorder %s44, %s45
    %p57 = scmp.eq.s32.totalorder %s14, 3
    %p58 = por %p56, %p57
    %p60 = scmp.ne.s32.totalorder %s45, %s59
    %p61 = scmp.eq.s32.totalorder %s14, 0
    %p62 = por %p60, %p61
    %s63 = ssub.s32 %s8, %s15
    %p64 = scmp.eq.s32.totalorder %s63, 0
    %s66 = sadd.s32 %s65, 1
    %s67 = scalar_select %p64, %s65, %s66
    %p70 = pneg %p64
    %p71 = scmp.eq.s32.totalorder %s8, 3
    %p72 = por %p70, %p71
    %p73 = scmp.ne.s32.totalorder %s65, %s68
    %p74 = scmp.eq.s32.totalorder %s8, 0
    %p75 = por %p73, %p74
    %p76 = scmp.ne.s32.totalorder %s65, %s68
    %p77 = scmp.eq.s32.totalorder %s13, 3
    %p78 = por %p76, %p77
    %p79 = scmp.ne.s32.totalorder %s68, %s69
    %p80 = scmp.eq.s32.totalorder %s13, 0
    %p81 = por %p79, %p80
    %p82 = scmp.ne.s32.totalorder %s68, %s69
    %p83 = scmp.eq.s32.totalorder %s14, 3
    %p84 = por %p82, %p83
    %p86 = scmp.ne.s32.totalorder %s69, %s85
    %p87 = scmp.eq.s32.totalorder %s14, 0
    %p88 = por %p86, %p87
    %p89 = scmp.le.s32.totalorder 1, %s8
    %p90 = scmp.lt.s32.totalorder %s8, 5
    %p91 = pnand %p89, %p90
    %p92 = pneg %p91
    // Predicated region
    $region9: #{_lambda_.8} parent=5 // pred_check
      _
    $region10: #{_lambda_.8} parent=5 // pred_check_branch
      %94 = sbr.rel (%p91) target = $region12
    $region11: #{_lambda_.8} parent=5 // pred_region
      %s95 = ssub.s32 %s8, 1
      // Predicated region
      $region13: #{_lambda_.8} parent=11 // pred_check
        %p96 = pneg %p55
      $region14: #{_lambda_.8} parent=11 // pred_check_branch
        %98 = sbr.rel (%p96) target = $region16
      $region15: #{_lambda_.8} parent=11 // pred_region
        _
      $region16: #{_lambda_.8} parent=11 // pred_fallthru
        _
    $region12: #{_lambda_.8} parent=5 // pred_fallthru
      _
    %p99 = scmp.lt.s32.totalorder %s8, 4
    // Predicated region
    $region17: #{_lambda_.8} parent=5 // pred_check
      %p100 = pneg %p99
    $region18: #{_lambda_.8} parent=5 // pred_check_branch
      %102 = sbr.rel (%p100) target = $region20
    $region19: #{_lambda_.8} parent=5 // pred_region
      // Predicated region
      $region21: #{_lambda_.8} parent=19 // pred_check
        %p103 = pneg %p28
      $region22: #{_lambda_.8} parent=19 // pred_check_branch
        %105 = sbr.rel (%p103) target = $region24
      $region23: #{_lambda_.8} parent=19 // pred_region
        %s106 = smul.u32 64, %s8
        %p107 = scmp.lt.s32.totalorder %s106, 255
        %s108 = scalar_select %p107, %s106, 255
        %s109 = smul.addr %s108, 4
        %s110 = scalar_lea.vmem %s0, %s109
        %s111 = smul.u32 64, %s8
      $region24: #{_lambda_.8} parent=19 // pred_fallthru
        _
    $region20: #{_lambda_.8} parent=5 // pred_fallthru
      _
    %p112 = scmp.le.s32.totalorder 1, %s8
    %p113 = scmp.lt.s32.totalorder %s8, 5
    %p114 = pnand %p112, %p113
    %p115 = pneg %p114
    // Predicated region
    $region25: #{_lambda_.8} parent=5 // pred_check
      _
    $region26: #{_lambda_.8} parent=5 // pred_check_branch
      %117 = sbr.rel (%p114) target = $region28
    $region27: #{_lambda_.8} parent=5 // pred_region
      %s118 = ssub.s32 %s8, 1
      %s119 = smul.u32 64, %s13
      %p120 = scmp.lt.s32.totalorder %s119, 255
      %s121 = scalar_select %p120, %s119, 255
      %s122 = smul.addr %s121, 4
      %s123 = scalar_lea.vmem %s0, %s122
      %p124 = pneg %p34
      %p125 = pneg %p31
      %p126 = pneg %p55
      %p127 = pneg %p52
      %p128 = pneg %p81
      %p129 = pneg %p78
      %s130 = smul.u32 64, %s13
      %p131 = scmp.lt.s32.totalorder %s130, 255
      %s132 = scalar_select %p131, %s130, 255
      %s133 = smul.addr %s132, 8
      %s134 = scalar_lea.vmem %s2, %s133
      %s135 = smul.u32 64, %s13
      %p136 = scmp.lt.s32.totalorder %s135, 255
      %s137 = scalar_select %p136, %s135, 255
      %s138 = smul.addr %s137, 4
      %s139 = scalar_lea.vmem %s0, %s138
      %s140 = smul.u32 64, %s13
      %s141 = smul.u32 64, %s13
      %p142 = scmp.lt.s32.totalorder %s141, 255
      %s143 = scalar_select %p142, %s141, 255
      %s144 = smul.addr %s143, 8
      %s145 = scalar_lea.vmem %s2, %s144
      %s146 = smul.u32 64, %s13
      %v148 = vld [vmem:[%s139] sm:$0xf]
      %v149 = vld [vmem:[%s139 + $0x4] sm:$0xf]
      %v150 = vld [vmem:[%s139 + $0x8] sm:$0xf]
      %v151 = vld [vmem:[%s139 + $0xc] sm:$0xf]
      %v152 = vld [vmem:[%s139 + $0x10] sm:$0xf]
      %v153 = vld [vmem:[%s139 + $0x14] sm:$0xf]
      %v154 = vld [vmem:[%s139 + $0x18] sm:$0xf]
      %v155 = vld [vmem:[%s139 + $0x1c] sm:$0xf]
      %v156 = vld [vmem:[%s139 + $0x20] sm:$0xf]
      %v157 = vld [vmem:[%s139 + $0x24] sm:$0xf]
      %v158 = vld [vmem:[%s139 + $0x28] sm:$0xf]
      %v159 = vld [vmem:[%s139 + $0x2c] sm:$0xf]
      %v160 = vld [vmem:[%s139 + $0x30] sm:$0xf]
      %v161 = vld [vmem:[%s139 + $0x34] sm:$0xf]
      %v162 = vld [vmem:[%s139 + $0x38] sm:$0xf]
      %v163 = vld [vmem:[%s139 + $0x3c] sm:$0xf]
      %v164 = vld [vmem:[%s139 + $0x40] sm:$0xf]
      %v165 = vld [vmem:[%s139 + $0x44] sm:$0xf]
      %v166 = vld [vmem:[%s139 + $0x48] sm:$0xf]
      %v167 = vld [vmem:[%s139 + $0x4c] sm:$0xf]
      %v168 = vld [vmem:[%s139 + $0x50] sm:$0xf]
      %v169 = vld [vmem:[%s139 + $0x54] sm:$0xf]
      %v170 = vld [vmem:[%s139 + $0x58] sm:$0xf]
      %v171 = vld [vmem:[%s139 + $0x5c] sm:$0xf]
      %v172 = vld [vmem:[%s139 + $0x60] sm:$0xf]
      %v173 = vld [vmem:[%s139 + $0x64] sm:$0xf]
      %v174 = vld [vmem:[%s139 + $0x68] sm:$0xf]
      %v175 = vld [vmem:[%s139 + $0x6c] sm:$0xf]
      %v176 = vld [vmem:[%s139 + $0x70] sm:$0xf]
      %v177 = vld [vmem:[%s139 + $0x74] sm:$0xf]
      %v178 = vld [vmem:[%s139 + $0x78] sm:$0xf]
      %v179 = vld [vmem:[%s139 + $0x7c] sm:$0xf]
      %v180 = vld [vmem:[%s139 + $0x80] sm:$0xf]
      %v181 = vld [vmem:[%s139 + $0x84] sm:$0xf]
      %v182 = vld [vmem:[%s139 + $0x88] sm:$0xf]
      %v183 = vld [vmem:[%s139 + $0x8c] sm:$0xf]
      %v184 = vld [vmem:[%s139 + $0x90] sm:$0xf]
      %v185 = vld [vmem:[%s139 + $0x94] sm:$0xf]
      %v186 = vld [vmem:[%s139 + $0x98] sm:$0xf]
      %v187 = vld [vmem:[%s139 + $0x9c] sm:$0xf]
      %v188 = vld [vmem:[%s139 + $0xa0] sm:$0xf]
      %v189 = vld [vmem:[%s139 + $0xa4] sm:$0xf]
      %v190 = vld [vmem:[%s139 + $0xa8] sm:$0xf]
      %v191 = vld [vmem:[%s139 + $0xac] sm:$0xf]
      %v192 = vld [vmem:[%s139 + $0xb0] sm:$0xf]
      %v193 = vld [vmem:[%s139 + $0xb4] sm:$0xf]
      %v194 = vld [vmem:[%s139 + $0xb8] sm:$0xf]
      %v195 = vld [vmem:[%s139 + $0xbc] sm:$0xf]
      %v196 = vld [vmem:[%s139 + $0xc0] sm:$0xf]
      %v197 = vld [vmem:[%s139 + $0xc4] sm:$0xf]
      %v198 = vld [vmem:[%s139 + $0xc8] sm:$0xf]
      %v199 = vld [vmem:[%s139 + $0xcc] sm:$0xf]
      %v200 = vld [vmem:[%s139 + $0xd0] sm:$0xf]
      %v201 = vld [vmem:[%s139 + $0xd4] sm:$0xf]
      %v202 = vld [vmem:[%s139 + $0xd8] sm:$0xf]
      %v203 = vld [vmem:[%s139 + $0xdc] sm:$0xf]
      %v204 = vld [vmem:[%s139 + $0xe0] sm:$0xf]
      %v205 = vld [vmem:[%s139 + $0xe4] sm:$0xf]
      %v206 = vld [vmem:[%s139 + $0xe8] sm:$0xf]
      %v207 = vld [vmem:[%s139 + $0xec] sm:$0xf]
      %v208 = vld [vmem:[%s139 + $0xf0] sm:$0xf]
      %v209 = vld [vmem:[%s139 + $0xf4] sm:$0xf]
      %v210 = vld [vmem:[%s139 + $0xf8] sm:$0xf]
      %v211 = vld [vmem:[%s139 + $0xfc] sm:$0xf]
      %v212 = vld [vmem:[%s1] sm:$0xf]
      %v213 = vld [vmem:[%s1 + $0x4] sm:$0xf]
      %v214 = vld [vmem:[%s1 + $0x8] sm:$0xf]
      %v215 = vld [vmem:[%s1 + $0xc] sm:$0xf]
      %v216 = vld [vmem:[%s1 + $0x10] sm:$0xf]
      %v217 = vld [vmem:[%s1 + $0x14] sm:$0xf]
      %v282 = vunpack.c.l.b16 %v148
      %v283 = vunpack.c.l.b16 %v149
      %v284 = vunpack.c.l.b16 %v150
      %v285 = vunpack.c.l.b16 %v151
      %v286 = vunpack.c.l.b16 %v152
      %v287 = vunpack.c.l.b16 %v153
      %v288 = vunpack.c.l.b16 %v154
      %v289 = vunpack.c.l.b16 %v155
      %v290 = vunpack.c.l.b16 %v156
      %v291 = vunpack.c.l.b16 %v157
      %v292 = vunpack.c.l.b16 %v158
      %v293 = vunpack.c.l.b16 %v159
      %v294 = vunpack.c.l.b16 %v160
      %v295 = vunpack.c.l.b16 %v161
      %v296 = vunpack.c.l.b16 %v162
      %v297 = vunpack.c.l.b16 %v163
      %v298 = vunpack.c.l.b16 %v164
      %v299 = vunpack.c.l.b16 %v165
      %v300 = vunpack.c.l.b16 %v166
      %v301 = vunpack.c.l.b16 %v167
      %v302 = vunpack.c.l.b16 %v168
      %v303 = vunpack.c.l.b16 %v169
      %v304 = vunpack.c.l.b16 %v170
      %v305 = vunpack.c.l.b16 %v171
      %v306 = vunpack.c.l.b16 %v172
      %v307 = vunpack.c.l.b16 %v173
      %v308 = vunpack.c.l.b16 %v174
      %v309 = vunpack.c.l.b16 %v175
      %v310 = vunpack.c.l.b16 %v176
      %v311 = vunpack.c.l.b16 %v177
      %v312 = vunpack.c.l.b16 %v178
      %v313 = vunpack.c.l.b16 %v179
      %v314 = vunpack.c.l.b16 %v180
      %v315 = vunpack.c.l.b16 %v181
      %v316 = vunpack.c.l.b16 %v182
      %v317 = vunpack.c.l.b16 %v183
      %v318 = vunpack.c.l.b16 %v184
      %v319 = vunpack.c.l.b16 %v185
      %v320 = vunpack.c.l.b16 %v186
      %v321 = vunpack.c.l.b16 %v187
      %v322 = vunpack.c.l.b16 %v188
      %v323 = vunpack.c.l.b16 %v189
      %v324 = vunpack.c.l.b16 %v190
      %v325 = vunpack.c.l.b16 %v191
      %v326 = vunpack.c.l.b16 %v192
      %v327 = vunpack.c.l.b16 %v193
      %v328 = vunpack.c.l.b16 %v194
      %v329 = vunpack.c.l.b16 %v195
      %v330 = vunpack.c.l.b16 %v196
      %v331 = vunpack.c.l.b16 %v197
      %v332 = vunpack.c.l.b16 %v198
      %v333 = vunpack.c.l.b16 %v199
      %v334 = vunpack.c.l.b16 %v200
      %v335 = vunpack.c.l.b16 %v201
      %v336 = vunpack.c.l.b16 %v202
      %v337 = vunpack.c.l.b16 %v203
      %v338 = vunpack.c.l.b16 %v204
      %v339 = vunpack.c.l.b16 %v205
      %v340 = vunpack.c.l.b16 %v206
      %v341 = vunpack.c.l.b16 %v207
      %v342 = vunpack.c.l.b16 %v208
      %v343 = vunpack.c.l.b16 %v209
      %v344 = vunpack.c.l.b16 %v210
      %v345 = vunpack.c.l.b16 %v211
      %v346 = vpack.c.b16 %v283, %v282
      %v347 = vpack.c.b16 %v285, %v284
      %v348 = vpack.c.b16 %v287, %v286
      %v349 = vpack.c.b16 %v289, %v288
      %v350 = vpack.c.b16 %v291, %v290
      %v351 = vpack.c.b16 %v293, %v292
      %v352 = vpack.c.b16 %v295, %v294
      %v353 = vpack.c.b16 %v297, %v296
      %v354 = vpack.c.b16 %v299, %v298
      %v355 = vpack.c.b16 %v301, %v300
      %v356 = vpack.c.b16 %v303, %v302
      %v357 = vpack.c.b16 %v305, %v304
      %v358 = vpack.c.b16 %v307, %v306
      %v359 = vpack.c.b16 %v309, %v308
      %v360 = vpack.c.b16 %v311, %v310
      %v361 = vpack.c.b16 %v313, %v312
      %v362 = vpack.c.b16 %v315, %v314
      %v363 = vpack.c.b16 %v317, %v316
      %v364 = vpack.c.b16 %v319, %v318
      %v365 = vpack.c.b16 %v321, %v320
      %v366 = vpack.c.b16 %v323, %v322
      %v367 = vpack.c.b16 %v325, %v324
      %v368 = vpack.c.b16 %v327, %v326
      %v369 = vpack.c.b16 %v329, %v328
      %v370 = vpack.c.b16 %v331, %v330
      %v371 = vpack.c.b16 %v333, %v332
      %v372 = vpack.c.b16 %v335, %v334
      %v373 = vpack.c.b16 %v337, %v336
      %v374 = vpack.c.b16 %v339, %v338
      %v375 = vpack.c.b16 %v341, %v340
      %v376 = vpack.c.b16 %v343, %v342
      %v377 = vpack.c.b16 %v345, %v344
      %v384 = vunpack.c.l.b16 %v212
      %v385 = vunpack.c.l.b16 %v213
      %v386 = vunpack.c.l.b16 %v214
      %v387 = vunpack.c.l.b16 %v215
      %v388 = vunpack.c.l.b16 %v216
      %v389 = vunpack.c.l.b16 %v217
      %v390 = vpack.c.b16 %v385, %v384
      %v391 = vpack.c.b16 %v387, %v386
      %v392 = vpack.c.b16 %v389, %v388
      %vm396 = vcmask 392192
      %v398 = vsel %vm396, %v346, 0
      %v401 = vsel %vm396, %v347, 0
      %v404 = vsel %vm396, %v348, 0
      %v407 = vsel %vm396, %v349, 0
      %v410 = vsel %vm396, %v350, 0
      %v413 = vsel %vm396, %v351, 0
      %v416 = vsel %vm396, %v352, 0
      %v419 = vsel %vm396, %v353, 0
      %v422 = vsel %vm396, %v354, 0
      %v425 = vsel %vm396, %v355, 0
      %v428 = vsel %vm396, %v356, 0
      %v431 = vsel %vm396, %v357, 0
      %v434 = vsel %vm396, %v358, 0
      %v437 = vsel %vm396, %v359, 0
      %v440 = vsel %vm396, %v360, 0
      %v443 = vsel %vm396, %v361, 0
      %v446 = vsel %vm396, %v362, 0
      %v449 = vsel %vm396, %v363, 0
      %v452 = vsel %vm396, %v364, 0
      %v455 = vsel %vm396, %v365, 0
      %v458 = vsel %vm396, %v366, 0
      %v461 = vsel %vm396, %v367, 0
      %v464 = vsel %vm396, %v368, 0
      %v467 = vsel %vm396, %v369, 0
      %v470 = vsel %vm396, %v370, 0
      %v473 = vsel %vm396, %v371, 0
      %v476 = vsel %vm396, %v372, 0
      %v479 = vsel %vm396, %v373, 0
      %v482 = vsel %vm396, %v374, 0
      %v485 = vsel %vm396, %v375, 0
      %v488 = vsel %vm396, %v376, 0
      %v491 = vsel %vm396, %v377, 0
      %493 = vmatpush.bf16.msra.mxu0 0
      %494 = vmatpush.bf16.msra.mxu0 0
      %495 = vmatpush.bf16.msra.mxu0 0
      %496 = vmatpush.bf16.msra.mxu0 0
      %497 = vmatpush.bf16.msra.mxu0 0
      %498 = vmatpush.bf16.msra.mxu0 %v392
      %499 = vmatpush.bf16.msra.mxu0 %v391
      %500 = vmatpush.bf16.msra.mxu0 %v390
      %501 = vmatmul.bf16.gmra.mxu0 %v398
      %v502 = vpop.f32.mrf.mxu0
      %v503 = vadd.f32 0.0, %v502
      %v504 = vpop.f32.mrf.mxu0
      %v505 = vadd.f32 0.0, %v504
      %506 = vmatmul.bf16.gmra.mxu0 %v401
      %v507 = vpop.f32.mrf.mxu0
      %v508 = vadd.f32 0.0, %v507
      %v509 = vpop.f32.mrf.mxu0
      %v510 = vadd.f32 0.0, %v509
      %511 = vmatmul.bf16.gmra.mxu0 %v404
      %v512 = vpop.f32.mrf.mxu0
      %v513 = vadd.f32 0.0, %v512
      %v514 = vpop.f32.mrf.mxu0
      %v515 = vadd.f32 0.0, %v514
      %516 = vmatmul.bf16.gmra.mxu0 %v407
      %v517 = vpop.f32.mrf.mxu0
      %v518 = vadd.f32 0.0, %v517
      %v519 = vpop.f32.mrf.mxu0
      %v520 = vadd.f32 0.0, %v519
      %521 = vmatmul.bf16.gmra.mxu0 %v410
      %v522 = vpop.f32.mrf.mxu0
      %v523 = vadd.f32 0.0, %v522
      %v524 = vpop.f32.mrf.mxu0
      %v525 = vadd.f32 0.0, %v524
      %526 = vmatmul.bf16.gmra.mxu0 %v413
      %v527 = vpop.f32.mrf.mxu0
      %v528 = vadd.f32 0.0, %v527
      %v529 = vpop.f32.mrf.mxu0
      %v530 = vadd.f32 0.0, %v529
      %531 = vmatmul.bf16.gmra.mxu0 %v416
      %v532 = vpop.f32.mrf.mxu0
      %v533 = vadd.f32 0.0, %v532
      %v534 = vpop.f32.mrf.mxu0
      %v535 = vadd.f32 0.0, %v534
      %536 = vmatmul.bf16.gmra.mxu0 %v419
      %v537 = vpop.f32.mrf.mxu0
      %v538 = vadd.f32 0.0, %v537
      %v539 = vpop.f32.mrf.mxu0
      %v540 = vadd.f32 0.0, %v539
      %541 = vmatmul.bf16.gmra.mxu0 %v422
      %v542 = vpop.f32.mrf.mxu0
      %v543 = vadd.f32 0.0, %v542
      %v544 = vpop.f32.mrf.mxu0
      %v545 = vadd.f32 0.0, %v544
      %546 = vmatmul.bf16.gmra.mxu0 %v425
      %v547 = vpop.f32.mrf.mxu0
      %v548 = vadd.f32 0.0, %v547
      %v549 = vpop.f32.mrf.mxu0
      %v550 = vadd.f32 0.0, %v549
      %551 = vmatmul.bf16.gmra.mxu0 %v428
      %v552 = vpop.f32.mrf.mxu0
      %v553 = vadd.f32 0.0, %v552
      %v554 = vpop.f32.mrf.mxu0
      %v555 = vadd.f32 0.0, %v554
      %556 = vmatmul.bf16.gmra.mxu0 %v431
      %v557 = vpop.f32.mrf.mxu0
      %v558 = vadd.f32 0.0, %v557
      %v559 = vpop.f32.mrf.mxu0
      %v560 = vadd.f32 0.0, %v559
      %561 = vmatmul.bf16.gmra.mxu0 %v434
      %v562 = vpop.f32.mrf.mxu0
      %v563 = vadd.f32 0.0, %v562
      %v564 = vpop.f32.mrf.mxu0
      %v565 = vadd.f32 0.0, %v564
      %566 = vmatmul.bf16.gmra.mxu0 %v437
      %v567 = vpop.f32.mrf.mxu0
      %v568 = vadd.f32 0.0, %v567
      %v569 = vpop.f32.mrf.mxu0
      %v570 = vadd.f32 0.0, %v569
      %571 = vmatmul.bf16.gmra.mxu0 %v440
      %v572 = vpop.f32.mrf.mxu0
      %v573 = vadd.f32 0.0, %v572
      %v574 = vpop.f32.mrf.mxu0
      %v575 = vadd.f32 0.0, %v574
      %576 = vmatmul.bf16.gmra.mxu0 %v443
      %v577 = vpop.f32.mrf.mxu0
      %v578 = vadd.f32 0.0, %v577
      %v579 = vpop.f32.mrf.mxu0
      %v580 = vadd.f32 0.0, %v579
      %581 = vmatmul.bf16.gmra.mxu0 %v446
      %v582 = vpop.f32.mrf.mxu0
      %v583 = vadd.f32 0.0, %v582
      %v584 = vpop.f32.mrf.mxu0
      %v585 = vadd.f32 0.0, %v584
      %586 = vmatmul.bf16.gmra.mxu0 %v449
      %v587 = vpop.f32.mrf.mxu0
      %v588 = vadd.f32 0.0, %v587
      %v589 = vpop.f32.mrf.mxu0
      %v590 = vadd.f32 0.0, %v589
      %591 = vmatmul.bf16.gmra.mxu0 %v452
      %v592 = vpop.f32.mrf.mxu0
      %v593 = vadd.f32 0.0, %v592
      %v594 = vpop.f32.mrf.mxu0
      %v595 = vadd.f32 0.0, %v594
      %596 = vmatmul.bf16.gmra.mxu0 %v455
      %v597 = vpop.f32.mrf.mxu0
      %v598 = vadd.f32 0.0, %v597
      %v599 = vpop.f32.mrf.mxu0
      %v600 = vadd.f32 0.0, %v599
      %601 = vmatmul.bf16.gmra.mxu0 %v458
      %v602 = vpop.f32.mrf.mxu0
      %v603 = vadd.f32 0.0, %v602
      %v604 = vpop.f32.mrf.mxu0
      %v605 = vadd.f32 0.0, %v604
      %606 = vmatmul.bf16.gmra.mxu0 %v461
      %v607 = vpop.f32.mrf.mxu0
      %v608 = vadd.f32 0.0, %v607
      %v609 = vpop.f32.mrf.mxu0
      %v610 = vadd.f32 0.0, %v609
      %611 = vmatmul.bf16.gmra.mxu0 %v464
      %v612 = vpop.f32.mrf.mxu0
      %v613 = vadd.f32 0.0, %v612
      %v614 = vpop.f32.mrf.mxu0
      %v615 = vadd.f32 0.0, %v614
      %616 = vmatmul.bf16.gmra.mxu0 %v467
      %v617 = vpop.f32.mrf.mxu0
      %v618 = vadd.f32 0.0, %v617
      %v619 = vpop.f32.mrf.mxu0
      %v620 = vadd.f32 0.0, %v619
      %621 = vmatmul.bf16.gmra.mxu0 %v470
      %v622 = vpop.f32.mrf.mxu0
      %v623 = vadd.f32 0.0, %v622
      %v624 = vpop.f32.mrf.mxu0
      %v625 = vadd.f32 0.0, %v624
      %626 = vmatmul.bf16.gmra.mxu0 %v473
      %v627 = vpop.f32.mrf.mxu0
      %v628 = vadd.f32 0.0, %v627
      %v629 = vpop.f32.mrf.mxu0
      %v630 = vadd.f32 0.0, %v629
      %631 = vmatmul.bf16.gmra.mxu0 %v476
      %v632 = vpop.f32.mrf.mxu0
      %v633 = vadd.f32 0.0, %v632
      %v634 = vpop.f32.mrf.mxu0
      %v635 = vadd.f32 0.0, %v634
      %636 = vmatmul.bf16.gmra.mxu0 %v479
      %v637 = vpop.f32.mrf.mxu0
      %v638 = vadd.f32 0.0, %v637
      %v639 = vpop.f32.mrf.mxu0
      %v640 = vadd.f32 0.0, %v639
      %641 = vmatmul.bf16.gmra.mxu0 %v482
      %v642 = vpop.f32.mrf.mxu0
      %v643 = vadd.f32 0.0, %v642
      %v644 = vpop.f32.mrf.mxu0
      %v645 = vadd.f32 0.0, %v644
      %646 = vmatmul.bf16.gmra.mxu0 %v485
      %v647 = vpop.f32.mrf.mxu0
      %v648 = vadd.f32 0.0, %v647
      %v649 = vpop.f32.mrf.mxu0
      %v650 = vadd.f32 0.0, %v649
      %651 = vmatmul.bf16.gmra.mxu0 %v488
      %v652 = vpop.f32.mrf.mxu0
      %v653 = vadd.f32 0.0, %v652
      %v654 = vpop.f32.mrf.mxu0
      %v655 = vadd.f32 0.0, %v654
      %656 = vmatmul.bf16.gmra.mxu0 %v491
      %v657 = vpop.f32.mrf.mxu0
      %v658 = vadd.f32 0.0, %v657
      %v659 = vpop.f32.mrf.mxu0
      %v660 = vadd.f32 0.0, %v659
      %661 = vdwg.mxu0
      %v662 = vmul.f32 %v503, 0.2
      %v663 = vmul.f32 %v505, 0.2
      %v664 = vmul.f32 %v508, 0.2
      %v665 = vmul.f32 %v510, 0.2
      %v666 = vmul.f32 %v513, 0.2
      %v667 = vmul.f32 %v515, 0.2
      %v668 = vmul.f32 %v518, 0.2
      %v669 = vmul.f32 %v520, 0.2
      %v670 = vmul.f32 %v523, 0.2
      %v671 = vmul.f32 %v525, 0.2
      %v672 = vmul.f32 %v528, 0.2
      %v673 = vmul.f32 %v530, 0.2
      %v674 = vmul.f32 %v533, 0.2
      %v675 = vmul.f32 %v535, 0.2
      %v676 = vmul.f32 %v538, 0.2
      %v677 = vmul.f32 %v540, 0.2
      %v678 = vmul.f32 %v543, 0.2
      %v679 = vmul.f32 %v545, 0.2
      %v680 = vmul.f32 %v548, 0.2
      %v681 = vmul.f32 %v550, 0.2
      %v682 = vmul.f32 %v553, 0.2
      %v683 = vmul.f32 %v555, 0.2
      %v684 = vmul.f32 %v558, 0.2
      %v685 = vmul.f32 %v560, 0.2
      %v686 = vmul.f32 %v563, 0.2
      %v687 = vmul.f32 %v565, 0.2
      %v688 = vmul.f32 %v568, 0.2
      %v689 = vmul.f32 %v570, 0.2
      %v690 = vmul.f32 %v573, 0.2
      %v691 = vmul.f32 %v575, 0.2
      %v692 = vmul.f32 %v578, 0.2
      %v693 = vmul.f32 %v580, 0.2
      %v694 = vmul.f32 %v583, 0.2
      %v695 = vmul.f32 %v585, 0.2
      %v696 = vmul.f32 %v588, 0.2
      %v697 = vmul.f32 %v590, 0.2
      %v698 = vmul.f32 %v593, 0.2
      %v699 = vmul.f32 %v595, 0.2
      %v700 = vmul.f32 %v598, 0.2
      %v701 = vmul.f32 %v600, 0.2
      %v702 = vmul.f32 %v603, 0.2
      %v703 = vmul.f32 %v605, 0.2
      %v704 = vmul.f32 %v608, 0.2
      %v705 = vmul.f32 %v610, 0.2
      %v706 = vmul.f32 %v613, 0.2
      %v707 = vmul.f32 %v615, 0.2
      %v708 = vmul.f32 %v618, 0.2
      %v709 = vmul.f32 %v620, 0.2
      %v710 = vmul.f32 %v623, 0.2
      %v711 = vmul.f32 %v625, 0.2
      %v712 = vmul.f32 %v628, 0.2
      %v713 = vmul.f32 %v630, 0.2
      %v714 = vmul.f32 %v633, 0.2
      %v715 = vmul.f32 %v635, 0.2
      %v716 = vmul.f32 %v638, 0.2
      %v717 = vmul.f32 %v640, 0.2
      %v718 = vmul.f32 %v643, 0.2
      %v719 = vmul.f32 %v645, 0.2
      %v720 = vmul.f32 %v648, 0.2
      %v721 = vmul.f32 %v650, 0.2
      %v722 = vmul.f32 %v653, 0.2
      %v723 = vmul.f32 %v655, 0.2
      %v724 = vmul.f32 %v658, 0.2
      %v725 = vmul.f32 %v660, 0.2
      %v726 = vmax.f32 %v503, %v662
      %v727 = vmax.f32 %v505, %v663
      %v728 = vmax.f32 %v508, %v664
      %v729 = vmax.f32 %v510, %v665
      %v730 = vmax.f32 %v513, %v666
      %v731 = vmax.f32 %v515, %v667
      %v732 = vmax.f32 %v518, %v668
      %v733 = vmax.f32 %v520, %v669
      %v734 = vmax.f32 %v523, %v670
      %v735 = vmax.f32 %v525, %v671
      %v736 = vmax.f32 %v528, %v672
      %v737 = vmax.f32 %v530, %v673
      %v738 = vmax.f32 %v533, %v674
      %v739 = vmax.f32 %v535, %v675
      %v740 = vmax.f32 %v538, %v676
      %v741 = vmax.f32 %v540, %v677
      %v742 = vmax.f32 %v543, %v678
      %v743 = vmax.f32 %v545, %v679
      %v744 = vmax.f32 %v548, %v680
      %v745 = vmax.f32 %v550, %v681
      %v746 = vmax.f32 %v553, %v682
      %v747 = vmax.f32 %v555, %v683
      %v748 = vmax.f32 %v558, %v684
      %v749 = vmax.f32 %v560, %v685
      %v750 = vmax.f32 %v563, %v686
      %v751 = vmax.f32 %v565, %v687
      %v752 = vmax.f32 %v568, %v688
      %v753 = vmax.f32 %v570, %v689
      %v754 = vmax.f32 %v573, %v690
      %v755 = vmax.f32 %v575, %v691
      %v756 = vmax.f32 %v578, %v692
      %v757 = vmax.f32 %v580, %v693
      %v758 = vmax.f32 %v583, %v694
      %v759 = vmax.f32 %v585, %v695
      %v760 = vmax.f32 %v588, %v696
      %v761 = vmax.f32 %v590, %v697
      %v762 = vmax.f32 %v593, %v698
      %v763 = vmax.f32 %v595, %v699
      %v764 = vmax.f32 %v598, %v700
      %v765 = vmax.f32 %v600, %v701
      %v766 = vmax.f32 %v603, %v702
      %v767 = vmax.f32 %v605, %v703
      %v768 = vmax.f32 %v608, %v704
      %v769 = vmax.f32 %v610, %v705
      %v770 = vmax.f32 %v613, %v706
      %v771 = vmax.f32 %v615, %v707
      %v772 = vmax.f32 %v618, %v708
      %v773 = vmax.f32 %v620, %v709
      %v774 = vmax.f32 %v623, %v710
      %v775 = vmax.f32 %v625, %v711
      %v776 = vmax.f32 %v628, %v712
      %v777 = vmax.f32 %v630, %v713
      %v778 = vmax.f32 %v633, %v714
      %v779 = vmax.f32 %v635, %v715
      %v780 = vmax.f32 %v638, %v716
      %v781 = vmax.f32 %v640, %v717
      %v782 = vmax.f32 %v643, %v718
      %v783 = vmax.f32 %v645, %v719
      %v784 = vmax.f32 %v648, %v720
      %v785 = vmax.f32 %v650, %v721
      %v786 = vmax.f32 %v653, %v722
      %v787 = vmax.f32 %v655, %v723
      %v788 = vmax.f32 %v658, %v724
      %v789 = vmax.f32 %v660, %v725
      %vm790 = vcmask 130048
      %791 = vst.msk [vmem:[%s145] sm:$0xff] %vm790, %v726
      %792 = vst.msk [vmem:[%s145 + $0x8] sm:$0xff] %vm790, %v727
      %793 = vst.msk [vmem:[%s145 + $0x10] sm:$0xff] %vm790, %v728
      %794 = vst.msk [vmem:[%s145 + $0x18] sm:$0xff] %vm790, %v729
      %795 = vst.msk [vmem:[%s145 + $0x20] sm:$0xff] %vm790, %v730
      %796 = vst.msk [vmem:[%s145 + $0x28] sm:$0xff] %vm790, %v731
      %797 = vst.msk [vmem:[%s145 + $0x30] sm:$0xff] %vm790, %v732
      %798 = vst.msk [vmem:[%s145 + $0x38] sm:$0xff] %vm790, %v733
      %799 = vst.msk [vmem:[%s145 + $0x40] sm:$0xff] %vm790, %v734
      %800 = vst.msk [vmem:[%s145 + $0x48] sm:$0xff] %vm790, %v735
      %801 = vst.msk [vmem:[%s145 + $0x50] sm:$0xff] %vm790, %v736
      %802 = vst.msk [vmem:[%s145 + $0x58] sm:$0xff] %vm790, %v737
      %803 = vst.msk [vmem:[%s145 + $0x60] sm:$0xff] %vm790, %v738
      %804 = vst.msk [vmem:[%s145 + $0x68] sm:$0xff] %vm790, %v739
      %805 = vst.msk [vmem:[%s145 + $0x70] sm:$0xff] %vm790, %v740
      %806 = vst.msk [vmem:[%s145 + $0x78] sm:$0xff] %vm790, %v741
      %807 = vst.msk [vmem:[%s145 + $0x80] sm:$0xff] %vm790, %v742
      %808 = vst.msk [vmem:[%s145 + $0x88] sm:$0xff] %vm790, %v743
      %809 = vst.msk [vmem:[%s145 + $0x90] sm:$0xff] %vm790, %v744
      %810 = vst.msk [vmem:[%s145 + $0x98] sm:$0xff] %vm790, %v745
      %811 = vst.msk [vmem:[%s145 + $0xa0] sm:$0xff] %vm790, %v746
      %812 = vst.msk [vmem:[%s145 + $0xa8] sm:$0xff] %vm790, %v747
      %813 = vst.msk [vmem:[%s145 + $0xb0] sm:$0xff] %vm790, %v748
      %814 = vst.msk [vmem:[%s145 + $0xb8] sm:$0xff] %vm790, %v749
      %815 = vst.msk [vmem:[%s145 + $0xc0] sm:$0xff] %vm790, %v750
      %816 = vst.msk [vmem:[%s145 + $0xc8] sm:$0xff] %vm790, %v751
      %817 = vst.msk [vmem:[%s145 + $0xd0] sm:$0xff] %vm790, %v752
      %818 = vst.msk [vmem:[%s145 + $0xd8] sm:$0xff] %vm790, %v753
      %819 = vst.msk [vmem:[%s145 + $0xe0] sm:$0xff] %vm790, %v754
      %820 = vst.msk [vmem:[%s145 + $0xe8] sm:$0xff] %vm790, %v755
      %821 = vst.msk [vmem:[%s145 + $0xf0] sm:$0xff] %vm790, %v756
      %822 = vst.msk [vmem:[%s145 + $0xf8] sm:$0xff] %vm790, %v757
      %823 = vst.msk [vmem:[%s145 + $0x100] sm:$0xff] %vm790, %v758
      %824 = vst.msk [vmem:[%s145 + $0x108] sm:$0xff] %vm790, %v759
      %825 = vst.msk [vmem:[%s145 + $0x110] sm:$0xff] %vm790, %v760
      %826 = vst.msk [vmem:[%s145 + $0x118] sm:$0xff] %vm790, %v761
      %827 = vst.msk [vmem:[%s145 + $0x120] sm:$0xff] %vm790, %v762
      %828 = vst.msk [vmem:[%s145 + $0x128] sm:$0xff] %vm790, %v763
      %829 = vst.msk [vmem:[%s145 + $0x130] sm:$0xff] %vm790, %v764
      %830 = vst.msk [vmem:[%s145 + $0x138] sm:$0xff] %vm790, %v765
      %831 = vst.msk [vmem:[%s145 + $0x140] sm:$0xff] %vm790, %v766
      %832 = vst.msk [vmem:[%s145 + $0x148] sm:$0xff] %vm790, %v767
      %833 = vst.msk [vmem:[%s145 + $0x150] sm:$0xff] %vm790, %v768
      %834 = vst.msk [vmem:[%s145 + $0x158] sm:$0xff] %vm790, %v769
      %835 = vst.msk [vmem:[%s145 + $0x160] sm:$0xff] %vm790, %v770
      %836 = vst.msk [vmem:[%s145 + $0x168] sm:$0xff] %vm790, %v771
      %837 = vst.msk [vmem:[%s145 + $0x170] sm:$0xff] %vm790, %v772
      %838 = vst.msk [vmem:[%s145 + $0x178] sm:$0xff] %vm790, %v773
      %839 = vst.msk [vmem:[%s145 + $0x180] sm:$0xff] %vm790, %v774
      %840 = vst.msk [vmem:[%s145 + $0x188] sm:$0xff] %vm790, %v775
      %841 = vst.msk [vmem:[%s145 + $0x190] sm:$0xff] %vm790, %v776
      %842 = vst.msk [vmem:[%s145 + $0x198] sm:$0xff] %vm790, %v777
      %843 = vst.msk [vmem:[%s145 + $0x1a0] sm:$0xff] %vm790, %v778
      %844 = vst.msk [vmem:[%s145 + $0x1a8] sm:$0xff] %vm790, %v779
      %845 = vst.msk [vmem:[%s145 + $0x1b0] sm:$0xff] %vm790, %v780
      %846 = vst.msk [vmem:[%s145 + $0x1b8] sm:$0xff] %vm790, %v781
      %847 = vst.msk [vmem:[%s145 + $0x1c0] sm:$0xff] %vm790, %v782
      %848 = vst.msk [vmem:[%s145 + $0x1c8] sm:$0xff] %vm790, %v783
      %849 = vst.msk [vmem:[%s145 + $0x1d0] sm:$0xff] %vm790, %v784
      %850 = vst.msk [vmem:[%s145 + $0x1d8] sm:$0xff] %vm790, %v785
      %851 = vst.msk [vmem:[%s145 + $0x1e0] sm:$0xff] %vm790, %v786
      %852 = vst.msk [vmem:[%s145 + $0x1e8] sm:$0xff] %vm790, %v787
      %853 = vst.msk [vmem:[%s145 + $0x1f0] sm:$0xff] %vm790, %v788
      %854 = vst.msk [vmem:[%s145 + $0x1f8] sm:$0xff] %vm790, %v789
      %s855 = smul.u32 64, %s13
      %p856 = scmp.lt.s32.totalorder %s855, 255
      %s857 = scalar_select %p856, %s855, 255
      %s858 = smul.addr %s857, 8
      %s859 = scalar_lea.vmem %s2, %s858
      // Predicated region
      $region29: #{_lambda_.8} parent=27 // pred_check
        %p860 = pneg %p78
      $region30: #{_lambda_.8} parent=27 // pred_check_branch
        %862 = sbr.rel (%p860) target = $region32
      $region31: #{_lambda_.8} parent=27 // pred_region
        %s863 = smul.u32 64, %s13
      $region32: #{_lambda_.8} parent=27 // pred_fallthru
        _
    $region28: #{_lambda_.8} parent=5 // pred_fallthru
      _
    %p864 = scmp.le.s32.totalorder 2, %s8
    // Predicated region
    $region33: #{_lambda_.8} parent=5 // pred_check
      %p865 = pneg %p864
    $region34: #{_lambda_.8} parent=5 // pred_check_branch
      %867 = sbr.rel (%p865) target = $region36
    $region35: #{_lambda_.8} parent=5 // pred_region
      %s868 = ssub.s32 %s8, 2
      // Predicated region
      $region37: #{_lambda_.8} parent=35 // pred_check
        %p869 = pneg %p84
      $region38: #{_lambda_.8} parent=35 // pred_check_branch
        %871 = sbr.rel (%p869) target = $region40
      $region39: #{_lambda_.8} parent=35 // pred_region
        %s872 = smul.u32 64, %s14
        %p873 = scmp.lt.s32.totalorder %s872, 255
        %s874 = scalar_select %p873, %s872, 255
        %s875 = smul.addr %s874, 8
        %s876 = scalar_lea.vmem %s2, %s875
      $region40: #{_lambda_.8} parent=35 // pred_fallthru
        _
    $region36: #{_lambda_.8} parent=5 // pred_fallthru
      _
  $region6: #{_lambda_.8} parent=0 // loop_footer
    %s12 = sadd.s32 1, %s8
  $region7: #{_lambda_.8} parent=0 // loop_footer_branch
    %7 = sbr.rel target = $region3
  $region8: #{_lambda_.8} parent=0 // loop_exit
    _

// kernel: _lambda_.10
$region0: #{_lambda_.10}
  #allocation0 [shape = 'u32[]', space=smem, size = 0x4, offset = 0x4, fixed_abs, tag = 'smem constant byte address 0x4 - core index']
  #allocation1 [shape = 'u32[72,128]{1,0:T(1,128)}', space=vmem, size = 0x9000, scoped, tag = 'internal scratch']
  %s0 = inlined_call_operand.vmem [shape: f32[512,32], index: 0, kind: input, shape index: {}]
  %s1 = inlined_call_operand.vmem [shape: f32[1,32], index: 1, kind: input, shape index: {}]
  %s2 = inlined_call_operand.vmem [shape: f32[1,32], index: 2, kind: input, shape index: {}]
  %s3 = inlined_call_operand.vmem [shape: f32[512,32], index: 3, kind: output, shape index: {}]
  %s4 = sld [smem:[#allocation0]]
  $region22: #{_lambda_.10} parent=0
    _
  %s6 = ssub.s32 1, %s4
  %s7 = scalar_select 0, %s6, %s4
  // Predicated region
  $region2: #{_lambda_.10} parent=0 // pred_check
    _
  $region3: #{_lambda_.10} parent=0 // pred_check_branch
    %9 = sbr.rel (0) target = $region5
  $region4: #{_lambda_.10} parent=0 // pred_region
    _
  $region5: #{_lambda_.10} parent=0 // pred_fallthru
    _
  // Predicated region
  $region6: #{_lambda_.10} parent=0 // pred_check
    _
  $region7: #{_lambda_.10} parent=0 // pred_check_branch
    %11 = sbr.rel (0) target = $region9
  $region8: #{_lambda_.10} parent=0 // pred_region
    _
  $region9: #{_lambda_.10} parent=0 // pred_fallthru
    _
  // Predicated region
  $region10: #{_lambda_.10} parent=0 // pred_check
    _
  $region11: #{_lambda_.10} parent=0 // pred_check_branch
    %13 = sbr.rel (0) target = $region13
  $region12: #{_lambda_.10} parent=0 // pred_region
    _
  $region13: #{_lambda_.10} parent=0 // pred_fallthru
    _
  %v14 = vld [vmem:[%s0] sm:$0xff]
  %v15 = vld [vmem:[%s0 + $0x8] sm:$0xff]
  %v16 = vld [vmem:[%s0 + $0x10] sm:$0xff]
  %v17 = vld [vmem:[%s0 + $0x18] sm:$0xff]
  %v18 = vld [vmem:[%s0 + $0x20] sm:$0xff]
  %v19 = vld [vmem:[%s0 + $0x28] sm:$0xff]
  %v20 = vld [vmem:[%s0 + $0x30] sm:$0xff]
  %v21 = vld [vmem:[%s0 + $0x38] sm:$0xff]
  %v22 = vld [vmem:[%s0 + $0x40] sm:$0xff]
  %v23 = vld [vmem:[%s0 + $0x48] sm:$0xff]
  %v24 = vld [vmem:[%s0 + $0x50] sm:$0xff]
  %v25 = vld [vmem:[%s0 + $0x58] sm:$0xff]
  %v26 = vld [vmem:[%s0 + $0x60] sm:$0xff]
  %v27 = vld [vmem:[%s0 + $0x68] sm:$0xff]
  %v28 = vld [vmem:[%s0 + $0x70] sm:$0xff]
  %v29 = vld [vmem:[%s0 + $0x78] sm:$0xff]
  %v30 = vld [vmem:[%s0 + $0x80] sm:$0xff]
  %v31 = vld [vmem:[%s0 + $0x88] sm:$0xff]
  %v32 = vld [vmem:[%s0 + $0x90] sm:$0xff]
  %v33 = vld [vmem:[%s0 + $0x98] sm:$0xff]
  %v34 = vld [vmem:[%s0 + $0xa0] sm:$0xff]
  %v35 = vld [vmem:[%s0 + $0xa8] sm:$0xff]
  %v36 = vld [vmem:[%s0 + $0xb0] sm:$0xff]
  %v37 = vld [vmem:[%s0 + $0xb8] sm:$0xff]
  %v38 = vld [vmem:[%s0 + $0xc0] sm:$0xff]
  %v39 = vld [vmem:[%s0 + $0xc8] sm:$0xff]
  %v40 = vld [vmem:[%s0 + $0xd0] sm:$0xff]
  %v41 = vld [vmem:[%s0 + $0xd8] sm:$0xff]
  %v42 = vld [vmem:[%s0 + $0xe0] sm:$0xff]
  %v43 = vld [vmem:[%s0 + $0xe8] sm:$0xff]
  %v44 = vld [vmem:[%s0 + $0xf0] sm:$0xff]
  %v45 = vld [vmem:[%s0 + $0xf8] sm:$0xff]
  %v46 = vld [vmem:[%s0 + $0x100] sm:$0xff]
  %v47 = vld [vmem:[%s0 + $0x108] sm:$0xff]
  %v48 = vld [vmem:[%s0 + $0x110] sm:$0xff]
  %v49 = vld [vmem:[%s0 + $0x118] sm:$0xff]
  %v50 = vld [vmem:[%s0 + $0x120] sm:$0xff]
  %v51 = vld [vmem:[%s0 + $0x128] sm:$0xff]
  %v52 = vld [vmem:[%s0 + $0x130] sm:$0xff]
  %v53 = vld [vmem:[%s0 + $0x138] sm:$0xff]
  %v54 = vld [vmem:[%s0 + $0x140] sm:$0xff]
  %v55 = vld [vmem:[%s0 + $0x148] sm:$0xff]
  %v56 = vld [vmem:[%s0 + $0x150] sm:$0xff]
  %v57 = vld [vmem:[%s0 + $0x158] sm:$0xff]
  %v58 = vld [vmem:[%s0 + $0x160] sm:$0xff]
  %v59 = vld [vmem:[%s0 + $0x168] sm:$0xff]
  %v60 = vld [vmem:[%s0 + $0x170] sm:$0xff]
  %v61 = vld [vmem:[%s0 + $0x178] sm:$0xff]
  %v62 = vld [vmem:[%s0 + $0x180] sm:$0xff]
  %v63 = vld [vmem:[%s0 + $0x188] sm:$0xff]
  %v64 = vld [vmem:[%s0 + $0x190] sm:$0xff]
  %v65 = vld [vmem:[%s0 + $0x198] sm:$0xff]
  %v66 = vld [vmem:[%s0 + $0x1a0] sm:$0xff]
  %v67 = vld [vmem:[%s0 + $0x1a8] sm:$0xff]
  %v68 = vld [vmem:[%s0 + $0x1b0] sm:$0xff]
  %v69 = vld [vmem:[%s0 + $0x1b8] sm:$0xff]
  %v70 = vld [vmem:[%s0 + $0x1c0] sm:$0xff]
  %v71 = vld [vmem:[%s0 + $0x1c8] sm:$0xff]
  %v72 = vld [vmem:[%s0 + $0x1d0] sm:$0xff]
  %v73 = vld [vmem:[%s0 + $0x1d8] sm:$0xff]
  %v74 = vld [vmem:[%s0 + $0x1e0] sm:$0xff]
  %v75 = vld [vmem:[%s0 + $0x1e8] sm:$0xff]
  %v76 = vld [vmem:[%s0 + $0x1f0] sm:$0xff]
  %v77 = vld [vmem:[%s0 + $0x1f8] sm:$0xff]
  %v78 = vld [vmem:[%s1] sm:$0x1]
  %v80 = vperm.slane %v78, 0
  %v82 = vmul.f32 %v14, %v80
  %v83 = vmul.f32 %v15, %v80
  %v84 = vmul.f32 %v16, %v80
  %v85 = vmul.f32 %v17, %v80
  %v86 = vmul.f32 %v18, %v80
  %v87 = vmul.f32 %v19, %v80
  %v88 = vmul.f32 %v20, %v80
  %v89 = vmul.f32 %v21, %v80
  %v90 = vmul.f32 %v22, %v80
  %v91 = vmul.f32 %v23, %v80
  %v92 = vmul.f32 %v24, %v80
  %v93 = vmul.f32 %v25, %v80
  %v94 = vmul.f32 %v26, %v80
  %v95 = vmul.f32 %v27, %v80
  %v96 = vmul.f32 %v28, %v80
  %v97 = vmul.f32 %v29, %v80
  %v98 = vmul.f32 %v30, %v80
  %v99 = vmul.f32 %v31, %v80
  %v100 = vmul.f32 %v32, %v80
  %v101 = vmul.f32 %v33, %v80
  %v102 = vmul.f32 %v34, %v80
  %v103 = vmul.f32 %v35, %v80
  %v104 = vmul.f32 %v36, %v80
  %v105 = vmul.f32 %v37, %v80
  %v106 = vmul.f32 %v38, %v80
  %v107 = vmul.f32 %v39, %v80
  %v108 = vmul.f32 %v40, %v80
  %v109 = vmul.f32 %v41, %v80
  %v110 = vmul.f32 %v42, %v80
  %v111 = vmul.f32 %v43, %v80
  %v112 = vmul.f32 %v44, %v80
  %v113 = vmul.f32 %v45, %v80
  %v114 = vmul.f32 %v46, %v80
  %v115 = vmul.f32 %v47, %v80
  %v116 = vmul.f32 %v48, %v80
  %v117 = vmul.f32 %v49, %v80
  %v118 = vmul.f32 %v50, %v80
  %v119 = vmul.f32 %v51, %v80
  %v120 = vmul.f32 %v52, %v80
  %v121 = vmul.f32 %v53, %v80
  %v122 = vmul.f32 %v54, %v80
  %v123 = vmul.f32 %v55, %v80
  %v124 = vmul.f32 %v56, %v80
  %v125 = vmul.f32 %v57, %v80
  %v126 = vmul.f32 %v58, %v80
  %v127 = vmul.f32 %v59, %v80
  %v128 = vmul.f32 %v60, %v80
  %v129 = vmul.f32 %v61, %v80
  %v130 = vmul.f32 %v62, %v80
  %v131 = vmul.f32 %v63, %v80
  %v132 = vmul.f32 %v64, %v80
  %v133 = vmul.f32 %v65, %v80
  %v134 = vmul.f32 %v66, %v80
  %v135 = vmul.f32 %v67, %v80
  %v136 = vmul.f32 %v68, %v80
  %v137 = vmul.f32 %v69, %v80
  %v138 = vmul.f32 %v70, %v80
  %v139 = vmul.f32 %v71, %v80
  %v140 = vmul.f32 %v72, %v80
  %v141 = vmul.f32 %v73, %v80
  %v142 = vmul.f32 %v74, %v80
  %v143 = vmul.f32 %v75, %v80
  %v144 = vmul.f32 %v76, %v80
  %v145 = vmul.f32 %v77, %v80
  %v146 = vld [vmem:[%s2] sm:$0x1]
  %v148 = vperm.slane %v146, 0
  %v150 = vadd.f32 %v82, %v148
  %v151 = vadd.f32 %v83, %v148
  %v152 = vadd.f32 %v84, %v148
  %v153 = vadd.f32 %v85, %v148
  %v154 = vadd.f32 %v86, %v148
  %v155 = vadd.f32 %v87, %v148
  %v156 = vadd.f32 %v88, %v148
  %v157 = vadd.f32 %v89, %v148
  %v158 = vadd.f32 %v90, %v148
  %v159 = vadd.f32 %v91, %v148
  %v160 = vadd.f32 %v92, %v148
  %v161 = vadd.f32 %v93, %v148
  %v162 = vadd.f32 %v94, %v148
  %v163 = vadd.f32 %v95, %v148
  %v164 = vadd.f32 %v96, %v148
  %v165 = vadd.f32 %v97, %v148
  %v166 = vadd.f32 %v98, %v148
  %v167 = vadd.f32 %v99, %v148
  %v168 = vadd.f32 %v100, %v148
  %v169 = vadd.f32 %v101, %v148
  %v170 = vadd.f32 %v102, %v148
  %v171 = vadd.f32 %v103, %v148
  %v172 = vadd.f32 %v104, %v148
  %v173 = vadd.f32 %v105, %v148
  %v174 = vadd.f32 %v106, %v148
  %v175 = vadd.f32 %v107, %v148
  %v176 = vadd.f32 %v108, %v148
  %v177 = vadd.f32 %v109, %v148
  %v178 = vadd.f32 %v110, %v148
  %v179 = vadd.f32 %v111, %v148
  %v180 = vadd.f32 %v112, %v148
  %v181 = vadd.f32 %v113, %v148
  %v182 = vadd.f32 %v114, %v148
  %v183 = vadd.f32 %v115, %v148
  %v184 = vadd.f32 %v116, %v148
  %v185 = vadd.f32 %v117, %v148
  %v186 = vadd.f32 %v118, %v148
  %v187 = vadd.f32 %v119, %v148
  %v188 = vadd.f32 %v120, %v148
  %v189 = vadd.f32 %v121, %v148
  %v190 = vadd.f32 %v122, %v148
  %v191 = vadd.f32 %v123, %v148
  %v192 = vadd.f32 %v124, %v148
  %v193 = vadd.f32 %v125, %v148
  %v194 = vadd.f32 %v126, %v148
  %v195 = vadd.f32 %v127, %v148
  %v196 = vadd.f32 %v128, %v148
  %v197 = vadd.f32 %v129, %v148
  %v198 = vadd.f32 %v130, %v148
  %v199 = vadd.f32 %v131, %v148
  %v200 = vadd.f32 %v132, %v148
  %v201 = vadd.f32 %v133, %v148
  %v202 = vadd.f32 %v134, %v148
  %v203 = vadd.f32 %v135, %v148
  %v204 = vadd.f32 %v136, %v148
  %v205 = vadd.f32 %v137, %v148
  %v206 = vadd.f32 %v138, %v148
  %v207 = vadd.f32 %v139, %v148
  %v208 = vadd.f32 %v140, %v148
  %v209 = vadd.f32 %v141, %v148
  %v210 = vadd.f32 %v142, %v148
  %v211 = vadd.f32 %v143, %v148
  %v212 = vadd.f32 %v144, %v148
  %v213 = vadd.f32 %v145, %v148
  %v214 = vmul.f32 %v150, 0.2
  %v215 = vmul.f32 %v151, 0.2
  %v216 = vmul.f32 %v152, 0.2
  %v217 = vmul.f32 %v153, 0.2
  %v218 = vmul.f32 %v154, 0.2
  %v219 = vmul.f32 %v155, 0.2
  %v220 = vmul.f32 %v156, 0.2
  %v221 = vmul.f32 %v157, 0.2
  %v222 = vmul.f32 %v158, 0.2
  %v223 = vmul.f32 %v159, 0.2
  %v224 = vmul.f32 %v160, 0.2
  %v225 = vmul.f32 %v161, 0.2
  %v226 = vmul.f32 %v162, 0.2
  %v227 = vmul.f32 %v163, 0.2
  %v228 = vmul.f32 %v164, 0.2
  %v229 = vmul.f32 %v165, 0.2
  %v230 = vmul.f32 %v166, 0.2
  %v231 = vmul.f32 %v167, 0.2
  %v232 = vmul.f32 %v168, 0.2
  %v233 = vmul.f32 %v169, 0.2
  %v234 = vmul.f32 %v170, 0.2
  %v235 = vmul.f32 %v171, 0.2
  %v236 = vmul.f32 %v172, 0.2
  %v237 = vmul.f32 %v173, 0.2
  %v238 = vmul.f32 %v174, 0.2
  %v239 = vmul.f32 %v175, 0.2
  %v240 = vmul.f32 %v176, 0.2
  %v241 = vmul.f32 %v177, 0.2
  %v242 = vmul.f32 %v178, 0.2
  %v243 = vmul.f32 %v179, 0.2
  %v244 = vmul.f32 %v180, 0.2
  %v245 = vmul.f32 %v181, 0.2
  %v246 = vmul.f32 %v182, 0.2
  %v247 = vmul.f32 %v183, 0.2
  %v248 = vmul.f32 %v184, 0.2
  %v249 = vmul.f32 %v185, 0.2
  %v250 = vmul.f32 %v186, 0.2
  %v251 = vmul.f32 %v187, 0.2
  %v252 = vmul.f32 %v188, 0.2
  %v253 = vmul.f32 %v189, 0.2
  %v254 = vmul.f32 %v190, 0.2
  %v255 = vmul.f32 %v191, 0.2
  %v256 = vmul.f32 %v192, 0.2
  %v257 = vmul.f32 %v193, 0.2
  %v258 = vmul.f32 %v194, 0.2
  %v259 = vmul.f32 %v195, 0.2
  %v260 = vmul.f32 %v196, 0.2
  %v261 = vmul.f32 %v197, 0.2
  %v262 = vmul.f32 %v198, 0.2
  %v263 = vmul.f32 %v199, 0.2
  %v264 = vmul.f32 %v200, 0.2
  %v265 = vmul.f32 %v201, 0.2
  %v266 = vmul.f32 %v202, 0.2
  %v267 = vmul.f32 %v203, 0.2
  %v268 = vmul.f32 %v204, 0.2
  %v269 = vmul.f32 %v205, 0.2
  %v270 = vmul.f32 %v206, 0.2
  %v271 = vmul.f32 %v207, 0.2
  %v272 = vmul.f32 %v208, 0.2
  %v273 = vmul.f32 %v209, 0.2
  %v274 = vmul.f32 %v210, 0.2
  %v275 = vmul.f32 %v211, 0.2
  %v276 = vmul.f32 %v212, 0.2
  %v277 = vmul.f32 %v213, 0.2
  %v278 = vmax.f32 %v150, %v214
  %v279 = vmax.f32 %v151, %v215
  %v280 = vmax.f32 %v152, %v216
  %v281 = vmax.f32 %v153, %v217
  %v282 = vmax.f32 %v154, %v218
  %v283 = vmax.f32 %v155, %v219
  %v284 = vmax.f32 %v156, %v220
  %v285 = vmax.f32 %v157, %v221
  %v286 = vmax.f32 %v158, %v222
  %v287 = vmax.f32 %v159, %v223
  %v288 = vmax.f32 %v160, %v224
  %v289 = vmax.f32 %v161, %v225
  %v290 = vmax.f32 %v162, %v226
  %v291 = vmax.f32 %v163, %v227
  %v292 = vmax.f32 %v164, %v228
  %v293 = vmax.f32 %v165, %v229
  %v294 = vmax.f32 %v166, %v230
  %v295 = vmax.f32 %v167, %v231
  %v296 = vmax.f32 %v168, %v232
  %v297 = vmax.f32 %v169, %v233
  %v298 = vmax.f32 %v170, %v234
  %v299 = vmax.f32 %v171, %v235
  %v300 = vmax.f32 %v172, %v236
  %v301 = vmax.f32 %v173, %v237
  %v302 = vmax.f32 %v174, %v238
  %v303 = vmax.f32 %v175, %v239
  %v304 = vmax.f32 %v176, %v240
  %v305 = vmax.f32 %v177, %v241
  %v306 = vmax.f32 %v178, %v242
  %v307 = vmax.f32 %v179, %v243
  %v308 = vmax.f32 %v180, %v244
  %v309 = vmax.f32 %v181, %v245
  %v310 = vmax.f32 %v182, %v246
  %v311 = vmax.f32 %v183, %v247
  %v312 = vmax.f32 %v184, %v248
  %v313 = vmax.f32 %v185, %v249
  %v314 = vmax.f32 %v186, %v250
  %v315 = vmax.f32 %v187, %v251
  %v316 = vmax.f32 %v188, %v252
  %v317 = vmax.f32 %v189, %v253
  %v318 = vmax.f32 %v190, %v254
  %v319 = vmax.f32 %v191, %v255
  %v320 = vmax.f32 %v192, %v256
  %v321 = vmax.f32 %v193, %v257
  %v322 = vmax.f32 %v194, %v258
  %v323 = vmax.f32 %v195, %v259
  %v324 = vmax.f32 %v196, %v260
  %v325 = vmax.f32 %v197, %v261
  %v326 = vmax.f32 %v198, %v262
  %v327 = vmax.f32 %v199, %v263
  %v328 = vmax.f32 %v200, %v264
  %v329 = vmax.f32 %v201, %v265
  %v330 = vmax.f32 %v202, %v266
  %v331 = vmax.f32 %v203, %v267
  %v332 = vmax.f32 %v204, %v268
  %v333 = vmax.f32 %v205, %v269
  %v334 = vmax.f32 %v206, %v270
  %v335 = vmax.f32 %v207, %v271
  %v336 = vmax.f32 %v208, %v272
  %v337 = vmax.f32 %v209, %v273
  %v338 = vmax.f32 %v210, %v274
  %v339 = vmax.f32 %v211, %v275
  %v340 = vmax.f32 %v212, %v276
  %v341 = vmax.f32 %v213, %v277
  %vm342 = vcmask 261120
  %343 = vst.msk [vmem:[%s3] sm:$0xff] %vm342, %v278
  %344 = vst.msk [vmem:[%s3 + $0x8] sm:$0xff] %vm342, %v279
  %345 = vst.msk [vmem:[%s3 + $0x10] sm:$0xff] %vm342, %v280
  %346 = vst.msk [vmem:[%s3 + $0x18] sm:$0xff] %vm342, %v281
  %347 = vst.msk [vmem:[%s3 + $0x20] sm:$0xff] %vm342, %v282
  %348 = vst.msk [vmem:[%s3 + $0x28] sm:$0xff] %vm342, %v283
  %349 = vst.msk [vmem:[%s3 + $0x30] sm:$0xff] %vm342, %v284
  %350 = vst.msk [vmem:[%s3 + $0x38] sm:$0xff] %vm342, %v285
  %351 = vst.msk [vmem:[%s3 + $0x40] sm:$0xff] %vm342, %v286
  %352 = vst.msk [vmem:[%s3 + $0x48] sm:$0xff] %vm342, %v287
  %353 = vst.msk [vmem:[%s3 + $0x50] sm:$0xff] %vm342, %v288
  %354 = vst.msk [vmem:[%s3 + $0x58] sm:$0xff] %vm342, %v289
  %355 = vst.msk [vmem:[%s3 + $0x60] sm:$0xff] %vm342, %v290
  %356 = vst.msk [vmem:[%s3 + $0x68] sm:$0xff] %vm342, %v291
  %357 = vst.msk [vmem:[%s3 + $0x70] sm:$0xff] %vm342, %v292
  %358 = vst.msk [vmem:[%s3 + $0x78] sm:$0xff] %vm342, %v293
  %359 = vst.msk [vmem:[%s3 + $0x80] sm:$0xff] %vm342, %v294
  %360 = vst.msk [vmem:[%s3 + $0x88] sm:$0xff] %vm342, %v295
  %361 = vst.msk [vmem:[%s3 + $0x90] sm:$0xff] %vm342, %v296
  %362 = vst.msk [vmem:[%s3 + $0x98] sm:$0xff] %vm342, %v297
  %363 = vst.msk [vmem:[%s3 + $0xa0] sm:$0xff] %vm342, %v298
  %364 = vst.msk [vmem:[%s3 + $0xa8] sm:$0xff] %vm342, %v299
  %365 = vst.msk [vmem:[%s3 + $0xb0] sm:$0xff] %vm342, %v300
  %366 = vst.msk [vmem:[%s3 + $0xb8] sm:$0xff] %vm342, %v301
  %367 = vst.msk [vmem:[%s3 + $0xc0] sm:$0xff] %vm342, %v302
  %368 = vst.msk [vmem:[%s3 + $0xc8] sm:$0xff] %vm342, %v303
  %369 = vst.msk [vmem:[%s3 + $0xd0] sm:$0xff] %vm342, %v304
  %370 = vst.msk [vmem:[%s3 + $0xd8] sm:$0xff] %vm342, %v305
  %371 = vst.msk [vmem:[%s3 + $0xe0] sm:$0xff] %vm342, %v306
  %372 = vst.msk [vmem:[%s3 + $0xe8] sm:$0xff] %vm342, %v307
  %373 = vst.msk [vmem:[%s3 + $0xf0] sm:$0xff] %vm342, %v308
  %374 = vst.msk [vmem:[%s3 + $0xf8] sm:$0xff] %vm342, %v309
  %375 = vst.msk [vmem:[%s3 + $0x100] sm:$0xff] %vm342, %v310
  %376 = vst.msk [vmem:[%s3 + $0x108] sm:$0xff] %vm342, %v311
  %377 = vst.msk [vmem:[%s3 + $0x110] sm:$0xff] %vm342, %v312
  %378 = vst.msk [vmem:[%s3 + $0x118] sm:$0xff] %vm342, %v313
  %379 = vst.msk [vmem:[%s3 + $0x120] sm:$0xff] %vm342, %v314
  %380 = vst.msk [vmem:[%s3 + $0x128] sm:$0xff] %vm342, %v315
  %381 = vst.msk [vmem:[%s3 + $0x130] sm:$0xff] %vm342, %v316
  %382 = vst.msk [vmem:[%s3 + $0x138] sm:$0xff] %vm342, %v317
  %383 = vst.msk [vmem:[%s3 + $0x140] sm:$0xff] %vm342, %v318
  %384 = vst.msk [vmem:[%s3 + $0x148] sm:$0xff] %vm342, %v319
  %385 = vst.msk [vmem:[%s3 + $0x150] sm:$0xff] %vm342, %v320
  %386 = vst.msk [vmem:[%s3 + $0x158] sm:$0xff] %vm342, %v321
  %387 = vst.msk [vmem:[%s3 + $0x160] sm:$0xff] %vm342, %v322
  %388 = vst.msk [vmem:[%s3 + $0x168] sm:$0xff] %vm342, %v323
  %389 = vst.msk [vmem:[%s3 + $0x170] sm:$0xff] %vm342, %v324
  %390 = vst.msk [vmem:[%s3 + $0x178] sm:$0xff] %vm342, %v325
  %391 = vst.msk [vmem:[%s3 + $0x180] sm:$0xff] %vm342, %v326
  %392 = vst.msk [vmem:[%s3 + $0x188] sm:$0xff] %vm342, %v327
  %393 = vst.msk [vmem:[%s3 + $0x190] sm:$0xff] %vm342, %v328
  %394 = vst.msk [vmem:[%s3 + $0x198] sm:$0xff] %vm342, %v329
  %395 = vst.msk [vmem:[%s3 + $0x1a0] sm:$0xff] %vm342, %v330
  %396 = vst.msk [vmem:[%s3 + $0x1a8] sm:$0xff] %vm342, %v331
  %397 = vst.msk [vmem:[%s3 + $0x1b0] sm:$0xff] %vm342, %v332
  %398 = vst.msk [vmem:[%s3 + $0x1b8] sm:$0xff] %vm342, %v333
  %399 = vst.msk [vmem:[%s3 + $0x1c0] sm:$0xff] %vm342, %v334
  %400 = vst.msk [vmem:[%s3 + $0x1c8] sm:$0xff] %vm342, %v335
  %401 = vst.msk [vmem:[%s3 + $0x1d0] sm:$0xff] %vm342, %v336
  %402 = vst.msk [vmem:[%s3 + $0x1d8] sm:$0xff] %vm342, %v337
  %403 = vst.msk [vmem:[%s3 + $0x1e0] sm:$0xff] %vm342, %v338
  %404 = vst.msk [vmem:[%s3 + $0x1e8] sm:$0xff] %vm342, %v339
  %405 = vst.msk [vmem:[%s3 + $0x1f0] sm:$0xff] %vm342, %v340
  %406 = vst.msk [vmem:[%s3 + $0x1f8] sm:$0xff] %vm342, %v341
  // Predicated region
  $region14: #{_lambda_.10} parent=0 // pred_check
    _
  $region15: #{_lambda_.10} parent=0 // pred_check_branch
    %408 = sbr.rel (0) target = $region17
  $region16: #{_lambda_.10} parent=0 // pred_region
    _
  $region17: #{_lambda_.10} parent=0 // pred_fallthru
    _
  // Predicated region
  $region18: #{_lambda_.10} parent=0 // pred_check
    _
  $region19: #{_lambda_.10} parent=0 // pred_check_branch
    %410 = sbr.rel (0) target = $region21
  $region20: #{_lambda_.10} parent=0 // pred_region
    _
  $region21: #{_lambda_.10} parent=0 // pred_fallthru
    _

// kernel: _lambda_.9
$region0: #{_lambda_.9}
  #allocation0 [shape = 'u32[]', space=smem, size = 0x4, offset = 0x4, fixed_abs, tag = 'smem constant byte address 0x4 - core index']
  #allocation1 [shape = 'u32[72,128]{1,0:T(1,128)}', space=vmem, size = 0x9000, scoped, tag = 'internal scratch']
  %s0 = inlined_call_operand.vmem [shape: bf16[512,256], index: 0, kind: input, shape index: {}]
  %s1 = inlined_call_operand.vmem [shape: bf16[256,32], index: 1, kind: input, shape index: {}]
  %s2 = inlined_call_operand.vmem [shape: f32[512,32], index: 2, kind: output, shape index: {0}]
  %s3 = inlined_call_operand.vmem [shape: f32[2,32], index: 3, kind: output, shape index: {1}]
  %4 = xla_tuple %s2, %s3
  %s5 = sld [smem:[#allocation0]]
  $region34: #{_lambda_.9} parent=0
    _
  %s7 = ssub.s32 1, %s5
  %s8 = scalar_select 0, %s7, %s5
  // Predicated region
  $region2: #{_lambda_.9} parent=0 // pred_check
    _
  $region3: #{_lambda_.9} parent=0 // pred_check_branch
    %10 = sbr.rel (0) target = $region5
  $region4: #{_lambda_.9} parent=0 // pred_region
    _
  $region5: #{_lambda_.9} parent=0 // pred_fallthru
    _
  // Predicated region
  $region6: #{_lambda_.9} parent=0 // pred_check
    _
  $region7: #{_lambda_.9} parent=0 // pred_check_branch
    %12 = sbr.rel (0) target = $region9
  $region8: #{_lambda_.9} parent=0 // pred_region
    _
  $region9: #{_lambda_.9} parent=0 // pred_fallthru
    _
  %v13 = vld [vmem:[%s0] sm:$0xff]
  %v14 = vld [vmem:[%s0 + $0x8] sm:$0xff]
  %v15 = vld [vmem:[%s0 + $0x10] sm:$0xff]
  %v16 = vld [vmem:[%s0 + $0x18] sm:$0xff]
  %v17 = vld [vmem:[%s0 + $0x20] sm:$0xff]
  %v18 = vld [vmem:[%s0 + $0x28] sm:$0xff]
  %v19 = vld [vmem:[%s0 + $0x30] sm:$0xff]
  %v20 = vld [vmem:[%s0 + $0x38] sm:$0xff]
  %v21 = vld [vmem:[%s0 + $0x40] sm:$0xff]
  %v22 = vld [vmem:[%s0 + $0x48] sm:$0xff]
  %v23 = vld [vmem:[%s0 + $0x50] sm:$0xff]
  %v24 = vld [vmem:[%s0 + $0x58] sm:$0xff]
  %v25 = vld [vmem:[%s0 + $0x60] sm:$0xff]
  %v26 = vld [vmem:[%s0 + $0x68] sm:$0xff]
  %v27 = vld [vmem:[%s0 + $0x70] sm:$0xff]
  %v28 = vld [vmem:[%s0 + $0x78] sm:$0xff]
  %v29 = vld [vmem:[%s0 + $0x80] sm:$0xff]
  %v30 = vld [vmem:[%s0 + $0x88] sm:$0xff]
  %v31 = vld [vmem:[%s0 + $0x90] sm:$0xff]
  %v32 = vld [vmem:[%s0 + $0x98] sm:$0xff]
  %v33 = vld [vmem:[%s0 + $0xa0] sm:$0xff]
  %v34 = vld [vmem:[%s0 + $0xa8] sm:$0xff]
  %v35 = vld [vmem:[%s0 + $0xb0] sm:$0xff]
  %v36 = vld [vmem:[%s0 + $0xb8] sm:$0xff]
  %v37 = vld [vmem:[%s0 + $0xc0] sm:$0xff]
  %v38 = vld [vmem:[%s0 + $0xc8] sm:$0xff]
  %v39 = vld [vmem:[%s0 + $0xd0] sm:$0xff]
  %v40 = vld [vmem:[%s0 + $0xd8] sm:$0xff]
  %v41 = vld [vmem:[%s0 + $0xe0] sm:$0xff]
  %v42 = vld [vmem:[%s0 + $0xe8] sm:$0xff]
  %v43 = vld [vmem:[%s0 + $0xf0] sm:$0xff]
  %v44 = vld [vmem:[%s0 + $0xf8] sm:$0xff]
  %v45 = vld [vmem:[%s0 + $0x100] sm:$0xff]
  %v46 = vld [vmem:[%s0 + $0x108] sm:$0xff]
  %v47 = vld [vmem:[%s0 + $0x110] sm:$0xff]
  %v48 = vld [vmem:[%s0 + $0x118] sm:$0xff]
  %v49 = vld [vmem:[%s0 + $0x120] sm:$0xff]
  %v50 = vld [vmem:[%s0 + $0x128] sm:$0xff]
  %v51 = vld [vmem:[%s0 + $0x130] sm:$0xff]
  %v52 = vld [vmem:[%s0 + $0x138] sm:$0xff]
  %v53 = vld [vmem:[%s0 + $0x140] sm:$0xff]
  %v54 = vld [vmem:[%s0 + $0x148] sm:$0xff]
  %v55 = vld [vmem:[%s0 + $0x150] sm:$0xff]
  %v56 = vld [vmem:[%s0 + $0x158] sm:$0xff]
  %v57 = vld [vmem:[%s0 + $0x160] sm:$0xff]
  %v58 = vld [vmem:[%s0 + $0x168] sm:$0xff]
  %v59 = vld [vmem:[%s0 + $0x170] sm:$0xff]
  %v60 = vld [vmem:[%s0 + $0x178] sm:$0xff]
  %v61 = vld [vmem:[%s0 + $0x180] sm:$0xff]
  %v62 = vld [vmem:[%s0 + $0x188] sm:$0xff]
  %v63 = vld [vmem:[%s0 + $0x190] sm:$0xff]
  %v64 = vld [vmem:[%s0 + $0x198] sm:$0xff]
  %v65 = vld [vmem:[%s0 + $0x1a0] sm:$0xff]
  %v66 = vld [vmem:[%s0 + $0x1a8] sm:$0xff]
  %v67 = vld [vmem:[%s0 + $0x1b0] sm:$0xff]
  %v68 = vld [vmem:[%s0 + $0x1b8] sm:$0xff]
  %v69 = vld [vmem:[%s0 + $0x1c0] sm:$0xff]
  %v70 = vld [vmem:[%s0 + $0x1c8] sm:$0xff]
  %v71 = vld [vmem:[%s0 + $0x1d0] sm:$0xff]
  %v72 = vld [vmem:[%s0 + $0x1d8] sm:$0xff]
  %v73 = vld [vmem:[%s0 + $0x1e0] sm:$0xff]
  %v74 = vld [vmem:[%s0 + $0x1e8] sm:$0xff]
  %v75 = vld [vmem:[%s0 + $0x1f0] sm:$0xff]
  %v76 = vld [vmem:[%s0 + $0x1f8] sm:$0xff]
  %v77 = vld [vmem:[%s1] sm:$0xf]
  %v78 = vld [vmem:[%s1 + $0x4] sm:$0xf]
  %v79 = vld [vmem:[%s1 + $0x8] sm:$0xf]
  %v80 = vld [vmem:[%s1 + $0xc] sm:$0xf]
  %v81 = vld [vmem:[%s1 + $0x10] sm:$0xf]
  %v82 = vld [vmem:[%s1 + $0x14] sm:$0xf]
  %v83 = vld [vmem:[%s1 + $0x18] sm:$0xf]
  %v84 = vld [vmem:[%s1 + $0x1c] sm:$0xf]
  %v85 = vld [vmem:[%s1 + $0x20] sm:$0xf]
  %v86 = vld [vmem:[%s1 + $0x24] sm:$0xf]
  %v87 = vld [vmem:[%s1 + $0x28] sm:$0xf]
  %v88 = vld [vmem:[%s1 + $0x2c] sm:$0xf]
  %v89 = vld [vmem:[%s1 + $0x30] sm:$0xf]
  %v90 = vld [vmem:[%s1 + $0x34] sm:$0xf]
  %v91 = vld [vmem:[%s1 + $0x38] sm:$0xf]
  %v92 = vld [vmem:[%s1 + $0x3c] sm:$0xf]
  %v93 = vld [vmem:[%s1 + $0x40] sm:$0xf]
  %v94 = vld [vmem:[%s1 + $0x44] sm:$0xf]
  %v95 = vld [vmem:[%s1 + $0x48] sm:$0xf]
  %v96 = vld [vmem:[%s1 + $0x4c] sm:$0xf]
  %v97 = vld [vmem:[%s1 + $0x50] sm:$0xf]
  %v98 = vld [vmem:[%s1 + $0x54] sm:$0xf]
  %v99 = vld [vmem:[%s1 + $0x58] sm:$0xf]
  %v100 = vld [vmem:[%s1 + $0x5c] sm:$0xf]
  %v101 = vld [vmem:[%s1 + $0x60] sm:$0xf]
  %v102 = vld [vmem:[%s1 + $0x64] sm:$0xf]
  %v103 = vld [vmem:[%s1 + $0x68] sm:$0xf]
  %v104 = vld [vmem:[%s1 + $0x6c] sm:$0xf]
  %v105 = vld [vmem:[%s1 + $0x70] sm:$0xf]
  %v106 = vld [vmem:[%s1 + $0x74] sm:$0xf]
  %v107 = vld [vmem:[%s1 + $0x78] sm:$0xf]
  %v108 = vld [vmem:[%s1 + $0x7c] sm:$0xf]
  %v173 = vunpack.c.l.b16 %v13
  %v174 = vunpack.c.h.b16 %v13
  %v175 = vunpack.c.l.b16 %v14
  %v176 = vunpack.c.h.b16 %v14
  %v177 = vunpack.c.l.b16 %v15
  %v178 = vunpack.c.h.b16 %v15
  %v179 = vunpack.c.l.b16 %v16
  %v180 = vunpack.c.h.b16 %v16
  %v181 = vunpack.c.l.b16 %v17
  %v182 = vunpack.c.h.b16 %v17
  %v183 = vunpack.c.l.b16 %v18
  %v184 = vunpack.c.h.b16 %v18
  %v185 = vunpack.c.l.b16 %v19
  %v186 = vunpack.c.h.b16 %v19
  %v187 = vunpack.c.l.b16 %v20
  %v188 = vunpack.c.h.b16 %v20
  %v189 = vunpack.c.l.b16 %v21
  %v190 = vunpack.c.h.b16 %v21
  %v191 = vunpack.c.l.b16 %v22
  %v192 = vunpack.c.h.b16 %v22
  %v193 = vunpack.c.l.b16 %v23
  %v194 = vunpack.c.h.b16 %v23
  %v195 = vunpack.c.l.b16 %v24
  %v196 = vunpack.c.h.b16 %v24
  %v197 = vunpack.c.l.b16 %v25
  %v198 = vunpack.c.h.b16 %v25
  %v199 = vunpack.c.l.b16 %v26
  %v200 = vunpack.c.h.b16 %v26
  %v201 = vunpack.c.l.b16 %v27
  %v202 = vunpack.c.h.b16 %v27
  %v203 = vunpack.c.l.b16 %v28
  %v204 = vunpack.c.h.b16 %v28
  %v205 = vunpack.c.l.b16 %v29
  %v206 = vunpack.c.h.b16 %v29
  %v207 = vunpack.c.l.b16 %v30
  %v208 = vunpack.c.h.b16 %v30
  %v209 = vunpack.c.l.b16 %v31
  %v210 = vunpack.c.h.b16 %v31
  %v211 = vunpack.c.l.b16 %v32
  %v212 = vunpack.c.h.b16 %v32
  %v213 = vunpack.c.l.b16 %v33
  %v214 = vunpack.c.h.b16 %v33
  %v215 = vunpack.c.l.b16 %v34
  %v216 = vunpack.c.h.b16 %v34
  %v217 = vunpack.c.l.b16 %v35
  %v218 = vunpack.c.h.b16 %v35
  %v219 = vunpack.c.l.b16 %v36
  %v220 = vunpack.c.h.b16 %v36
  %v221 = vunpack.c.l.b16 %v37
  %v222 = vunpack.c.h.b16 %v37
  %v223 = vunpack.c.l.b16 %v38
  %v224 = vunpack.c.h.b16 %v38
  %v225 = vunpack.c.l.b16 %v39
  %v226 = vunpack.c.h.b16 %v39
  %v227 = vunpack.c.l.b16 %v40
  %v228 = vunpack.c.h.b16 %v40
  %v229 = vunpack.c.l.b16 %v41
  %v230 = vunpack.c.h.b16 %v41
  %v231 = vunpack.c.l.b16 %v42
  %v232 = vunpack.c.h.b16 %v42
  %v233 = vunpack.c.l.b16 %v43
  %v234 = vunpack.c.h.b16 %v43
  %v235 = vunpack.c.l.b16 %v44
  %v236 = vunpack.c.h.b16 %v44
  %v237 = vunpack.c.l.b16 %v45
  %v238 = vunpack.c.h.b16 %v45
  %v239 = vunpack.c.l.b16 %v46
  %v240 = vunpack.c.h.b16 %v46
  %v241 = vunpack.c.l.b16 %v47
  %v242 = vunpack.c.h.b16 %v47
  %v243 = vunpack.c.l.b16 %v48
  %v244 = vunpack.c.h.b16 %v48
  %v245 = vunpack.c.l.b16 %v49
  %v246 = vunpack.c.h.b16 %v49
  %v247 = vunpack.c.l.b16 %v50
  %v248 = vunpack.c.h.b16 %v50
  %v249 = vunpack.c.l.b16 %v51
  %v250 = vunpack.c.h.b16 %v51
  %v251 = vunpack.c.l.b16 %v52
  %v252 = vunpack.c.h.b16 %v52
  %v253 = vunpack.c.l.b16 %v53
  %v254 = vunpack.c.h.b16 %v53
  %v255 = vunpack.c.l.b16 %v54
  %v256 = vunpack.c.h.b16 %v54
  %v257 = vunpack.c.l.b16 %v55
  %v258 = vunpack.c.h.b16 %v55
  %v259 = vunpack.c.l.b16 %v56
  %v260 = vunpack.c.h.b16 %v56
  %v261 = vunpack.c.l.b16 %v57
  %v262 = vunpack.c.h.b16 %v57
  %v263 = vunpack.c.l.b16 %v58
  %v264 = vunpack.c.h.b16 %v58
  %v265 = vunpack.c.l.b16 %v59
  %v266 = vunpack.c.h.b16 %v59
  %v267 = vunpack.c.l.b16 %v60
  %v268 = vunpack.c.h.b16 %v60
  %v269 = vunpack.c.l.b16 %v61
  %v270 = vunpack.c.h.b16 %v61
  %v271 = vunpack.c.l.b16 %v62
  %v272 = vunpack.c.h.b16 %v62
  %v273 = vunpack.c.l.b16 %v63
  %v274 = vunpack.c.h.b16 %v63
  %v275 = vunpack.c.l.b16 %v64
  %v276 = vunpack.c.h.b16 %v64
  %v277 = vunpack.c.l.b16 %v65
  %v278 = vunpack.c.h.b16 %v65
  %v279 = vunpack.c.l.b16 %v66
  %v280 = vunpack.c.h.b16 %v66
  %v281 = vunpack.c.l.b16 %v67
  %v282 = vunpack.c.h.b16 %v67
  %v283 = vunpack.c.l.b16 %v68
  %v284 = vunpack.c.h.b16 %v68
  %v285 = vunpack.c.l.b16 %v69
  %v286 = vunpack.c.h.b16 %v69
  %v287 = vunpack.c.l.b16 %v70
  %v288 = vunpack.c.h.b16 %v70
  %v289 = vunpack.c.l.b16 %v71
  %v290 = vunpack.c.h.b16 %v71
  %v291 = vunpack.c.l.b16 %v72
  %v292 = vunpack.c.h.b16 %v72
  %v293 = vunpack.c.l.b16 %v73
  %v294 = vunpack.c.h.b16 %v73
  %v295 = vunpack.c.l.b16 %v74
  %v296 = vunpack.c.h.b16 %v74
  %v297 = vunpack.c.l.b16 %v75
  %v298 = vunpack.c.h.b16 %v75
  %v299 = vunpack.c.l.b16 %v76
  %v300 = vunpack.c.h.b16 %v76
  %v301 = vpack.c.b16 %v175, %v173
  %v302 = vpack.c.b16 %v176, %v174
  %v303 = vpack.c.b16 %v179, %v177
  %v304 = vpack.c.b16 %v180, %v178
  %v305 = vpack.c.b16 %v183, %v181
  %v306 = vpack.c.b16 %v184, %v182
  %v307 = vpack.c.b16 %v187, %v185
  %v308 = vpack.c.b16 %v188, %v186
  %v309 = vpack.c.b16 %v191, %v189
  %v310 = vpack.c.b16 %v192, %v190
  %v311 = vpack.c.b16 %v195, %v193
  %v312 = vpack.c.b16 %v196, %v194
  %v313 = vpack.c.b16 %v199, %v197
  %v314 = vpack.c.b16 %v200, %v198
  %v315 = vpack.c.b16 %v203, %v201
  %v316 = vpack.c.b16 %v204, %v202
  %v317 = vpack.c.b16 %v207, %v205
  %v318 = vpack.c.b16 %v208, %v206
  %v319 = vpack.c.b16 %v211, %v209
  %v320 = vpack.c.b16 %v212, %v210
  %v321 = vpack.c.b16 %v215, %v213
  %v322 = vpack.c.b16 %v216, %v214
  %v323 = vpack.c.b16 %v219, %v217
  %v324 = vpack.c.b16 %v220, %v218
  %v325 = vpack.c.b16 %v223, %v221
  %v326 = vpack.c.b16 %v224, %v222
  %v327 = vpack.c.b16 %v227, %v225
  %v328 = vpack.c.b16 %v228, %v226
  %v329 = vpack.c.b16 %v231, %v229
  %v330 = vpack.c.b16 %v232, %v230
  %v331 = vpack.c.b16 %v235, %v233
  %v332 = vpack.c.b16 %v236, %v234
  %v333 = vpack.c.b16 %v239, %v237
  %v334 = vpack.c.b16 %v240, %v238
  %v335 = vpack.c.b16 %v243, %v241
  %v336 = vpack.c.b16 %v244, %v242
  %v337 = vpack.c.b16 %v247, %v245
  %v338 = vpack.c.b16 %v248, %v246
  %v339 = vpack.c.b16 %v251, %v249
  %v340 = vpack.c.b16 %v252, %v250
  %v341 = vpack.c.b16 %v255, %v253
  %v342 = vpack.c.b16 %v256, %v254
  %v343 = vpack.c.b16 %v259, %v257
  %v344 = vpack.c.b16 %v260, %v258
  %v345 = vpack.c.b16 %v263, %v261
  %v346 = vpack.c.b16 %v264, %v262
  %v347 = vpack.c.b16 %v267, %v265
  %v348 = vpack.c.b16 %v268, %v266
  %v349 = vpack.c.b16 %v271, %v269
  %v350 = vpack.c.b16 %v272, %v270
  %v351 = vpack.c.b16 %v275, %v273
  %v352 = vpack.c.b16 %v276, %v274
  %v353 = vpack.c.b16 %v279, %v277
  %v354 = vpack.c.b16 %v280, %v278
  %v355 = vpack.c.b16 %v283, %v281
  %v356 = vpack.c.b16 %v284, %v282
  %v357 = vpack.c.b16 %v287, %v285
  %v358 = vpack.c.b16 %v288, %v286
  %v359 = vpack.c.b16 %v291, %v289
  %v360 = vpack.c.b16 %v292, %v290
  %v361 = vpack.c.b16 %v295, %v293
  %v362 = vpack.c.b16 %v296, %v294
  %v363 = vpack.c.b16 %v299, %v297
  %v364 = vpack.c.b16 %v300, %v298
  %v461 = vunpack.c.l.b16 %v77
  %v462 = vunpack.c.l.b16 %v78
  %v463 = vunpack.c.l.b16 %v79
  %v464 = vunpack.c.l.b16 %v80
  %v465 = vunpack.c.l.b16 %v81
  %v466 = vunpack.c.l.b16 %v82
  %v467 = vunpack.c.l.b16 %v83
  %v468 = vunpack.c.l.b16 %v84
  %v469 = vunpack.c.l.b16 %v85
  %v470 = vunpack.c.l.b16 %v86
  %v471 = vunpack.c.l.b16 %v87
  %v472 = vunpack.c.l.b16 %v88
  %v473 = vunpack.c.l.b16 %v89
  %v474 = vunpack.c.l.b16 %v90
  %v475 = vunpack.c.l.b16 %v91
  %v476 = vunpack.c.l.b16 %v92
  %v477 = vunpack.c.l.b16 %v93
  %v478 = vunpack.c.l.b16 %v94
  %v479 = vunpack.c.l.b16 %v95
  %v480 = vunpack.c.l.b16 %v96
  %v481 = vunpack.c.l.b16 %v97
  %v482 = vunpack.c.l.b16 %v98
  %v483 = vunpack.c.l.b16 %v99
  %v484 = vunpack.c.l.b16 %v100
  %v485 = vunpack.c.l.b16 %v101
  %v486 = vunpack.c.l.b16 %v102
  %v487 = vunpack.c.l.b16 %v103
  %v488 = vunpack.c.l.b16 %v104
  %v489 = vunpack.c.l.b16 %v105
  %v490 = vunpack.c.l.b16 %v106
  %v491 = vunpack.c.l.b16 %v107
  %v492 = vunpack.c.l.b16 %v108
  %v493 = vpack.c.b16 %v462, %v461
  %v494 = vpack.c.b16 %v464, %v463
  %v495 = vpack.c.b16 %v466, %v465
  %v496 = vpack.c.b16 %v468, %v467
  %v497 = vpack.c.b16 %v470, %v469
  %v498 = vpack.c.b16 %v472, %v471
  %v499 = vpack.c.b16 %v474, %v473
  %v500 = vpack.c.b16 %v476, %v475
  %v501 = vpack.c.b16 %v478, %v477
  %v502 = vpack.c.b16 %v480, %v479
  %v503 = vpack.c.b16 %v482, %v481
  %v504 = vpack.c.b16 %v484, %v483
  %v505 = vpack.c.b16 %v486, %v485
  %v506 = vpack.c.b16 %v488, %v487
  %v507 = vpack.c.b16 %v490, %v489
  %v508 = vpack.c.b16 %v492, %v491
  %525 = vmatpush.bf16.msra.mxu0 %v500
  %526 = vmatpush.bf16.msra.mxu0 %v499
  %527 = vmatpush.bf16.msra.mxu0 %v498
  %528 = vmatpush.bf16.msra.mxu0 %v497
  %529 = vmatpush.bf16.msra.mxu0 %v496
  %530 = vmatpush.bf16.msra.mxu0 %v495
  %531 = vmatpush.bf16.msra.mxu0 %v494
  %532 = vmatpush.bf16.msra.mxu0 %v493
  %533 = vmatmul.bf16.gmra.mxu0 %v301
  %v534 = vpop.f32.mrf.mxu0
  %v535 = vadd.f32 0.0, %v534
  %v536 = vpop.f32.mrf.mxu0
  %v537 = vadd.f32 0.0, %v536
  %538 = vmatmul.bf16.gmra.mxu0 %v303
  %v539 = vpop.f32.mrf.mxu0
  %v540 = vadd.f32 0.0, %v539
  %v541 = vpop.f32.mrf.mxu0
  %v542 = vadd.f32 0.0, %v541
  %543 = vmatmul.bf16.gmra.mxu0 %v305
  %v544 = vpop.f32.mrf.mxu0
  %v545 = vadd.f32 0.0, %v544
  %v546 = vpop.f32.mrf.mxu0
  %v547 = vadd.f32 0.0, %v546
  %548 = vmatmul.bf16.gmra.mxu0 %v307
  %v549 = vpop.f32.mrf.mxu0
  %v550 = vadd.f32 0.0, %v549
  %v551 = vpop.f32.mrf.mxu0
  %v552 = vadd.f32 0.0, %v551
  %553 = vmatmul.bf16.gmra.mxu0 %v309
  %v554 = vpop.f32.mrf.mxu0
  %v555 = vadd.f32 0.0, %v554
  %v556 = vpop.f32.mrf.mxu0
  %v557 = vadd.f32 0.0, %v556
  %558 = vmatmul.bf16.gmra.mxu0 %v311
  %v559 = vpop.f32.mrf.mxu0
  %v560 = vadd.f32 0.0, %v559
  %v561 = vpop.f32.mrf.mxu0
  %v562 = vadd.f32 0.0, %v561
  %563 = vmatmul.bf16.gmra.mxu0 %v313
  %v564 = vpop.f32.mrf.mxu0
  %v565 = vadd.f32 0.0, %v564
  %v566 = vpop.f32.mrf.mxu0
  %v567 = vadd.f32 0.0, %v566
  %568 = vmatmul.bf16.gmra.mxu0 %v315
  %v569 = vpop.f32.mrf.mxu0
  %v570 = vadd.f32 0.0, %v569
  %v571 = vpop.f32.mrf.mxu0
  %v572 = vadd.f32 0.0, %v571
  %573 = vmatmul.bf16.gmra.mxu0 %v317
  %v574 = vpop.f32.mrf.mxu0
  %v575 = vadd.f32 0.0, %v574
  %v576 = vpop.f32.mrf.mxu0
  %v577 = vadd.f32 0.0, %v576
  %578 = vmatmul.bf16.gmra.mxu0 %v319
  %v579 = vpop.f32.mrf.mxu0
  %v580 = vadd.f32 0.0, %v579
  %v581 = vpop.f32.mrf.mxu0
  %v582 = vadd.f32 0.0, %v581
  %583 = vmatmul.bf16.gmra.mxu0 %v321
  %v584 = vpop.f32.mrf.mxu0
  %v585 = vadd.f32 0.0, %v584
  %v586 = vpop.f32.mrf.mxu0
  %v587 = vadd.f32 0.0, %v586
  %588 = vmatmul.bf16.gmra.mxu0 %v323
  %v589 = vpop.f32.mrf.mxu0
  %v590 = vadd.f32 0.0, %v589
  %v591 = vpop.f32.mrf.mxu0
  %v592 = vadd.f32 0.0, %v591
  %593 = vmatmul.bf16.gmra.mxu0 %v325
  %v594 = vpop.f32.mrf.mxu0
  %v595 = vadd.f32 0.0, %v594
  %v596 = vpop.f32.mrf.mxu0
  %v597 = vadd.f32 0.0, %v596
  %598 = vmatmul.bf16.gmra.mxu0 %v327
  %v599 = vpop.f32.mrf.mxu0
  %v600 = vadd.f32 0.0, %v599
  %v601 = vpop.f32.mrf.mxu0
  %v602 = vadd.f32 0.0, %v601
  %603 = vmatmul.bf16.gmra.mxu0 %v329
  %v604 = vpop.f32.mrf.mxu0
  %v605 = vadd.f32 0.0, %v604
  %v606 = vpop.f32.mrf.mxu0
  %v607 = vadd.f32 0.0, %v606
  %608 = vmatmul.bf16.gmra.mxu0 %v331
  %v609 = vpop.f32.mrf.mxu0
  %v610 = vadd.f32 0.0, %v609
  %v611 = vpop.f32.mrf.mxu0
  %v612 = vadd.f32 0.0, %v611
  %613 = vmatmul.bf16.gmra.mxu0 %v333
  %v614 = vpop.f32.mrf.mxu0
  %v615 = vadd.f32 0.0, %v614
  %v616 = vpop.f32.mrf.mxu0
  %v617 = vadd.f32 0.0, %v616
  %618 = vmatmul.bf16.gmra.mxu0 %v335
  %v619 = vpop.f32.mrf.mxu0
  %v620 = vadd.f32 0.0, %v619
  %v621 = vpop.f32.mrf.mxu0
  %v622 = vadd.f32 0.0, %v621
  %623 = vmatmul.bf16.gmra.mxu0 %v337
  %v624 = vpop.f32.mrf.mxu0
  %v625 = vadd.f32 0.0, %v624
  %v626 = vpop.f32.mrf.mxu0
  %v627 = vadd.f32 0.0, %v626
  %628 = vmatmul.bf16.gmra.mxu0 %v339
  %v629 = vpop.f32.mrf.mxu0
  %v630 = vadd.f32 0.0, %v629
  %v631 = vpop.f32.mrf.mxu0
  %v632 = vadd.f32 0.0, %v631
  %633 = vmatmul.bf16.gmra.mxu0 %v341
  %v634 = vpop.f32.mrf.mxu0
  %v635 = vadd.f32 0.0, %v634
  %v636 = vpop.f32.mrf.mxu0
  %v637 = vadd.f32 0.0, %v636
  %638 = vmatmul.bf16.gmra.mxu0 %v343
  %v639 = vpop.f32.mrf.mxu0
  %v640 = vadd.f32 0.0, %v639
  %v641 = vpop.f32.mrf.mxu0
  %v642 = vadd.f32 0.0, %v641
  %643 = vmatmul.bf16.gmra.mxu0 %v345
  %v644 = vpop.f32.mrf.mxu0
  %v645 = vadd.f32 0.0, %v644
  %v646 = vpop.f32.mrf.mxu0
  %v647 = vadd.f32 0.0, %v646
  %648 = vmatmul.bf16.gmra.mxu0 %v347
  %v649 = vpop.f32.mrf.mxu0
  %v650 = vadd.f32 0.0, %v649
  %v651 = vpop.f32.mrf.mxu0
  %v652 = vadd.f32 0.0, %v651
  %653 = vmatmul.bf16.gmra.mxu0 %v349
  %v654 = vpop.f32.mrf.mxu0
  %v655 = vadd.f32 0.0, %v654
  %v656 = vpop.f32.mrf.mxu0
  %v657 = vadd.f32 0.0, %v656
  %658 = vmatmul.bf16.gmra.mxu0 %v351
  %v659 = vpop.f32.mrf.mxu0
  %v660 = vadd.f32 0.0, %v659
  %v661 = vpop.f32.mrf.mxu0
  %v662 = vadd.f32 0.0, %v661
  %663 = vmatmul.bf16.gmra.mxu0 %v353
  %v664 = vpop.f32.mrf.mxu0
  %v665 = vadd.f32 0.0, %v664
  %v666 = vpop.f32.mrf.mxu0
  %v667 = vadd.f32 0.0, %v666
  %668 = vmatmul.bf16.gmra.mxu0 %v355
  %v669 = vpop.f32.mrf.mxu0
  %v670 = vadd.f32 0.0, %v669
  %v671 = vpop.f32.mrf.mxu0
  %v672 = vadd.f32 0.0, %v671
  %673 = vmatmul.bf16.gmra.mxu0 %v357
  %v674 = vpop.f32.mrf.mxu0
  %v675 = vadd.f32 0.0, %v674
  %v676 = vpop.f32.mrf.mxu0
  %v677 = vadd.f32 0.0, %v676
  %678 = vmatmul.bf16.gmra.mxu0 %v359
  %v679 = vpop.f32.mrf.mxu0
  %v680 = vadd.f32 0.0, %v679
  %v681 = vpop.f32.mrf.mxu0
  %v682 = vadd.f32 0.0, %v681
  %683 = vmatmul.bf16.gmra.mxu0 %v361
  %v684 = vpop.f32.mrf.mxu0
  %v685 = vadd.f32 0.0, %v684
  %v686 = vpop.f32.mrf.mxu0
  %v687 = vadd.f32 0.0, %v686
  %688 = vmatmul.bf16.gmra.mxu0 %v363
  %v689 = vpop.f32.mrf.mxu0
  %v690 = vadd.f32 0.0, %v689
  %v691 = vpop.f32.mrf.mxu0
  %v692 = vadd.f32 0.0, %v691
  %693 = vdwg.mxu0
  %694 = vmatpush.bf16.msra.mxu0 %v508
  %695 = vmatpush.bf16.msra.mxu0 %v507
  %696 = vmatpush.bf16.msra.mxu0 %v506
  %697 = vmatpush.bf16.msra.mxu0 %v505
  %698 = vmatpush.bf16.msra.mxu0 %v504
  %699 = vmatpush.bf16.msra.mxu0 %v503
  %700 = vmatpush.bf16.msra.mxu0 %v502
  %701 = vmatpush.bf16.msra.mxu0 %v501
  %702 = vmatmul.bf16.gmra.mxu0 %v302
  %v703 = vpop.f32.mrf.mxu0
  %v704 = vadd.f32 %v535, %v703
  %v705 = vpop.f32.mrf.mxu0
  %v706 = vadd.f32 %v537, %v705
  %707 = vmatmul.bf16.gmra.mxu0 %v304
  %v708 = vpop.f32.mrf.mxu0
  %v709 = vadd.f32 %v540, %v708
  %v710 = vpop.f32.mrf.mxu0
  %v711 = vadd.f32 %v542, %v710
  %712 = vmatmul.bf16.gmra.mxu0 %v306
  %v713 = vpop.f32.mrf.mxu0
  %v714 = vadd.f32 %v545, %v713
  %v715 = vpop.f32.mrf.mxu0
  %v716 = vadd.f32 %v547, %v715
  %717 = vmatmul.bf16.gmra.mxu0 %v308
  %v718 = vpop.f32.mrf.mxu0
  %v719 = vadd.f32 %v550, %v718
  %v720 = vpop.f32.mrf.mxu0
  %v721 = vadd.f32 %v552, %v720
  %722 = vmatmul.bf16.gmra.mxu0 %v310
  %v723 = vpop.f32.mrf.mxu0
  %v724 = vadd.f32 %v555, %v723
  %v725 = vpop.f32.mrf.mxu0
  %v726 = vadd.f32 %v557, %v725
  %727 = vmatmul.bf16.gmra.mxu0 %v312
  %v728 = vpop.f32.mrf.mxu0
  %v729 = vadd.f32 %v560, %v728
  %v730 = vpop.f32.mrf.mxu0
  %v731 = vadd.f32 %v562, %v730
  %732 = vmatmul.bf16.gmra.mxu0 %v314
  %v733 = vpop.f32.mrf.mxu0
  %v734 = vadd.f32 %v565, %v733
  %v735 = vpop.f32.mrf.mxu0
  %v736 = vadd.f32 %v567, %v735
  %737 = vmatmul.bf16.gmra.mxu0 %v316
  %v738 = vpop.f32.mrf.mxu0
  %v739 = vadd.f32 %v570, %v738
  %v740 = vpop.f32.mrf.mxu0
  %v741 = vadd.f32 %v572, %v740
  %742 = vmatmul.bf16.gmra.mxu0 %v318
  %v743 = vpop.f32.mrf.mxu0
  %v744 = vadd.f32 %v575, %v743
  %v745 = vpop.f32.mrf.mxu0
  %v746 = vadd.f32 %v577, %v745
  %747 = vmatmul.bf16.gmra.mxu0 %v320
  %v748 = vpop.f32.mrf.mxu0
  %v749 = vadd.f32 %v580, %v748
  %v750 = vpop.f32.mrf.mxu0
  %v751 = vadd.f32 %v582, %v750
  %752 = vmatmul.bf16.gmra.mxu0 %v322
  %v753 = vpop.f32.mrf.mxu0
  %v754 = vadd.f32 %v585, %v753
  %v755 = vpop.f32.mrf.mxu0
  %v756 = vadd.f32 %v587, %v755
  %757 = vmatmul.bf16.gmra.mxu0 %v324
  %v758 = vpop.f32.mrf.mxu0
  %v759 = vadd.f32 %v590, %v758
  %v760 = vpop.f32.mrf.mxu0
  %v761 = vadd.f32 %v592, %v760
  %762 = vmatmul.bf16.gmra.mxu0 %v326
  %v763 = vpop.f32.mrf.mxu0
  %v764 = vadd.f32 %v595, %v763
  %v765 = vpop.f32.mrf.mxu0
  %v766 = vadd.f32 %v597, %v765
  %767 = vmatmul.bf16.gmra.mxu0 %v328
  %v768 = vpop.f32.mrf.mxu0
  %v769 = vadd.f32 %v600, %v768
  %v770 = vpop.f32.mrf.mxu0
  %v771 = vadd.f32 %v602, %v770
  %772 = vmatmul.bf16.gmra.mxu0 %v330
  %v773 = vpop.f32.mrf.mxu0
  %v774 = vadd.f32 %v605, %v773
  %v775 = vpop.f32.mrf.mxu0
  %v776 = vadd.f32 %v607, %v775
  %777 = vmatmul.bf16.gmra.mxu0 %v332
  %v778 = vpop.f32.mrf.mxu0
  %v779 = vadd.f32 %v610, %v778
  %v780 = vpop.f32.mrf.mxu0
  %v781 = vadd.f32 %v612, %v780
  %782 = vmatmul.bf16.gmra.mxu0 %v334
  %v783 = vpop.f32.mrf.mxu0
  %v784 = vadd.f32 %v615, %v783
  %v785 = vpop.f32.mrf.mxu0
  %v786 = vadd.f32 %v617, %v785
  %787 = vmatmul.bf16.gmra.mxu0 %v336
  %v788 = vpop.f32.mrf.mxu0
  %v789 = vadd.f32 %v620, %v788
  %v790 = vpop.f32.mrf.mxu0
  %v791 = vadd.f32 %v622, %v790
  %792 = vmatmul.bf16.gmra.mxu0 %v338
  %v793 = vpop.f32.mrf.mxu0
  %v794 = vadd.f32 %v625, %v793
  %v795 = vpop.f32.mrf.mxu0
  %v796 = vadd.f32 %v627, %v795
  %797 = vmatmul.bf16.gmra.mxu0 %v340
  %v798 = vpop.f32.mrf.mxu0
  %v799 = vadd.f32 %v630, %v798
  %v800 = vpop.f32.mrf.mxu0
  %v801 = vadd.f32 %v632, %v800
  %802 = vmatmul.bf16.gmra.mxu0 %v342
  %v803 = vpop.f32.mrf.mxu0
  %v804 = vadd.f32 %v635, %v803
  %v805 = vpop.f32.mrf.mxu0
  %v806 = vadd.f32 %v637, %v805
  %807 = vmatmul.bf16.gmra.mxu0 %v344
  %v808 = vpop.f32.mrf.mxu0
  %v809 = vadd.f32 %v640, %v808
  %v810 = vpop.f32.mrf.mxu0
  %v811 = vadd.f32 %v642, %v810
  %812 = vmatmul.bf16.gmra.mxu0 %v346
  %v813 = vpop.f32.mrf.mxu0
  %v814 = vadd.f32 %v645, %v813
  %v815 = vpop.f32.mrf.mxu0
  %v816 = vadd.f32 %v647, %v815
  %817 = vmatmul.bf16.gmra.mxu0 %v348
  %v818 = vpop.f32.mrf.mxu0
  %v819 = vadd.f32 %v650, %v818
  %v820 = vpop.f32.mrf.mxu0
  %v821 = vadd.f32 %v652, %v820
  %822 = vmatmul.bf16.gmra.mxu0 %v350
  %v823 = vpop.f32.mrf.mxu0
  %v824 = vadd.f32 %v655, %v823
  %v825 = vpop.f32.mrf.mxu0
  %v826 = vadd.f32 %v657, %v825
  %827 = vmatmul.bf16.gmra.mxu0 %v352
  %v828 = vpop.f32.mrf.mxu0
  %v829 = vadd.f32 %v660, %v828
  %v830 = vpop.f32.mrf.mxu0
  %v831 = vadd.f32 %v662, %v830
  %832 = vmatmul.bf16.gmra.mxu0 %v354
  %v833 = vpop.f32.mrf.mxu0
  %v834 = vadd.f32 %v665, %v833
  %v835 = vpop.f32.mrf.mxu0
  %v836 = vadd.f32 %v667, %v835
  %837 = vmatmul.bf16.gmra.mxu0 %v356
  %v838 = vpop.f32.mrf.mxu0
  %v839 = vadd.f32 %v670, %v838
  %v840 = vpop.f32.mrf.mxu0
  %v841 = vadd.f32 %v672, %v840
  %842 = vmatmul.bf16.gmra.mxu0 %v358
  %v843 = vpop.f32.mrf.mxu0
  %v844 = vadd.f32 %v675, %v843
  %v845 = vpop.f32.mrf.mxu0
  %v846 = vadd.f32 %v677, %v845
  %847 = vmatmul.bf16.gmra.mxu0 %v360
  %v848 = vpop.f32.mrf.mxu0
  %v849 = vadd.f32 %v680, %v848
  %v850 = vpop.f32.mrf.mxu0
  %v851 = vadd.f32 %v682, %v850
  %852 = vmatmul.bf16.gmra.mxu0 %v362
  %v853 = vpop.f32.mrf.mxu0
  %v854 = vadd.f32 %v685, %v853
  %v855 = vpop.f32.mrf.mxu0
  %v856 = vadd.f32 %v687, %v855
  %857 = vmatmul.bf16.gmra.mxu0 %v364
  %v858 = vpop.f32.mrf.mxu0
  %v859 = vadd.f32 %v690, %v858
  %v860 = vpop.f32.mrf.mxu0
  %v861 = vadd.f32 %v692, %v860
  %862 = vdwg.mxu0
  %vm863 = vcmask 261120
  %864 = vst.msk [vmem:[%s2] sm:$0xff] %vm863, %v704
  %865 = vst.msk [vmem:[%s2 + $0x8] sm:$0xff] %vm863, %v706
  %866 = vst.msk [vmem:[%s2 + $0x10] sm:$0xff] %vm863, %v709
  %867 = vst.msk [vmem:[%s2 + $0x18] sm:$0xff] %vm863, %v711
  %868 = vst.msk [vmem:[%s2 + $0x20] sm:$0xff] %vm863, %v714
  %869 = vst.msk [vmem:[%s2 + $0x28] sm:$0xff] %vm863, %v716
  %870 = vst.msk [vmem:[%s2 + $0x30] sm:$0xff] %vm863, %v719
  %871 = vst.msk [vmem:[%s2 + $0x38] sm:$0xff] %vm863, %v721
  %872 = vst.msk [vmem:[%s2 + $0x40] sm:$0xff] %vm863, %v724
  %873 = vst.msk [vmem:[%s2 + $0x48] sm:$0xff] %vm863, %v726
  %874 = vst.msk [vmem:[%s2 + $0x50] sm:$0xff] %vm863, %v729
  %875 = vst.msk [vmem:[%s2 + $0x58] sm:$0xff] %vm863, %v731
  %876 = vst.msk [vmem:[%s2 + $0x60] sm:$0xff] %vm863, %v734
  %877 = vst.msk [vmem:[%s2 + $0x68] sm:$0xff] %vm863, %v736
  %878 = vst.msk [vmem:[%s2 + $0x70] sm:$0xff] %vm863, %v739
  %879 = vst.msk [vmem:[%s2 + $0x78] sm:$0xff] %vm863, %v741
  %880 = vst.msk [vmem:[%s2 + $0x80] sm:$0xff] %vm863, %v744
  %881 = vst.msk [vmem:[%s2 + $0x88] sm:$0xff] %vm863, %v746
  %882 = vst.msk [vmem:[%s2 + $0x90] sm:$0xff] %vm863, %v749
  %883 = vst.msk [vmem:[%s2 + $0x98] sm:$0xff] %vm863, %v751
  %884 = vst.msk [vmem:[%s2 + $0xa0] sm:$0xff] %vm863, %v754
  %885 = vst.msk [vmem:[%s2 + $0xa8] sm:$0xff] %vm863, %v756
  %886 = vst.msk [vmem:[%s2 + $0xb0] sm:$0xff] %vm863, %v759
  %887 = vst.msk [vmem:[%s2 + $0xb8] sm:$0xff] %vm863, %v761
  %888 = vst.msk [vmem:[%s2 + $0xc0] sm:$0xff] %vm863, %v764
  %889 = vst.msk [vmem:[%s2 + $0xc8] sm:$0xff] %vm863, %v766
  %890 = vst.msk [vmem:[%s2 + $0xd0] sm:$0xff] %vm863, %v769
  %891 = vst.msk [vmem:[%s2 + $0xd8] sm:$0xff] %vm863, %v771
  %892 = vst.msk [vmem:[%s2 + $0xe0] sm:$0xff] %vm863, %v774
  %893 = vst.msk [vmem:[%s2 + $0xe8] sm:$0xff] %vm863, %v776
  %894 = vst.msk [vmem:[%s2 + $0xf0] sm:$0xff] %vm863, %v779
  %895 = vst.msk [vmem:[%s2 + $0xf8] sm:$0xff] %vm863, %v781
  %896 = vst.msk [vmem:[%s2 + $0x100] sm:$0xff] %vm863, %v784
  %897 = vst.msk [vmem:[%s2 + $0x108] sm:$0xff] %vm863, %v786
  %898 = vst.msk [vmem:[%s2 + $0x110] sm:$0xff] %vm863, %v789
  %899 = vst.msk [vmem:[%s2 + $0x118] sm:$0xff] %vm863, %v791
  %900 = vst.msk [vmem:[%s2 + $0x120] sm:$0xff] %vm863, %v794
  %901 = vst.msk [vmem:[%s2 + $0x128] sm:$0xff] %vm863, %v796
  %902 = vst.msk [vmem:[%s2 + $0x130] sm:$0xff] %vm863, %v799
  %903 = vst.msk [vmem:[%s2 + $0x138] sm:$0xff] %vm863, %v801
  %904 = vst.msk [vmem:[%s2 + $0x140] sm:$0xff] %vm863, %v804
  %905 = vst.msk [vmem:[%s2 + $0x148] sm:$0xff] %vm863, %v806
  %906 = vst.msk [vmem:[%s2 + $0x150] sm:$0xff] %vm863, %v809
  %907 = vst.msk [vmem:[%s2 + $0x158] sm:$0xff] %vm863, %v811
  %908 = vst.msk [vmem:[%s2 + $0x160] sm:$0xff] %vm863, %v814
  %909 = vst.msk [vmem:[%s2 + $0x168] sm:$0xff] %vm863, %v816
  %910 = vst.msk [vmem:[%s2 + $0x170] sm:$0xff] %vm863, %v819
  %911 = vst.msk [vmem:[%s2 + $0x178] sm:$0xff] %vm863, %v821
  %912 = vst.msk [vmem:[%s2 + $0x180] sm:$0xff] %vm863, %v824
  %913 = vst.msk [vmem:[%s2 + $0x188] sm:$0xff] %vm863, %v826
  %914 = vst.msk [vmem:[%s2 + $0x190] sm:$0xff] %vm863, %v829
  %915 = vst.msk [vmem:[%s2 + $0x198] sm:$0xff] %vm863, %v831
  %916 = vst.msk [vmem:[%s2 + $0x1a0] sm:$0xff] %vm863, %v834
  %917 = vst.msk [vmem:[%s2 + $0x1a8] sm:$0xff] %vm863, %v836
  %918 = vst.msk [vmem:[%s2 + $0x1b0] sm:$0xff] %vm863, %v839
  %919 = vst.msk [vmem:[%s2 + $0x1b8] sm:$0xff] %vm863, %v841
  %920 = vst.msk [vmem:[%s2 + $0x1c0] sm:$0xff] %vm863, %v844
  %921 = vst.msk [vmem:[%s2 + $0x1c8] sm:$0xff] %vm863, %v846
  %922 = vst.msk [vmem:[%s2 + $0x1d0] sm:$0xff] %vm863, %v849
  %923 = vst.msk [vmem:[%s2 + $0x1d8] sm:$0xff] %vm863, %v851
  %924 = vst.msk [vmem:[%s2 + $0x1e0] sm:$0xff] %vm863, %v854
  %925 = vst.msk [vmem:[%s2 + $0x1e8] sm:$0xff] %vm863, %v856
  %926 = vst.msk [vmem:[%s2 + $0x1f0] sm:$0xff] %vm863, %v859
  %927 = vst.msk [vmem:[%s2 + $0x1f8] sm:$0xff] %vm863, %v861
  %v928 = vsel %vm863, %v704, 0.0
  %v929 = vsel %vm863, %v706, 0.0
  %v930 = vadd.f32 %v928, %v929
  %v931 = vsel %vm863, %v709, 0.0
  %v932 = vadd.f32 %v930, %v931
  %v933 = vsel %vm863, %v711, 0.0
  %v934 = vadd.f32 %v932, %v933
  %v935 = vsel %vm863, %v714, 0.0
  %v936 = vadd.f32 %v934, %v935
  %v937 = vsel %vm863, %v716, 0.0
  %v938 = vadd.f32 %v936, %v937
  %v939 = vsel %vm863, %v719, 0.0
  %v940 = vadd.f32 %v938, %v939
  %v941 = vsel %vm863, %v721, 0.0
  %v942 = vadd.f32 %v940, %v941
  %v943 = vsel %vm863, %v724, 0.0
  %v944 = vadd.f32 %v942, %v943
  %v945 = vsel %vm863, %v726, 0.0
  %v946 = vadd.f32 %v944, %v945
  %v947 = vsel %vm863, %v729, 0.0
  %v948 = vadd.f32 %v946, %v947
  %v949 = vsel %vm863, %v731, 0.0
  %v950 = vadd.f32 %v948, %v949
  %v951 = vsel %vm863, %v734, 0.0
  %v952 = vadd.f32 %v950, %v951
  %v953 = vsel %vm863, %v736, 0.0
  %v954 = vadd.f32 %v952, %v953
  %v955 = vsel %vm863, %v739, 0.0
  %v956 = vadd.f32 %v954, %v955
  %v957 = vsel %vm863, %v741, 0.0
  %v958 = vadd.f32 %v956, %v957
  %v959 = vsel %vm863, %v744, 0.0
  %v960 = vadd.f32 %v958, %v959
  %v961 = vsel %vm863, %v746, 0.0
  %v962 = vadd.f32 %v960, %v961
  %v963 = vsel %vm863, %v749, 0.0
  %v964 = vadd.f32 %v962, %v963
  %v965 = vsel %vm863, %v751, 0.0
  %v966 = vadd.f32 %v964, %v965
  %v967 = vsel %vm863, %v754, 0.0
  %v968 = vadd.f32 %v966, %v967
  %v969 = vsel %vm863, %v756, 0.0
  %v970 = vadd.f32 %v968, %v969
  %v971 = vsel %vm863, %v759, 0.0
  %v972 = vadd.f32 %v970, %v971
  %v973 = vsel %vm863, %v761, 0.0
  %v974 = vadd.f32 %v972, %v973
  %v975 = vsel %vm863, %v764, 0.0
  %v976 = vadd.f32 %v974, %v975
  %v977 = vsel %vm863, %v766, 0.0
  %v978 = vadd.f32 %v976, %v977
  %v979 = vsel %vm863, %v769, 0.0
  %v980 = vadd.f32 %v978, %v979
  %v981 = vsel %vm863, %v771, 0.0
  %v982 = vadd.f32 %v980, %v981
  %v983 = vsel %vm863, %v774, 0.0
  %v984 = vadd.f32 %v982, %v983
  %v985 = vsel %vm863, %v776, 0.0
  %v986 = vadd.f32 %v984, %v985
  %v987 = vsel %vm863, %v779, 0.0
  %v988 = vadd.f32 %v986, %v987
  %v989 = vsel %vm863, %v781, 0.0
  %v990 = vadd.f32 %v988, %v989
  %v991 = vsel %vm863, %v784, 0.0
  %v992 = vadd.f32 %v990, %v991
  %v993 = vsel %vm863, %v786, 0.0
  %v994 = vadd.f32 %v992, %v993
  %v995 = vsel %vm863, %v789, 0.0
  %v996 = vadd.f32 %v994, %v995
  %v997 = vsel %vm863, %v791, 0.0
  %v998 = vadd.f32 %v996, %v997
  %v999 = vsel %vm863, %v794, 0.0
  %v1000 = vadd.f32 %v998, %v999
  %v1001 = vsel %vm863, %v796, 0.0
  %v1002 = vadd.f32 %v1000, %v1001
  %v1003 = vsel %vm863, %v799, 0.0
  %v1004 = vadd.f32 %v1002, %v1003
  %v1005 = vsel %vm863, %v801, 0.0
  %v1006 = vadd.f32 %v1004, %v1005
  %v1007 = vsel %vm863, %v804, 0.0
  %v1008 = vadd.f32 %v1006, %v1007
  %v1009 = vsel %vm863, %v806, 0.0
  %v1010 = vadd.f32 %v1008, %v1009
  %v1011 = vsel %vm863, %v809, 0.0
  %v1012 = vadd.f32 %v1010, %v1011
  %v1013 = vsel %vm863, %v811, 0.0
  %v1014 = vadd.f32 %v1012, %v1013
  %v1015 = vsel %vm863, %v814, 0.0
  %v1016 = vadd.f32 %v1014, %v1015
  %v1017 = vsel %vm863, %v816, 0.0
  %v1018 = vadd.f32 %v1016, %v1017
  %v1019 = vsel %vm863, %v819, 0.0
  %v1020 = vadd.f32 %v1018, %v1019
  %v1021 = vsel %vm863, %v821, 0.0
  %v1022 = vadd.f32 %v1020, %v1021
  %v1023 = vsel %vm863, %v824, 0.0
  %v1024 = vadd.f32 %v1022, %v1023
  %v1025 = vsel %vm863, %v826, 0.0
  %v1026 = vadd.f32 %v1024, %v1025
  %v1027 = vsel %vm863, %v829, 0.0
  %v1028 = vadd.f32 %v1026, %v1027
  %v1029 = vsel %vm863, %v831, 0.0
  %v1030 = vadd.f32 %v1028, %v1029
  %v1031 = vsel %vm863, %v834, 0.0
  %v1032 = vadd.f32 %v1030, %v1031
  %v1033 = vsel %vm863, %v836, 0.0
  %v1034 = vadd.f32 %v1032, %v1033
  %v1035 = vsel %vm863, %v839, 0.0
  %v1036 = vadd.f32 %v1034, %v1035
  %v1037 = vsel %vm863, %v841, 0.0
  %v1038 = vadd.f32 %v1036, %v1037
  %v1039 = vsel %vm863, %v844, 0.0
  %v1040 = vadd.f32 %v1038, %v1039
  %v1041 = vsel %vm863, %v846, 0.0
  %v1042 = vadd.f32 %v1040, %v1041
  %v1043 = vsel %vm863, %v849, 0.0
  %v1044 = vadd.f32 %v1042, %v1043
  %v1045 = vsel %vm863, %v851, 0.0
  %v1046 = vadd.f32 %v1044, %v1045
  %v1047 = vsel %vm863, %v854, 0.0
  %v1048 = vadd.f32 %v1046, %v1047
  %v1049 = vsel %vm863, %v856, 0.0
  %v1050 = vadd.f32 %v1048, %v1049
  %v1051 = vsel %vm863, %v859, 0.0
  %v1052 = vadd.f32 %v1050, %v1051
  %v1053 = vsel %vm863, %v861, 0.0
  %v1054 = vadd.f32 %v1052, %v1053
  %v1055 = vrot.slane %v1054, 4
  %v1056 = vadd.f32 %v1054, %v1055
  %v1057 = vrot.slane %v1056, 2
  %v1058 = vadd.f32 %v1056, %v1057
  %v1059 = vrot.slane %v1058, 1
  %v1060 = vadd.f32 %v1058, %v1059
  %v1061 = vmul.f32 %v704, %v704
  %v1062 = vmul.f32 %v706, %v706
  %v1063 = vmul.f32 %v709, %v709
  %v1064 = vmul.f32 %v711, %v711
  %v1065 = vmul.f32 %v714, %v714
  %v1066 = vmul.f32 %v716, %v716
  %v1067 = vmul.f32 %v719, %v719
  %v1068 = vmul.f32 %v721, %v721
  %v1069 = vmul.f32 %v724, %v724
  %v1070 = vmul.f32 %v726, %v726
  %v1071 = vmul.f32 %v729, %v729
  %v1072 = vmul.f32 %v731, %v731
  %v1073 = vmul.f32 %v734, %v734
  %v1074 = vmul.f32 %v736, %v736
  %v1075 = vmul.f32 %v739, %v739
  %v1076 = vmul.f32 %v741, %v741
  %v1077 = vmul.f32 %v744, %v744
  %v1078 = vmul.f32 %v746, %v746
  %v1079 = vmul.f32 %v749, %v749
  %v1080 = vmul.f32 %v751, %v751
  %v1081 = vmul.f32 %v754, %v754
  %v1082 = vmul.f32 %v756, %v756
  %v1083 = vmul.f32 %v759, %v759
  %v1084 = vmul.f32 %v761, %v761
  %v1085 = vmul.f32 %v764, %v764
  %v1086 = vmul.f32 %v766, %v766
  %v1087 = vmul.f32 %v769, %v769
  %v1088 = vmul.f32 %v771, %v771
  %v1089 = vmul.f32 %v774, %v774
  %v1090 = vmul.f32 %v776, %v776
  %v1091 = vmul.f32 %v779, %v779
  %v1092 = vmul.f32 %v781, %v781
  %v1093 = vmul.f32 %v784, %v784
  %v1094 = vmul.f32 %v786, %v786
  %v1095 = vmul.f32 %v789, %v789
  %v1096 = vmul.f32 %v791, %v791
  %v1097 = vmul.f32 %v794, %v794
  %v1098 = vmul.f32 %v796, %v796
  %v1099 = vmul.f32 %v799, %v799
  %v1100 = vmul.f32 %v801, %v801
  %v1101 = vmul.f32 %v804, %v804
  %v1102 = vmul.f32 %v806, %v806
  %v1103 = vmul.f32 %v809, %v809
  %v1104 = vmul.f32 %v811, %v811
  %v1105 = vmul.f32 %v814, %v814
  %v1106 = vmul.f32 %v816, %v816
  %v1107 = vmul.f32 %v819, %v819
  %v1108 = vmul.f32 %v821, %v821
  %v1109 = vmul.f32 %v824, %v824
  %v1110 = vmul.f32 %v826, %v826
  %v1111 = vmul.f32 %v829, %v829
  %v1112 = vmul.f32 %v831, %v831
  %v1113 = vmul.f32 %v834, %v834
  %v1114 = vmul.f32 %v836, %v836
  %v1115 = vmul.f32 %v839, %v839
  %v1116 = vmul.f32 %v841, %v841
  %v1117 = vmul.f32 %v844, %v844
  %v1118 = vmul.f32 %v846, %v846
  %v1119 = vmul.f32 %v849, %v849
  %v1120 = vmul.f32 %v851, %v851
  %v1121 = vmul.f32 %v854, %v854
  %v1122 = vmul.f32 %v856, %v856
  %v1123 = vmul.f32 %v859, %v859
  %v1124 = vmul.f32 %v861, %v861
  %v1125 = vsel %vm863, %v1061, 0.0
  %v1126 = vsel %vm863, %v1062, 0.0
  %v1127 = vadd.f32 %v1125, %v1126
  %v1128 = vsel %vm863, %v1063, 0.0
  %v1129 = vadd.f32 %v1127, %v1128
  %v1130 = vsel %vm863, %v1064, 0.0
  %v1131 = vadd.f32 %v1129, %v1130
  %v1132 = vsel %vm863, %v1065, 0.0
  %v1133 = vadd.f32 %v1131, %v1132
  %v1134 = vsel %vm863, %v1066, 0.0
  %v1135 = vadd.f32 %v1133, %v1134
  %v1136 = vsel %vm863, %v1067, 0.0
  %v1137 = vadd.f32 %v1135, %v1136
  %v1138 = vsel %vm863, %v1068, 0.0
  %v1139 = vadd.f32 %v1137, %v1138
  %v1140 = vsel %vm863, %v1069, 0.0
  %v1141 = vadd.f32 %v1139, %v1140
  %v1142 = vsel %vm863, %v1070, 0.0
  %v1143 = vadd.f32 %v1141, %v1142
  %v1144 = vsel %vm863, %v1071, 0.0
  %v1145 = vadd.f32 %v1143, %v1144
  %v1146 = vsel %vm863, %v1072, 0.0
  %v1147 = vadd.f32 %v1145, %v1146
  %v1148 = vsel %vm863, %v1073, 0.0
  %v1149 = vadd.f32 %v1147, %v1148
  %v1150 = vsel %vm863, %v1074, 0.0
  %v1151 = vadd.f32 %v1149, %v1150
  %v1152 = vsel %vm863, %v1075, 0.0
  %v1153 = vadd.f32 %v1151, %v1152
  %v1154 = vsel %vm863, %v1076, 0.0
  %v1155 = vadd.f32 %v1153, %v1154
  %v1156 = vsel %vm863, %v1077, 0.0
  %v1157 = vadd.f32 %v1155, %v1156
  %v1158 = vsel %vm863, %v1078, 0.0
  %v1159 = vadd.f32 %v1157, %v1158
  %v1160 = vsel %vm863, %v1079, 0.0
  %v1161 = vadd.f32 %v1159, %v1160
  %v1162 = vsel %vm863, %v1080, 0.0
  %v1163 = vadd.f32 %v1161, %v1162
  %v1164 = vsel %vm863, %v1081, 0.0
  %v1165 = vadd.f32 %v1163, %v1164
  %v1166 = vsel %vm863, %v1082, 0.0
  %v1167 = vadd.f32 %v1165, %v1166
  %v1168 = vsel %vm863, %v1083, 0.0
  %v1169 = vadd.f32 %v1167, %v1168
  %v1170 = vsel %vm863, %v1084, 0.0
  %v1171 = vadd.f32 %v1169, %v1170
  %v1172 = vsel %vm863, %v1085, 0.0
  %v1173 = vadd.f32 %v1171, %v1172
  %v1174 = vsel %vm863, %v1086, 0.0
  %v1175 = vadd.f32 %v1173, %v1174
  %v1176 = vsel %vm863, %v1087, 0.0
  %v1177 = vadd.f32 %v1175, %v1176
  %v1178 = vsel %vm863, %v1088, 0.0
  %v1179 = vadd.f32 %v1177, %v1178
  %v1180 = vsel %vm863, %v1089, 0.0
  %v1181 = vadd.f32 %v1179, %v1180
  %v1182 = vsel %vm863, %v1090, 0.0
  %v1183 = vadd.f32 %v1181, %v1182
  %v1184 = vsel %vm863, %v1091, 0.0
  %v1185 = vadd.f32 %v1183, %v1184
  %v1186 = vsel %vm863, %v1092, 0.0
  %v1187 = vadd.f32 %v1185, %v1186
  %v1188 = vsel %vm863, %v1093, 0.0
  %v1189 = vadd.f32 %v1187, %v1188
  %v1190 = vsel %vm863, %v1094, 0.0
  %v1191 = vadd.f32 %v1189, %v1190
  %v1192 = vsel %vm863, %v1095, 0.0
  %v1193 = vadd.f32 %v1191, %v1192
  %v1194 = vsel %vm863, %v1096, 0.0
  %v1195 = vadd.f32 %v1193, %v1194
  %v1196 = vsel %vm863, %v1097, 0.0
  %v1197 = vadd.f32 %v1195, %v1196
  %v1198 = vsel %vm863, %v1098, 0.0
  %v1199 = vadd.f32 %v1197, %v1198
  %v1200 = vsel %vm863, %v1099, 0.0
  %v1201 = vadd.f32 %v1199, %v1200
  %v1202 = vsel %vm863, %v1100, 0.0
  %v1203 = vadd.f32 %v1201, %v1202
  %v1204 = vsel %vm863, %v1101, 0.0
  %v1205 = vadd.f32 %v1203, %v1204
  %v1206 = vsel %vm863, %v1102, 0.0
  %v1207 = vadd.f32 %v1205, %v1206
  %v1208 = vsel %vm863, %v1103, 0.0
  %v1209 = vadd.f32 %v1207, %v1208
  %v1210 = vsel %vm863, %v1104, 0.0
  %v1211 = vadd.f32 %v1209, %v1210
  %v1212 = vsel %vm863, %v1105, 0.0
  %v1213 = vadd.f32 %v1211, %v1212
  %v1214 = vsel %vm863, %v1106, 0.0
  %v1215 = vadd.f32 %v1213, %v1214
  %v1216 = vsel %vm863, %v1107, 0.0
  %v1217 = vadd.f32 %v1215, %v1216
  %v1218 = vsel %vm863, %v1108, 0.0
  %v1219 = vadd.f32 %v1217, %v1218
  %v1220 = vsel %vm863, %v1109, 0.0
  %v1221 = vadd.f32 %v1219, %v1220
  %v1222 = vsel %vm863, %v1110, 0.0
  %v1223 = vadd.f32 %v1221, %v1222
  %v1224 = vsel %vm863, %v1111, 0.0
  %v1225 = vadd.f32 %v1223, %v1224
  %v1226 = vsel %vm863, %v1112, 0.0
  %v1227 = vadd.f32 %v1225, %v1226
  %v1228 = vsel %vm863, %v1113, 0.0
  %v1229 = vadd.f32 %v1227, %v1228
  %v1230 = vsel %vm863, %v1114, 0.0
  %v1231 = vadd.f32 %v1229, %v1230
  %v1232 = vsel %vm863, %v1115, 0.0
  %v1233 = vadd.f32 %v1231, %v1232
  %v1234 = vsel %vm863, %v1116, 0.0
  %v1235 = vadd.f32 %v1233, %v1234
  %v1236 = vsel %vm863, %v1117, 0.0
  %v1237 = vadd.f32 %v1235, %v1236
  %v1238 = vsel %vm863, %v1118, 0.0
  %v1239 = vadd.f32 %v1237, %v1238
  %v1240 = vsel %vm863, %v1119, 0.0
  %v1241 = vadd.f32 %v1239, %v1240
  %v1242 = vsel %vm863, %v1120, 0.0
  %v1243 = vadd.f32 %v1241, %v1242
  %v1244 = vsel %vm863, %v1121, 0.0
  %v1245 = vadd.f32 %v1243, %v1244
  %v1246 = vsel %vm863, %v1122, 0.0
  %v1247 = vadd.f32 %v1245, %v1246
  %v1248 = vsel %vm863, %v1123, 0.0
  %v1249 = vadd.f32 %v1247, %v1248
  %v1250 = vsel %vm863, %v1124, 0.0
  %v1251 = vadd.f32 %v1249, %v1250
  %v1252 = vrot.slane %v1251, 4
  %v1253 = vadd.f32 %v1251, %v1252
  %v1254 = vrot.slane %v1253, 2
  %v1255 = vadd.f32 %v1253, %v1254
  %v1256 = vrot.slane %v1255, 1
  %v1257 = vadd.f32 %v1255, %v1256
  %vm1258 = vcmask 1040384
  %v1259 = vsel %vm1258, %v1060, %v1257
  %p1260 = scmp.eq.s32.totalorder 0, 0
  // Predicated region
  $region10: #{_lambda_.9} parent=0 // pred_check
    %p1261 = pneg %p1260
  $region11: #{_lambda_.9} parent=0 // pred_check_branch
    %1263 = sbr.rel (%p1261) target = $region13
  $region12: #{_lambda_.9} parent=0 // pred_region
    %vm1264 = vcmask 254976
    %1265 = vst.msk [vmem:[%s3] sm:$0x3] %vm1264, %v1259
  $region13: #{_lambda_.9} parent=0 // pred_fallthru
    _
  %p1266 = scmp.ne.s32.totalorder 0, 0
  // Predicated region
  $region14: #{_lambda_.9} parent=0 // pred_check
    %p1267 = pneg %p1266
  $region15: #{_lambda_.9} parent=0 // pred_check_branch
    %1269 = sbr.rel (%p1267) target = $region17
  $region16: #{_lambda_.9} parent=0 // pred_region
    %v1270 = vld [vmem:[%s3] sm:$0x3]
    %v1271 = vadd.f32 %v1270, %v1259
    %vm1272 = vcmask 254976
    %1273 = vst.msk [vmem:[%s3] sm:$0x3] %vm1272, %v1271
  $region17: #{_lambda_.9} parent=0 // pred_fallthru
    _
  // Predicated region
  $region18: #{_lambda_.9} parent=0 // pred_check
    _
  $region19: #{_lambda_.9} parent=0 // pred_check_branch
    %1275 = sbr.rel (0) target = $region21
  $region20: #{_lambda_.9} parent=0 // pred_region
    _
  $region21: #{_lambda_.9} parent=0 // pred_fallthru
    _
  // Predicated region
  $region22: #{_lambda_.9} parent=0 // pred_check
    _
  $region23: #{_lambda_.9} parent=0 // pred_check_branch
    %1277 = sbr.rel (0) target = $region25
  $region24: #{_lambda_.9} parent=0 // pred_region
    _
  $region25: #{_lambda_.9} parent=0 // pred_fallthru
    _
  // Predicated region
  $region26: #{_lambda_.9} parent=0 // pred_check
    _
  $region27: #{_lambda_.9} parent=0 // pred_check_branch
    %1279 = sbr.rel (0) target = $region29
  $region28: #{_lambda_.9} parent=0 // pred_region
    _
  $region29: #{_lambda_.9} parent=0 // pred_fallthru
    _
  // Predicated region
  $region30: #{_lambda_.9} parent=0 // pred_check
    _
  $region31: #{_lambda_.9} parent=0 // pred_check_branch
    %1281 = sbr.rel (0) target = $region33
  $region32: #{_lambda_.9} parent=0 // pred_region
    _
  $region33: #{_lambda_.9} parent=0 // pred_fallthru
    _

// kernel: _lambda_.11
$region0: #{_lambda_.11}
  #allocation0 [shape = 'u32[]', space=smem, size = 0x4, offset = 0x4, fixed_abs, tag = 'smem constant byte address 0x4 - core index']
  #allocation1 [shape = 'u32[72,128]{1,0:T(1,128)}', space=vmem, size = 0x9000, scoped, tag = 'internal scratch']
  %s0 = inlined_call_operand.vmem [shape: bf16[128,512], index: 0, kind: input, shape index: {}]
  %s1 = inlined_call_operand.vmem [shape: bf16[512,64], index: 1, kind: input, shape index: {}]
  %s2 = inlined_call_operand.vmem [shape: f32[128,64], index: 2, kind: output, shape index: {0}]
  %s3 = inlined_call_operand.vmem [shape: f32[2,64], index: 3, kind: output, shape index: {1}]
  %4 = xla_tuple %s2, %s3
  %s5 = sld [smem:[#allocation0]]
  $region34: #{_lambda_.11} parent=0
    _
  %s7 = ssub.s32 1, %s5
  %s8 = scalar_select 0, %s7, %s5
  // Predicated region
  $region2: #{_lambda_.11} parent=0 // pred_check
    _
  $region3: #{_lambda_.11} parent=0 // pred_check_branch
    %10 = sbr.rel (0) target = $region5
  $region4: #{_lambda_.11} parent=0 // pred_region
    _
  $region5: #{_lambda_.11} parent=0 // pred_fallthru
    _
  // Predicated region
  $region6: #{_lambda_.11} parent=0 // pred_check
    _
  $region7: #{_lambda_.11} parent=0 // pred_check_branch
    %12 = sbr.rel (0) target = $region9
  $region8: #{_lambda_.11} parent=0 // pred_region
    _
  $region9: #{_lambda_.11} parent=0 // pred_fallthru
    _
  %v13 = vld [vmem:[%s0] sm:$0xff]
  %v14 = vld [vmem:[%s0 + $0x8] sm:$0xff]
  %v15 = vld [vmem:[%s0 + $0x10] sm:$0xff]
  %v16 = vld [vmem:[%s0 + $0x18] sm:$0xff]
  %v17 = vld [vmem:[%s0 + $0x20] sm:$0xff]
  %v18 = vld [vmem:[%s0 + $0x28] sm:$0xff]
  %v19 = vld [vmem:[%s0 + $0x30] sm:$0xff]
  %v20 = vld [vmem:[%s0 + $0x38] sm:$0xff]
  %v21 = vld [vmem:[%s0 + $0x40] sm:$0xff]
  %v22 = vld [vmem:[%s0 + $0x48] sm:$0xff]
  %v23 = vld [vmem:[%s0 + $0x50] sm:$0xff]
  %v24 = vld [vmem:[%s0 + $0x58] sm:$0xff]
  %v25 = vld [vmem:[%s0 + $0x60] sm:$0xff]
  %v26 = vld [vmem:[%s0 + $0x68] sm:$0xff]
  %v27 = vld [vmem:[%s0 + $0x70] sm:$0xff]
  %v28 = vld [vmem:[%s0 + $0x78] sm:$0xff]
  %v29 = vld [vmem:[%s0 + $0x80] sm:$0xff]
  %v30 = vld [vmem:[%s0 + $0x88] sm:$0xff]
  %v31 = vld [vmem:[%s0 + $0x90] sm:$0xff]
  %v32 = vld [vmem:[%s0 + $0x98] sm:$0xff]
  %v33 = vld [vmem:[%s0 + $0xa0] sm:$0xff]
  %v34 = vld [vmem:[%s0 + $0xa8] sm:$0xff]
  %v35 = vld [vmem:[%s0 + $0xb0] sm:$0xff]
  %v36 = vld [vmem:[%s0 + $0xb8] sm:$0xff]
  %v37 = vld [vmem:[%s0 + $0xc0] sm:$0xff]
  %v38 = vld [vmem:[%s0 + $0xc8] sm:$0xff]
  %v39 = vld [vmem:[%s0 + $0xd0] sm:$0xff]
  %v40 = vld [vmem:[%s0 + $0xd8] sm:$0xff]
  %v41 = vld [vmem:[%s0 + $0xe0] sm:$0xff]
  %v42 = vld [vmem:[%s0 + $0xe8] sm:$0xff]
  %v43 = vld [vmem:[%s0 + $0xf0] sm:$0xff]
  %v44 = vld [vmem:[%s0 + $0xf8] sm:$0xff]
  %v45 = vld [vmem:[%s1] sm:$0xf]
  %v46 = vld [vmem:[%s1 + $0x4] sm:$0xf]
  %v47 = vld [vmem:[%s1 + $0x8] sm:$0xf]
  %v48 = vld [vmem:[%s1 + $0xc] sm:$0xf]
  %v49 = vld [vmem:[%s1 + $0x10] sm:$0xf]
  %v50 = vld [vmem:[%s1 + $0x14] sm:$0xf]
  %v51 = vld [vmem:[%s1 + $0x18] sm:$0xf]
  %v52 = vld [vmem:[%s1 + $0x1c] sm:$0xf]
  %v53 = vld [vmem:[%s1 + $0x20] sm:$0xf]
  %v54 = vld [vmem:[%s1 + $0x24] sm:$0xf]
  %v55 = vld [vmem:[%s1 + $0x28] sm:$0xf]
  %v56 = vld [vmem:[%s1 + $0x2c] sm:$0xf]
  %v57 = vld [vmem:[%s1 + $0x30] sm:$0xf]
  %v58 = vld [vmem:[%s1 + $0x34] sm:$0xf]
  %v59 = vld [vmem:[%s1 + $0x38] sm:$0xf]
  %v60 = vld [vmem:[%s1 + $0x3c] sm:$0xf]
  %v61 = vld [vmem:[%s1 + $0x40] sm:$0xf]
  %v62 = vld [vmem:[%s1 + $0x44] sm:$0xf]
  %v63 = vld [vmem:[%s1 + $0x48] sm:$0xf]
  %v64 = vld [vmem:[%s1 + $0x4c] sm:$0xf]
  %v65 = vld [vmem:[%s1 + $0x50] sm:$0xf]
  %v66 = vld [vmem:[%s1 + $0x54] sm:$0xf]
  %v67 = vld [vmem:[%s1 + $0x58] sm:$0xf]
  %v68 = vld [vmem:[%s1 + $0x5c] sm:$0xf]
  %v69 = vld [vmem:[%s1 + $0x60] sm:$0xf]
  %v70 = vld [vmem:[%s1 + $0x64] sm:$0xf]
  %v71 = vld [vmem:[%s1 + $0x68] sm:$0xf]
  %v72 = vld [vmem:[%s1 + $0x6c] sm:$0xf]
  %v73 = vld [vmem:[%s1 + $0x70] sm:$0xf]
  %v74 = vld [vmem:[%s1 + $0x74] sm:$0xf]
  %v75 = vld [vmem:[%s1 + $0x78] sm:$0xf]
  %v76 = vld [vmem:[%s1 + $0x7c] sm:$0xf]
  %v77 = vld [vmem:[%s1 + $0x80] sm:$0xf]
  %v78 = vld [vmem:[%s1 + $0x84] sm:$0xf]
  %v79 = vld [vmem:[%s1 + $0x88] sm:$0xf]
  %v80 = vld [vmem:[%s1 + $0x8c] sm:$0xf]
  %v81 = vld [vmem:[%s1 + $0x90] sm:$0xf]
  %v82 = vld [vmem:[%s1 + $0x94] sm:$0xf]
  %v83 = vld [vmem:[%s1 + $0x98] sm:$0xf]
  %v84 = vld [vmem:[%s1 + $0x9c] sm:$0xf]
  %v85 = vld [vmem:[%s1 + $0xa0] sm:$0xf]
  %v86 = vld [vmem:[%s1 + $0xa4] sm:$0xf]
  %v87 = vld [vmem:[%s1 + $0xa8] sm:$0xf]
  %v88 = vld [vmem:[%s1 + $0xac] sm:$0xf]
  %v89 = vld [vmem:[%s1 + $0xb0] sm:$0xf]
  %v90 = vld [vmem:[%s1 + $0xb4] sm:$0xf]
  %v91 = vld [vmem:[%s1 + $0xb8] sm:$0xf]
  %v92 = vld [vmem:[%s1 + $0xbc] sm:$0xf]
  %v93 = vld [vmem:[%s1 + $0xc0] sm:$0xf]
  %v94 = vld [vmem:[%s1 + $0xc4] sm:$0xf]
  %v95 = vld [vmem:[%s1 + $0xc8] sm:$0xf]
  %v96 = vld [vmem:[%s1 + $0xcc] sm:$0xf]
  %v97 = vld [vmem:[%s1 + $0xd0] sm:$0xf]
  %v98 = vld [vmem:[%s1 + $0xd4] sm:$0xf]
  %v99 = vld [vmem:[%s1 + $0xd8] sm:$0xf]
  %v100 = vld [vmem:[%s1 + $0xdc] sm:$0xf]
  %v101 = vld [vmem:[%s1 + $0xe0] sm:$0xf]
  %v102 = vld [vmem:[%s1 + $0xe4] sm:$0xf]
  %v103 = vld [vmem:[%s1 + $0xe8] sm:$0xf]
  %v104 = vld [vmem:[%s1 + $0xec] sm:$0xf]
  %v105 = vld [vmem:[%s1 + $0xf0] sm:$0xf]
  %v106 = vld [vmem:[%s1 + $0xf4] sm:$0xf]
  %v107 = vld [vmem:[%s1 + $0xf8] sm:$0xf]
  %v108 = vld [vmem:[%s1 + $0xfc] sm:$0xf]
  %v141 = vunpack.c.l.b16 %v13
  %v142 = vunpack.c.h.b16 %v13
  %v143 = vunpack.c.l.b16 %v14
  %v144 = vunpack.c.h.b16 %v14
  %v145 = vunpack.c.l.b16 %v15
  %v146 = vunpack.c.h.b16 %v15
  %v147 = vunpack.c.l.b16 %v16
  %v148 = vunpack.c.h.b16 %v16
  %v149 = vunpack.c.l.b16 %v17
  %v150 = vunpack.c.h.b16 %v17
  %v151 = vunpack.c.l.b16 %v18
  %v152 = vunpack.c.h.b16 %v18
  %v153 = vunpack.c.l.b16 %v19
  %v154 = vunpack.c.h.b16 %v19
  %v155 = vunpack.c.l.b16 %v20
  %v156 = vunpack.c.h.b16 %v20
  %v157 = vunpack.c.l.b16 %v21
  %v158 = vunpack.c.h.b16 %v21
  %v159 = vunpack.c.l.b16 %v22
  %v160 = vunpack.c.h.b16 %v22
  %v161 = vunpack.c.l.b16 %v23
  %v162 = vunpack.c.h.b16 %v23
  %v163 = vunpack.c.l.b16 %v24
  %v164 = vunpack.c.h.b16 %v24
  %v165 = vunpack.c.l.b16 %v25
  %v166 = vunpack.c.h.b16 %v25
  %v167 = vunpack.c.l.b16 %v26
  %v168 = vunpack.c.h.b16 %v26
  %v169 = vunpack.c.l.b16 %v27
  %v170 = vunpack.c.h.b16 %v27
  %v171 = vunpack.c.l.b16 %v28
  %v172 = vunpack.c.h.b16 %v28
  %v173 = vunpack.c.l.b16 %v29
  %v174 = vunpack.c.h.b16 %v29
  %v175 = vunpack.c.l.b16 %v30
  %v176 = vunpack.c.h.b16 %v30
  %v177 = vunpack.c.l.b16 %v31
  %v178 = vunpack.c.h.b16 %v31
  %v179 = vunpack.c.l.b16 %v32
  %v180 = vunpack.c.h.b16 %v32
  %v181 = vunpack.c.l.b16 %v33
  %v182 = vunpack.c.h.b16 %v33
  %v183 = vunpack.c.l.b16 %v34
  %v184 = vunpack.c.h.b16 %v34
  %v185 = vunpack.c.l.b16 %v35
  %v186 = vunpack.c.h.b16 %v35
  %v187 = vunpack.c.l.b16 %v36
  %v188 = vunpack.c.h.b16 %v36
  %v189 = vunpack.c.l.b16 %v37
  %v190 = vunpack.c.h.b16 %v37
  %v191 = vunpack.c.l.b16 %v38
  %v192 = vunpack.c.h.b16 %v38
  %v193 = vunpack.c.l.b16 %v39
  %v194 = vunpack.c.h.b16 %v39
  %v195 = vunpack.c.l.b16 %v40
  %v196 = vunpack.c.h.b16 %v40
  %v197 = vunpack.c.l.b16 %v41
  %v198 = vunpack.c.h.b16 %v41
  %v199 = vunpack.c.l.b16 %v42
  %v200 = vunpack.c.h.b16 %v42
  %v201 = vunpack.c.l.b16 %v43
  %v202 = vunpack.c.h.b16 %v43
  %v203 = vunpack.c.l.b16 %v44
  %v204 = vunpack.c.h.b16 %v44
  %v205 = vpack.c.b16 %v145, %v141
  %v206 = vpack.c.b16 %v146, %v142
  %v207 = vpack.c.b16 %v147, %v143
  %v208 = vpack.c.b16 %v148, %v144
  %v209 = vpack.c.b16 %v153, %v149
  %v210 = vpack.c.b16 %v154, %v150
  %v211 = vpack.c.b16 %v155, %v151
  %v212 = vpack.c.b16 %v156, %v152
  %v213 = vpack.c.b16 %v161, %v157
  %v214 = vpack.c.b16 %v162, %v158
  %v215 = vpack.c.b16 %v163, %v159
  %v216 = vpack.c.b16 %v164, %v160
  %v217 = vpack.c.b16 %v169, %v165
  %v218 = vpack.c.b16 %v170, %v166
  %v219 = vpack.c.b16 %v171, %v167
  %v220 = vpack.c.b16 %v172, %v168
  %v221 = vpack.c.b16 %v177, %v173
  %v222 = vpack.c.b16 %v178, %v174
  %v223 = vpack.c.b16 %v179, %v175
  %v224 = vpack.c.b16 %v180, %v176
  %v225 = vpack.c.b16 %v185, %v181
  %v226 = vpack.c.b16 %v186, %v182
  %v227 = vpack.c.b16 %v187, %v183
  %v228 = vpack.c.b16 %v188, %v184
  %v229 = vpack.c.b16 %v193, %v189
  %v230 = vpack.c.b16 %v194, %v190
  %v231 = vpack.c.b16 %v195, %v191
  %v232 = vpack.c.b16 %v196, %v192
  %v233 = vpack.c.b16 %v201, %v197
  %v234 = vpack.c.b16 %v202, %v198
  %v235 = vpack.c.b16 %v203, %v199
  %v236 = vpack.c.b16 %v204, %v200
  %v333 = vunpack.c.l.b16 %v45
  %v334 = vunpack.c.l.b16 %v46
  %v335 = vunpack.c.l.b16 %v47
  %v336 = vunpack.c.l.b16 %v48
  %v337 = vunpack.c.l.b16 %v49
  %v338 = vunpack.c.l.b16 %v50
  %v339 = vunpack.c.l.b16 %v51
  %v340 = vunpack.c.l.b16 %v52
  %v341 = vunpack.c.l.b16 %v53
  %v342 = vunpack.c.l.b16 %v54
  %v343 = vunpack.c.l.b16 %v55
  %v344 = vunpack.c.l.b16 %v56
  %v345 = vunpack.c.l.b16 %v57
  %v346 = vunpack.c.l.b16 %v58
  %v347 = vunpack.c.l.b16 %v59
  %v348 = vunpack.c.l.b16 %v60
  %v349 = vunpack.c.l.b16 %v61
  %v350 = vunpack.c.l.b16 %v62
  %v351 = vunpack.c.l.b16 %v63
  %v352 = vunpack.c.l.b16 %v64
  %v353 = vunpack.c.l.b16 %v65
  %v354 = vunpack.c.l.b16 %v66
  %v355 = vunpack.c.l.b16 %v67
  %v356 = vunpack.c.l.b16 %v68
  %v357 = vunpack.c.l.b16 %v69
  %v358 = vunpack.c.l.b16 %v70
  %v359 = vunpack.c.l.b16 %v71
  %v360 = vunpack.c.l.b16 %v72
  %v361 = vunpack.c.l.b16 %v73
  %v362 = vunpack.c.l.b16 %v74
  %v363 = vunpack.c.l.b16 %v75
  %v364 = vunpack.c.l.b16 %v76
  %v365 = vunpack.c.l.b16 %v77
  %v366 = vunpack.c.l.b16 %v78
  %v367 = vunpack.c.l.b16 %v79
  %v368 = vunpack.c.l.b16 %v80
  %v369 = vunpack.c.l.b16 %v81
  %v370 = vunpack.c.l.b16 %v82
  %v371 = vunpack.c.l.b16 %v83
  %v372 = vunpack.c.l.b16 %v84
  %v373 = vunpack.c.l.b16 %v85
  %v374 = vunpack.c.l.b16 %v86
  %v375 = vunpack.c.l.b16 %v87
  %v376 = vunpack.c.l.b16 %v88
  %v377 = vunpack.c.l.b16 %v89
  %v378 = vunpack.c.l.b16 %v90
  %v379 = vunpack.c.l.b16 %v91
  %v380 = vunpack.c.l.b16 %v92
  %v381 = vunpack.c.l.b16 %v93
  %v382 = vunpack.c.l.b16 %v94
  %v383 = vunpack.c.l.b16 %v95
  %v384 = vunpack.c.l.b16 %v96
  %v385 = vunpack.c.l.b16 %v97
  %v386 = vunpack.c.l.b16 %v98
  %v387 = vunpack.c.l.b16 %v99
  %v388 = vunpack.c.l.b16 %v100
  %v389 = vunpack.c.l.b16 %v101
  %v390 = vunpack.c.l.b16 %v102
  %v391 = vunpack.c.l.b16 %v103
  %v392 = vunpack.c.l.b16 %v104
  %v393 = vunpack.c.l.b16 %v105
  %v394 = vunpack.c.l.b16 %v106
  %v395 = vunpack.c.l.b16 %v107
  %v396 = vunpack.c.l.b16 %v108
  %v397 = vpack.c.b16 %v334, %v333
  %v398 = vpack.c.b16 %v336, %v335
  %v399 = vpack.c.b16 %v338, %v337
  %v400 = vpack.c.b16 %v340, %v339
  %v401 = vpack.c.b16 %v342, %v341
  %v402 = vpack.c.b16 %v344, %v343
  %v403 = vpack.c.b16 %v346, %v345
  %v404 = vpack.c.b16 %v348, %v347
  %v405 = vpack.c.b16 %v350, %v349
  %v406 = vpack.c.b16 %v352, %v351
  %v407 = vpack.c.b16 %v354, %v353
  %v408 = vpack.c.b16 %v356, %v355
  %v409 = vpack.c.b16 %v358, %v357
  %v410 = vpack.c.b16 %v360, %v359
  %v411 = vpack.c.b16 %v362, %v361
  %v412 = vpack.c.b16 %v364, %v363
  %v413 = vpack.c.b16 %v366, %v365
  %v414 = vpack.c.b16 %v368, %v367
  %v415 = vpack.c.b16 %v370, %v369
  %v416 = vpack.c.b16 %v372, %v371
  %v417 = vpack.c.b16 %v374, %v373
  %v418 = vpack.c.b16 %v376, %v375
  %v419 = vpack.c.b16 %v378, %v377
  %v420 = vpack.c.b16 %v380, %v379
  %v421 = vpack.c.b16 %v382, %v381
  %v422 = vpack.c.b16 %v384, %v383
  %v423 = vpack.c.b16 %v386, %v385
  %v424 = vpack.c.b16 %v388, %v387
  %v425 = vpack.c.b16 %v390, %v389
  %v426 = vpack.c.b16 %v392, %v391
  %v427 = vpack.c.b16 %v394, %v393
  %v428 = vpack.c.b16 %v396, %v395
  %461 = vmatpush.bf16.msra.mxu0 %v404
  %462 = vmatpush.bf16.msra.mxu0 %v403
  %463 = vmatpush.bf16.msra.mxu0 %v402
  %464 = vmatpush.bf16.msra.mxu0 %v401
  %465 = vmatpush.bf16.msra.mxu0 %v400
  %466 = vmatpush.bf16.msra.mxu0 %v399
  %467 = vmatpush.bf16.msra.mxu0 %v398
  %468 = vmatpush.bf16.msra.mxu0 %v397
  %469 = vmatmul.bf16.gmra.mxu0 %v205
  %v470 = vpop.f32.mrf.mxu0
  %v471 = vadd.f32 0.0, %v470
  %v472 = vpop.f32.mrf.mxu0
  %v473 = vadd.f32 0.0, %v472
  %474 = vmatmul.bf16.gmra.mxu0 %v209
  %v475 = vpop.f32.mrf.mxu0
  %v476 = vadd.f32 0.0, %v475
  %v477 = vpop.f32.mrf.mxu0
  %v478 = vadd.f32 0.0, %v477
  %479 = vmatmul.bf16.gmra.mxu0 %v213
  %v480 = vpop.f32.mrf.mxu0
  %v481 = vadd.f32 0.0, %v480
  %v482 = vpop.f32.mrf.mxu0
  %v483 = vadd.f32 0.0, %v482
  %484 = vmatmul.bf16.gmra.mxu0 %v217
  %v485 = vpop.f32.mrf.mxu0
  %v486 = vadd.f32 0.0, %v485
  %v487 = vpop.f32.mrf.mxu0
  %v488 = vadd.f32 0.0, %v487
  %489 = vmatmul.bf16.gmra.mxu0 %v221
  %v490 = vpop.f32.mrf.mxu0
  %v491 = vadd.f32 0.0, %v490
  %v492 = vpop.f32.mrf.mxu0
  %v493 = vadd.f32 0.0, %v492
  %494 = vmatmul.bf16.gmra.mxu0 %v225
  %v495 = vpop.f32.mrf.mxu0
  %v496 = vadd.f32 0.0, %v495
  %v497 = vpop.f32.mrf.mxu0
  %v498 = vadd.f32 0.0, %v497
  %499 = vmatmul.bf16.gmra.mxu0 %v229
  %v500 = vpop.f32.mrf.mxu0
  %v501 = vadd.f32 0.0, %v500
  %v502 = vpop.f32.mrf.mxu0
  %v503 = vadd.f32 0.0, %v502
  %504 = vmatmul.bf16.gmra.mxu0 %v233
  %v505 = vpop.f32.mrf.mxu0
  %v506 = vadd.f32 0.0, %v505
  %v507 = vpop.f32.mrf.mxu0
  %v508 = vadd.f32 0.0, %v507
  %509 = vdwg.mxu0
  %510 = vmatpush.bf16.msra.mxu0 %v412
  %511 = vmatpush.bf16.msra.mxu0 %v411
  %512 = vmatpush.bf16.msra.mxu0 %v410
  %513 = vmatpush.bf16.msra.mxu0 %v409
  %514 = vmatpush.bf16.msra.mxu0 %v408
  %515 = vmatpush.bf16.msra.mxu0 %v407
  %516 = vmatpush.bf16.msra.mxu0 %v406
  %517 = vmatpush.bf16.msra.mxu0 %v405
  %518 = vmatmul.bf16.gmra.mxu0 %v206
  %v519 = vpop.f32.mrf.mxu0
  %v520 = vadd.f32 %v471, %v519
  %v521 = vpop.f32.mrf.mxu0
  %v522 = vadd.f32 %v473, %v521
  %523 = vmatmul.bf16.gmra.mxu0 %v210
  %v524 = vpop.f32.mrf.mxu0
  %v525 = vadd.f32 %v476, %v524
  %v526 = vpop.f32.mrf.mxu0
  %v527 = vadd.f32 %v478, %v526
  %528 = vmatmul.bf16.gmra.mxu0 %v214
  %v529 = vpop.f32.mrf.mxu0
  %v530 = vadd.f32 %v481, %v529
  %v531 = vpop.f32.mrf.mxu0
  %v532 = vadd.f32 %v483, %v531
  %533 = vmatmul.bf16.gmra.mxu0 %v218
  %v534 = vpop.f32.mrf.mxu0
  %v535 = vadd.f32 %v486, %v534
  %v536 = vpop.f32.mrf.mxu0
  %v537 = vadd.f32 %v488, %v536
  %538 = vmatmul.bf16.gmra.mxu0 %v222
  %v539 = vpop.f32.mrf.mxu0
  %v540 = vadd.f32 %v491, %v539
  %v541 = vpop.f32.mrf.mxu0
  %v542 = vadd.f32 %v493, %v541
  %543 = vmatmul.bf16.gmra.mxu0 %v226
  %v544 = vpop.f32.mrf.mxu0
  %v545 = vadd.f32 %v496, %v544
  %v546 = vpop.f32.mrf.mxu0
  %v547 = vadd.f32 %v498, %v546
  %548 = vmatmul.bf16.gmra.mxu0 %v230
  %v549 = vpop.f32.mrf.mxu0
  %v550 = vadd.f32 %v501, %v549
  %v551 = vpop.f32.mrf.mxu0
  %v552 = vadd.f32 %v503, %v551
  %553 = vmatmul.bf16.gmra.mxu0 %v234
  %v554 = vpop.f32.mrf.mxu0
  %v555 = vadd.f32 %v506, %v554
  %v556 = vpop.f32.mrf.mxu0
  %v557 = vadd.f32 %v508, %v556
  %558 = vdwg.mxu0
  %559 = vmatpush.bf16.msra.mxu0 %v420
  %560 = vmatpush.bf16.msra.mxu0 %v419
  %561 = vmatpush.bf16.msra.mxu0 %v418
  %562 = vmatpush.bf16.msra.mxu0 %v417
  %563 = vmatpush.bf16.msra.mxu0 %v416
  %564 = vmatpush.bf16.msra.mxu0 %v415
  %565 = vmatpush.bf16.msra.mxu0 %v414
  %566 = vmatpush.bf16.msra.mxu0 %v413
  %567 = vmatmul.bf16.gmra.mxu0 %v207
  %v568 = vpop.f32.mrf.mxu0
  %v569 = vadd.f32 %v520, %v568
  %v570 = vpop.f32.mrf.mxu0
  %v571 = vadd.f32 %v522, %v570
  %572 = vmatmul.bf16.gmra.mxu0 %v211
  %v573 = vpop.f32.mrf.mxu0
  %v574 = vadd.f32 %v525, %v573
  %v575 = vpop.f32.mrf.mxu0
  %v576 = vadd.f32 %v527, %v575
  %577 = vmatmul.bf16.gmra.mxu0 %v215
  %v578 = vpop.f32.mrf.mxu0
  %v579 = vadd.f32 %v530, %v578
  %v580 = vpop.f32.mrf.mxu0
  %v581 = vadd.f32 %v532, %v580
  %582 = vmatmul.bf16.gmra.mxu0 %v219
  %v583 = vpop.f32.mrf.mxu0
  %v584 = vadd.f32 %v535, %v583
  %v585 = vpop.f32.mrf.mxu0
  %v586 = vadd.f32 %v537, %v585
  %587 = vmatmul.bf16.gmra.mxu0 %v223
  %v588 = vpop.f32.mrf.mxu0
  %v589 = vadd.f32 %v540, %v588
  %v590 = vpop.f32.mrf.mxu0
  %v591 = vadd.f32 %v542, %v590
  %592 = vmatmul.bf16.gmra.mxu0 %v227
  %v593 = vpop.f32.mrf.mxu0
  %v594 = vadd.f32 %v545, %v593
  %v595 = vpop.f32.mrf.mxu0
  %v596 = vadd.f32 %v547, %v595
  %597 = vmatmul.bf16.gmra.mxu0 %v231
  %v598 = vpop.f32.mrf.mxu0
  %v599 = vadd.f32 %v550, %v598
  %v600 = vpop.f32.mrf.mxu0
  %v601 = vadd.f32 %v552, %v600
  %602 = vmatmul.bf16.gmra.mxu0 %v235
  %v603 = vpop.f32.mrf.mxu0
  %v604 = vadd.f32 %v555, %v603
  %v605 = vpop.f32.mrf.mxu0
  %v606 = vadd.f32 %v557, %v605
  %607 = vdwg.mxu0
  %608 = vmatpush.bf16.msra.mxu0 %v428
  %609 = vmatpush.bf16.msra.mxu0 %v427
  %610 = vmatpush.bf16.msra.mxu0 %v426
  %611 = vmatpush.bf16.msra.mxu0 %v425
  %612 = vmatpush.bf16.msra.mxu0 %v424
  %613 = vmatpush.bf16.msra.mxu0 %v423
  %614 = vmatpush.bf16.msra.mxu0 %v422
  %615 = vmatpush.bf16.msra.mxu0 %v421
  %616 = vmatmul.bf16.gmra.mxu0 %v208
  %v617 = vpop.f32.mrf.mxu0
  %v618 = vadd.f32 %v569, %v617
  %v619 = vpop.f32.mrf.mxu0
  %v620 = vadd.f32 %v571, %v619
  %621 = vmatmul.bf16.gmra.mxu0 %v212
  %v622 = vpop.f32.mrf.mxu0
  %v623 = vadd.f32 %v574, %v622
  %v624 = vpop.f32.mrf.mxu0
  %v625 = vadd.f32 %v576, %v624
  %626 = vmatmul.bf16.gmra.mxu0 %v216
  %v627 = vpop.f32.mrf.mxu0
  %v628 = vadd.f32 %v579, %v627
  %v629 = vpop.f32.mrf.mxu0
  %v630 = vadd.f32 %v581, %v629
  %631 = vmatmul.bf16.gmra.mxu0 %v220
  %v632 = vpop.f32.mrf.mxu0
  %v633 = vadd.f32 %v584, %v632
  %v634 = vpop.f32.mrf.mxu0
  %v635 = vadd.f32 %v586, %v634
  %636 = vmatmul.bf16.gmra.mxu0 %v224
  %v637 = vpop.f32.mrf.mxu0
  %v638 = vadd.f32 %v589, %v637
  %v639 = vpop.f32.mrf.mxu0
  %v640 = vadd.f32 %v591, %v639
  %641 = vmatmul.bf16.gmra.mxu0 %v228
  %v642 = vpop.f32.mrf.mxu0
  %v643 = vadd.f32 %v594, %v642
  %v644 = vpop.f32.mrf.mxu0
  %v645 = vadd.f32 %v596, %v644
  %646 = vmatmul.bf16.gmra.mxu0 %v232
  %v647 = vpop.f32.mrf.mxu0
  %v648 = vadd.f32 %v599, %v647
  %v649 = vpop.f32.mrf.mxu0
  %v650 = vadd.f32 %v601, %v649
  %651 = vmatmul.bf16.gmra.mxu0 %v236
  %v652 = vpop.f32.mrf.mxu0
  %v653 = vadd.f32 %v604, %v652
  %v654 = vpop.f32.mrf.mxu0
  %v655 = vadd.f32 %v606, %v654
  %656 = vdwg.mxu0
  %vm657 = vcmask 523264
  %658 = vst.msk [vmem:[%s2] sm:$0xff] %vm657, %v618
  %659 = vst.msk [vmem:[%s2 + $0x8] sm:$0xff] %vm657, %v620
  %660 = vst.msk [vmem:[%s2 + $0x10] sm:$0xff] %vm657, %v623
  %661 = vst.msk [vmem:[%s2 + $0x18] sm:$0xff] %vm657, %v625
  %662 = vst.msk [vmem:[%s2 + $0x20] sm:$0xff] %vm657, %v628
  %663 = vst.msk [vmem:[%s2 + $0x28] sm:$0xff] %vm657, %v630
  %664 = vst.msk [vmem:[%s2 + $0x30] sm:$0xff] %vm657, %v633
  %665 = vst.msk [vmem:[%s2 + $0x38] sm:$0xff] %vm657, %v635
  %666 = vst.msk [vmem:[%s2 + $0x40] sm:$0xff] %vm657, %v638
  %667 = vst.msk [vmem:[%s2 + $0x48] sm:$0xff] %vm657, %v640
  %668 = vst.msk [vmem:[%s2 + $0x50] sm:$0xff] %vm657, %v643
  %669 = vst.msk [vmem:[%s2 + $0x58] sm:$0xff] %vm657, %v645
  %670 = vst.msk [vmem:[%s2 + $0x60] sm:$0xff] %vm657, %v648
  %671 = vst.msk [vmem:[%s2 + $0x68] sm:$0xff] %vm657, %v650
  %672 = vst.msk [vmem:[%s2 + $0x70] sm:$0xff] %vm657, %v653
  %673 = vst.msk [vmem:[%s2 + $0x78] sm:$0xff] %vm657, %v655
  %v674 = vsel %vm657, %v618, 0.0
  %v675 = vsel %vm657, %v620, 0.0
  %v676 = vadd.f32 %v674, %v675
  %v677 = vsel %vm657, %v623, 0.0
  %v678 = vadd.f32 %v676, %v677
  %v679 = vsel %vm657, %v625, 0.0
  %v680 = vadd.f32 %v678, %v679
  %v681 = vsel %vm657, %v628, 0.0
  %v682 = vadd.f32 %v680, %v681
  %v683 = vsel %vm657, %v630, 0.0
  %v684 = vadd.f32 %v682, %v683
  %v685 = vsel %vm657, %v633, 0.0
  %v686 = vadd.f32 %v684, %v685
  %v687 = vsel %vm657, %v635, 0.0
  %v688 = vadd.f32 %v686, %v687
  %v689 = vsel %vm657, %v638, 0.0
  %v690 = vadd.f32 %v688, %v689
  %v691 = vsel %vm657, %v640, 0.0
  %v692 = vadd.f32 %v690, %v691
  %v693 = vsel %vm657, %v643, 0.0
  %v694 = vadd.f32 %v692, %v693
  %v695 = vsel %vm657, %v645, 0.0
  %v696 = vadd.f32 %v694, %v695
  %v697 = vsel %vm657, %v648, 0.0
  %v698 = vadd.f32 %v696, %v697
  %v699 = vsel %vm657, %v650, 0.0
  %v700 = vadd.f32 %v698, %v699
  %v701 = vsel %vm657, %v653, 0.0
  %v702 = vadd.f32 %v700, %v701
  %v703 = vsel %vm657, %v655, 0.0
  %v704 = vadd.f32 %v702, %v703
  %v705 = vrot.slane %v704, 4
  %v706 = vadd.f32 %v704, %v705
  %v707 = vrot.slane %v706, 2
  %v708 = vadd.f32 %v706, %v707
  %v709 = vrot.slane %v708, 1
  %v710 = vadd.f32 %v708, %v709
  %v711 = vmul.f32 %v618, %v618
  %v712 = vmul.f32 %v620, %v620
  %v713 = vmul.f32 %v623, %v623
  %v714 = vmul.f32 %v625, %v625
  %v715 = vmul.f32 %v628, %v628
  %v716 = vmul.f32 %v630, %v630
  %v717 = vmul.f32 %v633, %v633
  %v718 = vmul.f32 %v635, %v635
  %v719 = vmul.f32 %v638, %v638
  %v720 = vmul.f32 %v640, %v640
  %v721 = vmul.f32 %v643, %v643
  %v722 = vmul.f32 %v645, %v645
  %v723 = vmul.f32 %v648, %v648
  %v724 = vmul.f32 %v650, %v650
  %v725 = vmul.f32 %v653, %v653
  %v726 = vmul.f32 %v655, %v655
  %v727 = vsel %vm657, %v711, 0.0
  %v728 = vsel %vm657, %v712, 0.0
  %v729 = vadd.f32 %v727, %v728
  %v730 = vsel %vm657, %v713, 0.0
  %v731 = vadd.f32 %v729, %v730
  %v732 = vsel %vm657, %v714, 0.0
  %v733 = vadd.f32 %v731, %v732
  %v734 = vsel %vm657, %v715, 0.0
  %v735 = vadd.f32 %v733, %v734
  %v736 = vsel %vm657, %v716, 0.0
  %v737 = vadd.f32 %v735, %v736
  %v738 = vsel %vm657, %v717, 0.0
  %v739 = vadd.f32 %v737, %v738
  %v740 = vsel %vm657, %v718, 0.0
  %v741 = vadd.f32 %v739, %v740
  %v742 = vsel %vm657, %v719, 0.0
  %v743 = vadd.f32 %v741, %v742
  %v744 = vsel %vm657, %v720, 0.0
  %v745 = vadd.f32 %v743, %v744
  %v746 = vsel %vm657, %v721, 0.0
  %v747 = vadd.f32 %v745, %v746
  %v748 = vsel %vm657, %v722, 0.0
  %v749 = vadd.f32 %v747, %v748
  %v750 = vsel %vm657, %v723, 0.0
  %v751 = vadd.f32 %v749, %v750
  %v752 = vsel %vm657, %v724, 0.0
  %v753 = vadd.f32 %v751, %v752
  %v754 = vsel %vm657, %v725, 0.0
  %v755 = vadd.f32 %v753, %v754
  %v756 = vsel %vm657, %v726, 0.0
  %v757 = vadd.f32 %v755, %v756
  %v758 = vrot.slane %v757, 4
  %v759 = vadd.f32 %v757, %v758
  %v760 = vrot.slane %v759, 2
  %v761 = vadd.f32 %v759, %v760
  %v762 = vrot.slane %v761, 1
  %v763 = vadd.f32 %v761, %v762
  %vm764 = vcmask 1040384
  %v765 = vsel %vm764, %v710, %v763
  %p766 = scmp.eq.s32.totalorder 0, 0
  // Predicated region
  $region10: #{_lambda_.11} parent=0 // pred_check
    %p767 = pneg %p766
  $region11: #{_lambda_.11} parent=0 // pred_check_branch
    %769 = sbr.rel (%p767) target = $region13
  $region12: #{_lambda_.11} parent=0 // pred_region
    %vm770 = vcmask 517120
    %771 = vst.msk [vmem:[%s3] sm:$0x3] %vm770, %v765
  $region13: #{_lambda_.11} parent=0 // pred_fallthru
    _
  %p772 = scmp.ne.s32.totalorder 0, 0
  // Predicated region
  $region14: #{_lambda_.11} parent=0 // pred_check
    %p773 = pneg %p772
  $region15: #{_lambda_.11} parent=0 // pred_check_branch
    %775 = sbr.rel (%p773) target = $region17
  $region16: #{_lambda_.11} parent=0 // pred_region
    %v776 = vld [vmem:[%s3] sm:$0x3]
    %v777 = vadd.f32 %v776, %v765
    %vm778 = vcmask 517120
    %779 = vst.msk [vmem:[%s3] sm:$0x3] %vm778, %v777
  $region17: #{_lambda_.11} parent=0 // pred_fallthru
    _
  // Predicated region
  $region18: #{_lambda_.11} parent=0 // pred_check
    _
  $region19: #{_lambda_.11} parent=0 // pred_check_branch
    %781 = sbr.rel (0) target = $region21
  $region20: #{_lambda_.11} parent=0 // pred_region
    _
  $region21: #{_lambda_.11} parent=0 // pred_fallthru
    _
  // Predicated region
  $region22: #{_lambda_.11} parent=0 // pred_check
    _
  $region23: #{_lambda_.11} parent=0 // pred_check_branch
    %783 = sbr.rel (0) target = $region25
  $region24: #{_lambda_.11} parent=0 // pred_region
    _
  $region25: #{_lambda_.11} parent=0 // pred_fallthru
    _
  // Predicated region
  $region26: #{_lambda_.11} parent=0 // pred_check
    _
  $region27: #{_lambda_.11} parent=0 // pred_check_branch
    %785 = sbr.rel (0) target = $region29
  $region28: #{_lambda_.11} parent=0 // pred_region
    _
  $region29: #{_lambda_.11} parent=0 // pred_fallthru
    _
  // Predicated region
  $region30: #{_lambda_.11} parent=0 // pred_check
    _
  $region31: #{_lambda_.11} parent=0 // pred_check_branch
    %787 = sbr.rel (0) target = $region33
  $region32: #{_lambda_.11} parent=0 // pred_region
    _
  $region33: #{_lambda_.11} parent=0 // pred_fallthru
    _

// kernel: _lambda_.12
$region0: #{_lambda_.12}
  #allocation0 [shape = 'u32[]', space=smem, size = 0x4, offset = 0x4, fixed_abs, tag = 'smem constant byte address 0x4 - core index']
  #allocation1 [shape = 'u32[72,128]{1,0:T(1,128)}', space=vmem, size = 0x9000, scoped, tag = 'internal scratch']
  %s0 = inlined_call_operand.vmem [shape: f32[128,64], index: 0, kind: input, shape index: {}]
  %s1 = inlined_call_operand.vmem [shape: f32[1,64], index: 1, kind: input, shape index: {}]
  %s2 = inlined_call_operand.vmem [shape: f32[1,64], index: 2, kind: input, shape index: {}]
  %s3 = inlined_call_operand.vmem [shape: f32[128,64], index: 3, kind: output, shape index: {}]
  %s4 = sld [smem:[#allocation0]]
  $region22: #{_lambda_.12} parent=0
    _
  %s6 = ssub.s32 1, %s4
  %s7 = scalar_select 0, %s6, %s4
  // Predicated region
  $region2: #{_lambda_.12} parent=0 // pred_check
    _
  $region3: #{_lambda_.12} parent=0 // pred_check_branch
    %9 = sbr.rel (0) target = $region5
  $region4: #{_lambda_.12} parent=0 // pred_region
    _
  $region5: #{_lambda_.12} parent=0 // pred_fallthru
    _
  // Predicated region
  $region6: #{_lambda_.12} parent=0 // pred_check
    _
  $region7: #{_lambda_.12} parent=0 // pred_check_branch
    %11 = sbr.rel (0) target = $region9
  $region8: #{_lambda_.12} parent=0 // pred_region
    _
  $region9: #{_lambda_.12} parent=0 // pred_fallthru
    _
  // Predicated region
  $region10: #{_lambda_.12} parent=0 // pred_check
    _
  $region11: #{_lambda_.12} parent=0 // pred_check_branch
    %13 = sbr.rel (0) target = $region13
  $region12: #{_lambda_.12} parent=0 // pred_region
    _
  $region13: #{_lambda_.12} parent=0 // pred_fallthru
    _
  %v14 = vld [vmem:[%s0] sm:$0xff]
  %v15 = vld [vmem:[%s0 + $0x8] sm:$0xff]
  %v16 = vld [vmem:[%s0 + $0x10] sm:$0xff]
  %v17 = vld [vmem:[%s0 + $0x18] sm:$0xff]
  %v18 = vld [vmem:[%s0 + $0x20] sm:$0xff]
  %v19 = vld [vmem:[%s0 + $0x28] sm:$0xff]
  %v20 = vld [vmem:[%s0 + $0x30] sm:$0xff]
  %v21 = vld [vmem:[%s0 + $0x38] sm:$0xff]
  %v22 = vld [vmem:[%s0 + $0x40] sm:$0xff]
  %v23 = vld [vmem:[%s0 + $0x48] sm:$0xff]
  %v24 = vld [vmem:[%s0 + $0x50] sm:$0xff]
  %v25 = vld [vmem:[%s0 + $0x58] sm:$0xff]
  %v26 = vld [vmem:[%s0 + $0x60] sm:$0xff]
  %v27 = vld [vmem:[%s0 + $0x68] sm:$0xff]
  %v28 = vld [vmem:[%s0 + $0x70] sm:$0xff]
  %v29 = vld [vmem:[%s0 + $0x78] sm:$0xff]
  %v30 = vld [vmem:[%s1] sm:$0x1]
  %v32 = vperm.slane %v30, 0
  %v34 = vmul.f32 %v14, %v32
  %v35 = vmul.f32 %v15, %v32
  %v36 = vmul.f32 %v16, %v32
  %v37 = vmul.f32 %v17, %v32
  %v38 = vmul.f32 %v18, %v32
  %v39 = vmul.f32 %v19, %v32
  %v40 = vmul.f32 %v20, %v32
  %v41 = vmul.f32 %v21, %v32
  %v42 = vmul.f32 %v22, %v32
  %v43 = vmul.f32 %v23, %v32
  %v44 = vmul.f32 %v24, %v32
  %v45 = vmul.f32 %v25, %v32
  %v46 = vmul.f32 %v26, %v32
  %v47 = vmul.f32 %v27, %v32
  %v48 = vmul.f32 %v28, %v32
  %v49 = vmul.f32 %v29, %v32
  %v50 = vld [vmem:[%s2] sm:$0x1]
  %v52 = vperm.slane %v50, 0
  %v54 = vadd.f32 %v34, %v52
  %v55 = vadd.f32 %v35, %v52
  %v56 = vadd.f32 %v36, %v52
  %v57 = vadd.f32 %v37, %v52
  %v58 = vadd.f32 %v38, %v52
  %v59 = vadd.f32 %v39, %v52
  %v60 = vadd.f32 %v40, %v52
  %v61 = vadd.f32 %v41, %v52
  %v62 = vadd.f32 %v42, %v52
  %v63 = vadd.f32 %v43, %v52
  %v64 = vadd.f32 %v44, %v52
  %v65 = vadd.f32 %v45, %v52
  %v66 = vadd.f32 %v46, %v52
  %v67 = vadd.f32 %v47, %v52
  %v68 = vadd.f32 %v48, %v52
  %v69 = vadd.f32 %v49, %v52
  %v70 = vmul.f32 %v54, 0.2
  %v71 = vmul.f32 %v55, 0.2
  %v72 = vmul.f32 %v56, 0.2
  %v73 = vmul.f32 %v57, 0.2
  %v74 = vmul.f32 %v58, 0.2
  %v75 = vmul.f32 %v59, 0.2
  %v76 = vmul.f32 %v60, 0.2
  %v77 = vmul.f32 %v61, 0.2
  %v78 = vmul.f32 %v62, 0.2
  %v79 = vmul.f32 %v63, 0.2
  %v80 = vmul.f32 %v64, 0.2
  %v81 = vmul.f32 %v65, 0.2
  %v82 = vmul.f32 %v66, 0.2
  %v83 = vmul.f32 %v67, 0.2
  %v84 = vmul.f32 %v68, 0.2
  %v85 = vmul.f32 %v69, 0.2
  %v86 = vmax.f32 %v54, %v70
  %v87 = vmax.f32 %v55, %v71
  %v88 = vmax.f32 %v56, %v72
  %v89 = vmax.f32 %v57, %v73
  %v90 = vmax.f32 %v58, %v74
  %v91 = vmax.f32 %v59, %v75
  %v92 = vmax.f32 %v60, %v76
  %v93 = vmax.f32 %v61, %v77
  %v94 = vmax.f32 %v62, %v78
  %v95 = vmax.f32 %v63, %v79
  %v96 = vmax.f32 %v64, %v80
  %v97 = vmax.f32 %v65, %v81
  %v98 = vmax.f32 %v66, %v82
  %v99 = vmax.f32 %v67, %v83
  %v100 = vmax.f32 %v68, %v84
  %v101 = vmax.f32 %v69, %v85
  %vm102 = vcmask 523264
  %103 = vst.msk [vmem:[%s3] sm:$0xff] %vm102, %v86
  %104 = vst.msk [vmem:[%s3 + $0x8] sm:$0xff] %vm102, %v87
  %105 = vst.msk [vmem:[%s3 + $0x10] sm:$0xff] %vm102, %v88
  %106 = vst.msk [vmem:[%s3 + $0x18] sm:$0xff] %vm102, %v89
  %107 = vst.msk [vmem:[%s3 + $0x20] sm:$0xff] %vm102, %v90
  %108 = vst.msk [vmem:[%s3 + $0x28] sm:$0xff] %vm102, %v91
  %109 = vst.msk [vmem:[%s3 + $0x30] sm:$0xff] %vm102, %v92
  %110 = vst.msk [vmem:[%s3 + $0x38] sm:$0xff] %vm102, %v93
  %111 = vst.msk [vmem:[%s3 + $0x40] sm:$0xff] %vm102, %v94
  %112 = vst.msk [vmem:[%s3 + $0x48] sm:$0xff] %vm102, %v95
  %113 = vst.msk [vmem:[%s3 + $0x50] sm:$0xff] %vm102, %v96
  %114 = vst.msk [vmem:[%s3 + $0x58] sm:$0xff] %vm102, %v97
  %115 = vst.msk [vmem:[%s3 + $0x60] sm:$0xff] %vm102, %v98
  %116 = vst.msk [vmem:[%s3 + $0x68] sm:$0xff] %vm102, %v99
  %117 = vst.msk [vmem:[%s3 + $0x70] sm:$0xff] %vm102, %v100
  %118 = vst.msk [vmem:[%s3 + $0x78] sm:$0xff] %vm102, %v101
  // Predicated region
  $region14: #{_lambda_.12} parent=0 // pred_check
    _
  $region15: #{_lambda_.12} parent=0 // pred_check_branch
    %120 = sbr.rel (0) target = $region17
  $region16: #{_lambda_.12} parent=0 // pred_region
    _
  $region17: #{_lambda_.12} parent=0 // pred_fallthru
    _
  // Predicated region
  $region18: #{_lambda_.12} parent=0 // pred_check
    _
  $region19: #{_lambda_.12} parent=0 // pred_check_branch
    %122 = sbr.rel (0) target = $region21
  $region20: #{_lambda_.12} parent=0 // pred_region
    _
  $region21: #{_lambda_.12} parent=0 // pred_fallthru
    _

// kernel: _lambda_.14
$region0: #{_lambda_.14}
  #allocation0 [shape = 'u32[]', space=smem, size = 0x4, offset = 0x4, fixed_abs, tag = 'smem constant byte address 0x4 - core index']
  #allocation1 [shape = 'u32[72,128]{1,0:T(1,128)}', space=vmem, size = 0x9000, scoped, tag = 'internal scratch']
  %s0 = inlined_call_operand.vmem [shape: f32[32,128], index: 0, kind: input, shape index: {}]
  %s1 = inlined_call_operand.vmem [shape: f32[1,128], index: 1, kind: input, shape index: {}]
  %s2 = inlined_call_operand.vmem [shape: f32[1,128], index: 2, kind: input, shape index: {}]
  %s3 = inlined_call_operand.vmem [shape: f32[32,128], index: 3, kind: output, shape index: {}]
  %s4 = sld [smem:[#allocation0]]
  $region22: #{_lambda_.14} parent=0
    _
  %s6 = ssub.s32 1, %s4
  %s7 = scalar_select 0, %s6, %s4
  // Predicated region
  $region2: #{_lambda_.14} parent=0 // pred_check
    _
  $region3: #{_lambda_.14} parent=0 // pred_check_branch
    %9 = sbr.rel (0) target = $region5
  $region4: #{_lambda_.14} parent=0 // pred_region
    _
  $region5: #{_lambda_.14} parent=0 // pred_fallthru
    _
  // Predicated region
  $region6: #{_lambda_.14} parent=0 // pred_check
    _
  $region7: #{_lambda_.14} parent=0 // pred_check_branch
    %11 = sbr.rel (0) target = $region9
  $region8: #{_lambda_.14} parent=0 // pred_region
    _
  $region9: #{_lambda_.14} parent=0 // pred_fallthru
    _
  // Predicated region
  $region10: #{_lambda_.14} parent=0 // pred_check
    _
  $region11: #{_lambda_.14} parent=0 // pred_check_branch
    %13 = sbr.rel (0) target = $region13
  $region12: #{_lambda_.14} parent=0 // pred_region
    _
  $region13: #{_lambda_.14} parent=0 // pred_fallthru
    _
  %v14 = vld [vmem:[%s0] sm:$0xff]
  %v15 = vld [vmem:[%s0 + $0x8] sm:$0xff]
  %v16 = vld [vmem:[%s0 + $0x10] sm:$0xff]
  %v17 = vld [vmem:[%s0 + $0x18] sm:$0xff]
  %v18 = vld [vmem:[%s1] sm:$0x1]
  %v20 = vperm.slane %v18, 0
  %v22 = vmul.f32 %v14, %v20
  %v23 = vmul.f32 %v15, %v20
  %v24 = vmul.f32 %v16, %v20
  %v25 = vmul.f32 %v17, %v20
  %v26 = vld [vmem:[%s2] sm:$0x1]
  %v28 = vperm.slane %v26, 0
  %v30 = vadd.f32 %v22, %v28
  %v31 = vadd.f32 %v23, %v28
  %v32 = vadd.f32 %v24, %v28
  %v33 = vadd.f32 %v25, %v28
  %v34 = vmul.f32 %v30, 0.2
  %v35 = vmul.f32 %v31, 0.2
  %v36 = vmul.f32 %v32, 0.2
  %v37 = vmul.f32 %v33, 0.2
  %v38 = vmax.f32 %v30, %v34
  %v39 = vmax.f32 %v31, %v35
  %v40 = vmax.f32 %v32, %v36
  %v41 = vmax.f32 %v33, %v37
  %42 = vst [vmem:[%s3] sm:$0xff] %v38
  %43 = vst [vmem:[%s3 + $0x8] sm:$0xff] %v39
  %44 = vst [vmem:[%s3 + $0x10] sm:$0xff] %v40
  %45 = vst [vmem:[%s3 + $0x18] sm:$0xff] %v41
  // Predicated region
  $region14: #{_lambda_.14} parent=0 // pred_check
    _
  $region15: #{_lambda_.14} parent=0 // pred_check_branch
    %47 = sbr.rel (0) target = $region17
  $region16: #{_lambda_.14} parent=0 // pred_region
    _
  $region17: #{_lambda_.14} parent=0 // pred_fallthru
    _
  // Predicated region
  $region18: #{_lambda_.14} parent=0 // pred_check
    _
  $region19: #{_lambda_.14} parent=0 // pred_check_branch
    %49 = sbr.rel (0) target = $region21
  $region20: #{_lambda_.14} parent=0 // pred_region
    _
  $region21: #{_lambda_.14} parent=0 // pred_fallthru
    _

// kernel: _lambda_.13
$region0: #{_lambda_.13}
  #allocation0 [shape = 'u32[]', space=smem, size = 0x4, offset = 0x4, fixed_abs, tag = 'smem constant byte address 0x4 - core index']
  #allocation1 [shape = 'u32[72,128]{1,0:T(1,128)}', space=vmem, size = 0x9000, scoped, tag = 'internal scratch']
  %s0 = inlined_call_operand.vmem [shape: bf16[32,1024], index: 0, kind: input, shape index: {}]
  %s1 = inlined_call_operand.vmem [shape: bf16[1024,128], index: 1, kind: input, shape index: {}]
  %s2 = inlined_call_operand.vmem [shape: f32[32,128], index: 2, kind: output, shape index: {0}]
  %s3 = inlined_call_operand.vmem [shape: f32[2,128], index: 3, kind: output, shape index: {1}]
  %4 = xla_tuple %s2, %s3
  %s5 = sld [smem:[#allocation0]]
  $region34: #{_lambda_.13} parent=0
    _
  %s7 = ssub.s32 1, %s5
  %s8 = scalar_select 0, %s7, %s5
  // Predicated region
  $region2: #{_lambda_.13} parent=0 // pred_check
    _
  $region3: #{_lambda_.13} parent=0 // pred_check_branch
    %10 = sbr.rel (0) target = $region5
  $region4: #{_lambda_.13} parent=0 // pred_region
    _
  $region5: #{_lambda_.13} parent=0 // pred_fallthru
    _
  // Predicated region
  $region6: #{_lambda_.13} parent=0 // pred_check
    _
  $region7: #{_lambda_.13} parent=0 // pred_check_branch
    %12 = sbr.rel (0) target = $region9
  $region8: #{_lambda_.13} parent=0 // pred_region
    _
  $region9: #{_lambda_.13} parent=0 // pred_fallthru
    _
  %v13 = vld [vmem:[%s0] sm:$0xff]
  %v14 = vld [vmem:[%s0 + $0x8] sm:$0xff]
  %v15 = vld [vmem:[%s0 + $0x10] sm:$0xff]
  %v16 = vld [vmem:[%s0 + $0x18] sm:$0xff]
  %v17 = vld [vmem:[%s0 + $0x20] sm:$0xff]
  %v18 = vld [vmem:[%s0 + $0x28] sm:$0xff]
  %v19 = vld [vmem:[%s0 + $0x30] sm:$0xff]
  %v20 = vld [vmem:[%s0 + $0x38] sm:$0xff]
  %v21 = vld [vmem:[%s0 + $0x40] sm:$0xff]
  %v22 = vld [vmem:[%s0 + $0x48] sm:$0xff]
  %v23 = vld [vmem:[%s0 + $0x50] sm:$0xff]
  %v24 = vld [vmem:[%s0 + $0x58] sm:$0xff]
  %v25 = vld [vmem:[%s0 + $0x60] sm:$0xff]
  %v26 = vld [vmem:[%s0 + $0x68] sm:$0xff]
  %v27 = vld [vmem:[%s0 + $0x70] sm:$0xff]
  %v28 = vld [vmem:[%s0 + $0x78] sm:$0xff]
  %v29 = vld [vmem:[%s1] sm:$0xf]
  %v30 = vld [vmem:[%s1 + $0x4] sm:$0xf]
  %v31 = vld [vmem:[%s1 + $0x8] sm:$0xf]
  %v32 = vld [vmem:[%s1 + $0xc] sm:$0xf]
  %v33 = vld [vmem:[%s1 + $0x10] sm:$0xf]
  %v34 = vld [vmem:[%s1 + $0x14] sm:$0xf]
  %v35 = vld [vmem:[%s1 + $0x18] sm:$0xf]
  %v36 = vld [vmem:[%s1 + $0x1c] sm:$0xf]
  %v37 = vld [vmem:[%s1 + $0x20] sm:$0xf]
  %v38 = vld [vmem:[%s1 + $0x24] sm:$0xf]
  %v39 = vld [vmem:[%s1 + $0x28] sm:$0xf]
  %v40 = vld [vmem:[%s1 + $0x2c] sm:$0xf]
  %v41 = vld [vmem:[%s1 + $0x30] sm:$0xf]
  %v42 = vld [vmem:[%s1 + $0x34] sm:$0xf]
  %v43 = vld [vmem:[%s1 + $0x38] sm:$0xf]
  %v44 = vld [vmem:[%s1 + $0x3c] sm:$0xf]
  %v45 = vld [vmem:[%s1 + $0x40] sm:$0xf]
  %v46 = vld [vmem:[%s1 + $0x44] sm:$0xf]
  %v47 = vld [vmem:[%s1 + $0x48] sm:$0xf]
  %v48 = vld [vmem:[%s1 + $0x4c] sm:$0xf]
  %v49 = vld [vmem:[%s1 + $0x50] sm:$0xf]
  %v50 = vld [vmem:[%s1 + $0x54] sm:$0xf]
  %v51 = vld [vmem:[%s1 + $0x58] sm:$0xf]
  %v52 = vld [vmem:[%s1 + $0x5c] sm:$0xf]
  %v53 = vld [vmem:[%s1 + $0x60] sm:$0xf]
  %v54 = vld [vmem:[%s1 + $0x64] sm:$0xf]
  %v55 = vld [vmem:[%s1 + $0x68] sm:$0xf]
  %v56 = vld [vmem:[%s1 + $0x6c] sm:$0xf]
  %v57 = vld [vmem:[%s1 + $0x70] sm:$0xf]
  %v58 = vld [vmem:[%s1 + $0x74] sm:$0xf]
  %v59 = vld [vmem:[%s1 + $0x78] sm:$0xf]
  %v60 = vld [vmem:[%s1 + $0x7c] sm:$0xf]
  %v61 = vld [vmem:[%s1 + $0x80] sm:$0xf]
  %v62 = vld [vmem:[%s1 + $0x84] sm:$0xf]
  %v63 = vld [vmem:[%s1 + $0x88] sm:$0xf]
  %v64 = vld [vmem:[%s1 + $0x8c] sm:$0xf]
  %v65 = vld [vmem:[%s1 + $0x90] sm:$0xf]
  %v66 = vld [vmem:[%s1 + $0x94] sm:$0xf]
  %v67 = vld [vmem:[%s1 + $0x98] sm:$0xf]
  %v68 = vld [vmem:[%s1 + $0x9c] sm:$0xf]
  %v69 = vld [vmem:[%s1 + $0xa0] sm:$0xf]
  %v70 = vld [vmem:[%s1 + $0xa4] sm:$0xf]
  %v71 = vld [vmem:[%s1 + $0xa8] sm:$0xf]
  %v72 = vld [vmem:[%s1 + $0xac] sm:$0xf]
  %v73 = vld [vmem:[%s1 + $0xb0] sm:$0xf]
  %v74 = vld [vmem:[%s1 + $0xb4] sm:$0xf]
  %v75 = vld [vmem:[%s1 + $0xb8] sm:$0xf]
  %v76 = vld [vmem:[%s1 + $0xbc] sm:$0xf]
  %v77 = vld [vmem:[%s1 + $0xc0] sm:$0xf]
  %v78 = vld [vmem:[%s1 + $0xc4] sm:$0xf]
  %v79 = vld [vmem:[%s1 + $0xc8] sm:$0xf]
  %v80 = vld [vmem:[%s1 + $0xcc] sm:$0xf]
  %v81 = vld [vmem:[%s1 + $0xd0] sm:$0xf]
  %v82 = vld [vmem:[%s1 + $0xd4] sm:$0xf]
  %v83 = vld [vmem:[%s1 + $0xd8] sm:$0xf]
  %v84 = vld [vmem:[%s1 + $0xdc] sm:$0xf]
  %v85 = vld [vmem:[%s1 + $0xe0] sm:$0xf]
  %v86 = vld [vmem:[%s1 + $0xe4] sm:$0xf]
  %v87 = vld [vmem:[%s1 + $0xe8] sm:$0xf]
  %v88 = vld [vmem:[%s1 + $0xec] sm:$0xf]
  %v89 = vld [vmem:[%s1 + $0xf0] sm:$0xf]
  %v90 = vld [vmem:[%s1 + $0xf4] sm:$0xf]
  %v91 = vld [vmem:[%s1 + $0xf8] sm:$0xf]
  %v92 = vld [vmem:[%s1 + $0xfc] sm:$0xf]
  %v93 = vld [vmem:[%s1 + $0x100] sm:$0xf]
  %v94 = vld [vmem:[%s1 + $0x104] sm:$0xf]
  %v95 = vld [vmem:[%s1 + $0x108] sm:$0xf]
  %v96 = vld [vmem:[%s1 + $0x10c] sm:$0xf]
  %v97 = vld [vmem:[%s1 + $0x110] sm:$0xf]
  %v98 = vld [vmem:[%s1 + $0x114] sm:$0xf]
  %v99 = vld [vmem:[%s1 + $0x118] sm:$0xf]
  %v100 = vld [vmem:[%s1 + $0x11c] sm:$0xf]
  %v101 = vld [vmem:[%s1 + $0x120] sm:$0xf]
  %v102 = vld [vmem:[%s1 + $0x124] sm:$0xf]
  %v103 = vld [vmem:[%s1 + $0x128] sm:$0xf]
  %v104 = vld [vmem:[%s1 + $0x12c] sm:$0xf]
  %v105 = vld [vmem:[%s1 + $0x130] sm:$0xf]
  %v106 = vld [vmem:[%s1 + $0x134] sm:$0xf]
  %v107 = vld [vmem:[%s1 + $0x138] sm:$0xf]
  %v108 = vld [vmem:[%s1 + $0x13c] sm:$0xf]
  %v109 = vld [vmem:[%s1 + $0x140] sm:$0xf]
  %v110 = vld [vmem:[%s1 + $0x144] sm:$0xf]
  %v111 = vld [vmem:[%s1 + $0x148] sm:$0xf]
  %v112 = vld [vmem:[%s1 + $0x14c] sm:$0xf]
  %v113 = vld [vmem:[%s1 + $0x150] sm:$0xf]
  %v114 = vld [vmem:[%s1 + $0x154] sm:$0xf]
  %v115 = vld [vmem:[%s1 + $0x158] sm:$0xf]
  %v116 = vld [vmem:[%s1 + $0x15c] sm:$0xf]
  %v117 = vld [vmem:[%s1 + $0x160] sm:$0xf]
  %v118 = vld [vmem:[%s1 + $0x164] sm:$0xf]
  %v119 = vld [vmem:[%s1 + $0x168] sm:$0xf]
  %v120 = vld [vmem:[%s1 + $0x16c] sm:$0xf]
  %v121 = vld [vmem:[%s1 + $0x170] sm:$0xf]
  %v122 = vld [vmem:[%s1 + $0x174] sm:$0xf]
  %v123 = vld [vmem:[%s1 + $0x178] sm:$0xf]
  %v124 = vld [vmem:[%s1 + $0x17c] sm:$0xf]
  %v125 = vld [vmem:[%s1 + $0x180] sm:$0xf]
  %v126 = vld [vmem:[%s1 + $0x184] sm:$0xf]
  %v127 = vld [vmem:[%s1 + $0x188] sm:$0xf]
  %v128 = vld [vmem:[%s1 + $0x18c] sm:$0xf]
  %v129 = vld [vmem:[%s1 + $0x190] sm:$0xf]
  %v130 = vld [vmem:[%s1 + $0x194] sm:$0xf]
  %v131 = vld [vmem:[%s1 + $0x198] sm:$0xf]
  %v132 = vld [vmem:[%s1 + $0x19c] sm:$0xf]
  %v133 = vld [vmem:[%s1 + $0x1a0] sm:$0xf]
  %v134 = vld [vmem:[%s1 + $0x1a4] sm:$0xf]
  %v135 = vld [vmem:[%s1 + $0x1a8] sm:$0xf]
  %v136 = vld [vmem:[%s1 + $0x1ac] sm:$0xf]
  %v137 = vld [vmem:[%s1 + $0x1b0] sm:$0xf]
  %v138 = vld [vmem:[%s1 + $0x1b4] sm:$0xf]
  %v139 = vld [vmem:[%s1 + $0x1b8] sm:$0xf]
  %v140 = vld [vmem:[%s1 + $0x1bc] sm:$0xf]
  %v141 = vld [vmem:[%s1 + $0x1c0] sm:$0xf]
  %v142 = vld [vmem:[%s1 + $0x1c4] sm:$0xf]
  %v143 = vld [vmem:[%s1 + $0x1c8] sm:$0xf]
  %v144 = vld [vmem:[%s1 + $0x1cc] sm:$0xf]
  %v145 = vld [vmem:[%s1 + $0x1d0] sm:$0xf]
  %v146 = vld [vmem:[%s1 + $0x1d4] sm:$0xf]
  %v147 = vld [vmem:[%s1 + $0x1d8] sm:$0xf]
  %v148 = vld [vmem:[%s1 + $0x1dc] sm:$0xf]
  %v149 = vld [vmem:[%s1 + $0x1e0] sm:$0xf]
  %v150 = vld [vmem:[%s1 + $0x1e4] sm:$0xf]
  %v151 = vld [vmem:[%s1 + $0x1e8] sm:$0xf]
  %v152 = vld [vmem:[%s1 + $0x1ec] sm:$0xf]
  %v153 = vld [vmem:[%s1 + $0x1f0] sm:$0xf]
  %v154 = vld [vmem:[%s1 + $0x1f4] sm:$0xf]
  %v155 = vld [vmem:[%s1 + $0x1f8] sm:$0xf]
  %v156 = vld [vmem:[%s1 + $0x1fc] sm:$0xf]
  %v173 = vunpack.c.l.b16 %v13
  %v174 = vunpack.c.h.b16 %v13
  %v175 = vunpack.c.l.b16 %v14
  %v176 = vunpack.c.h.b16 %v14
  %v177 = vunpack.c.l.b16 %v15
  %v178 = vunpack.c.h.b16 %v15
  %v179 = vunpack.c.l.b16 %v16
  %v180 = vunpack.c.h.b16 %v16
  %v181 = vunpack.c.l.b16 %v17
  %v182 = vunpack.c.h.b16 %v17
  %v183 = vunpack.c.l.b16 %v18
  %v184 = vunpack.c.h.b16 %v18
  %v185 = vunpack.c.l.b16 %v19
  %v186 = vunpack.c.h.b16 %v19
  %v187 = vunpack.c.l.b16 %v20
  %v188 = vunpack.c.h.b16 %v20
  %v189 = vunpack.c.l.b16 %v21
  %v190 = vunpack.c.h.b16 %v21
  %v191 = vunpack.c.l.b16 %v22
  %v192 = vunpack.c.h.b16 %v22
  %v193 = vunpack.c.l.b16 %v23
  %v194 = vunpack.c.h.b16 %v23
  %v195 = vunpack.c.l.b16 %v24
  %v196 = vunpack.c.h.b16 %v24
  %v197 = vunpack.c.l.b16 %v25
  %v198 = vunpack.c.h.b16 %v25
  %v199 = vunpack.c.l.b16 %v26
  %v200 = vunpack.c.h.b16 %v26
  %v201 = vunpack.c.l.b16 %v27
  %v202 = vunpack.c.h.b16 %v27
  %v203 = vunpack.c.l.b16 %v28
  %v204 = vunpack.c.h.b16 %v28
  %v205 = vpack.c.b16 %v181, %v173
  %v206 = vpack.c.b16 %v182, %v174
  %v207 = vpack.c.b16 %v183, %v175
  %v208 = vpack.c.b16 %v184, %v176
  %v209 = vpack.c.b16 %v185, %v177
  %v210 = vpack.c.b16 %v186, %v178
  %v211 = vpack.c.b16 %v187, %v179
  %v212 = vpack.c.b16 %v188, %v180
  %v213 = vpack.c.b16 %v197, %v189
  %v214 = vpack.c.b16 %v198, %v190
  %v215 = vpack.c.b16 %v199, %v191
  %v216 = vpack.c.b16 %v200, %v192
  %v217 = vpack.c.b16 %v201, %v193
  %v218 = vpack.c.b16 %v202, %v194
  %v219 = vpack.c.b16 %v203, %v195
  %v220 = vpack.c.b16 %v204, %v196
  %v365 = vunpack.c.l.b16 %v29
  %v366 = vunpack.c.l.b16 %v30
  %v367 = vunpack.c.l.b16 %v31
  %v368 = vunpack.c.l.b16 %v32
  %v369 = vunpack.c.l.b16 %v33
  %v370 = vunpack.c.l.b16 %v34
  %v371 = vunpack.c.l.b16 %v35
  %v372 = vunpack.c.l.b16 %v36
  %v373 = vunpack.c.l.b16 %v37
  %v374 = vunpack.c.l.b16 %v38
  %v375 = vunpack.c.l.b16 %v39
  %v376 = vunpack.c.l.b16 %v40
  %v377 = vunpack.c.l.b16 %v41
  %v378 = vunpack.c.l.b16 %v42
  %v379 = vunpack.c.l.b16 %v43
  %v380 = vunpack.c.l.b16 %v44
  %v381 = vunpack.c.l.b16 %v45
  %v382 = vunpack.c.l.b16 %v46
  %v383 = vunpack.c.l.b16 %v47
  %v384 = vunpack.c.l.b16 %v48
  %v385 = vunpack.c.l.b16 %v49
  %v386 = vunpack.c.l.b16 %v50
  %v387 = vunpack.c.l.b16 %v51
  %v388 = vunpack.c.l.b16 %v52
  %v389 = vunpack.c.l.b16 %v53
  %v390 = vunpack.c.l.b16 %v54
  %v391 = vunpack.c.l.b16 %v55
  %v392 = vunpack.c.l.b16 %v56
  %v393 = vunpack.c.l.b16 %v57
  %v394 = vunpack.c.l.b16 %v58
  %v395 = vunpack.c.l.b16 %v59
  %v396 = vunpack.c.l.b16 %v60
  %v397 = vunpack.c.l.b16 %v61
  %v398 = vunpack.c.l.b16 %v62
  %v399 = vunpack.c.l.b16 %v63
  %v400 = vunpack.c.l.b16 %v64
  %v401 = vunpack.c.l.b16 %v65
  %v402 = vunpack.c.l.b16 %v66
  %v403 = vunpack.c.l.b16 %v67
  %v404 = vunpack.c.l.b16 %v68
  %v405 = vunpack.c.l.b16 %v69
  %v406 = vunpack.c.l.b16 %v70
  %v407 = vunpack.c.l.b16 %v71
  %v408 = vunpack.c.l.b16 %v72
  %v409 = vunpack.c.l.b16 %v73
  %v410 = vunpack.c.l.b16 %v74
  %v411 = vunpack.c.l.b16 %v75
  %v412 = vunpack.c.l.b16 %v76
  %v413 = vunpack.c.l.b16 %v77
  %v414 = vunpack.c.l.b16 %v78
  %v415 = vunpack.c.l.b16 %v79
  %v416 = vunpack.c.l.b16 %v80
  %v417 = vunpack.c.l.b16 %v81
  %v418 = vunpack.c.l.b16 %v82
  %v419 = vunpack.c.l.b16 %v83
  %v420 = vunpack.c.l.b16 %v84
  %v421 = vunpack.c.l.b16 %v85
  %v422 = vunpack.c.l.b16 %v86
  %v423 = vunpack.c.l.b16 %v87
  %v424 = vunpack.c.l.b16 %v88
  %v425 = vunpack.c.l.b16 %v89
  %v426 = vunpack.c.l.b16 %v90
  %v427 = vunpack.c.l.b16 %v91
  %v428 = vunpack.c.l.b16 %v92
  %v429 = vunpack.c.l.b16 %v93
  %v430 = vunpack.c.l.b16 %v94
  %v431 = vunpack.c.l.b16 %v95
  %v432 = vunpack.c.l.b16 %v96
  %v433 = vunpack.c.l.b16 %v97
  %v434 = vunpack.c.l.b16 %v98
  %v435 = vunpack.c.l.b16 %v99
  %v436 = vunpack.c.l.b16 %v100
  %v437 = vunpack.c.l.b16 %v101
  %v438 = vunpack.c.l.b16 %v102
  %v439 = vunpack.c.l.b16 %v103
  %v440 = vunpack.c.l.b16 %v104
  %v441 = vunpack.c.l.b16 %v105
  %v442 = vunpack.c.l.b16 %v106
  %v443 = vunpack.c.l.b16 %v107
  %v444 = vunpack.c.l.b16 %v108
  %v445 = vunpack.c.l.b16 %v109
  %v446 = vunpack.c.l.b16 %v110
  %v447 = vunpack.c.l.b16 %v111
  %v448 = vunpack.c.l.b16 %v112
  %v449 = vunpack.c.l.b16 %v113
  %v450 = vunpack.c.l.b16 %v114
  %v451 = vunpack.c.l.b16 %v115
  %v452 = vunpack.c.l.b16 %v116
  %v453 = vunpack.c.l.b16 %v117
  %v454 = vunpack.c.l.b16 %v118
  %v455 = vunpack.c.l.b16 %v119
  %v456 = vunpack.c.l.b16 %v120
  %v457 = vunpack.c.l.b16 %v121
  %v458 = vunpack.c.l.b16 %v122
  %v459 = vunpack.c.l.b16 %v123
  %v460 = vunpack.c.l.b16 %v124
  %v461 = vunpack.c.l.b16 %v125
  %v462 = vunpack.c.l.b16 %v126
  %v463 = vunpack.c.l.b16 %v127
  %v464 = vunpack.c.l.b16 %v128
  %v465 = vunpack.c.l.b16 %v129
  %v466 = vunpack.c.l.b16 %v130
  %v467 = vunpack.c.l.b16 %v131
  %v468 = vunpack.c.l.b16 %v132
  %v469 = vunpack.c.l.b16 %v133
  %v470 = vunpack.c.l.b16 %v134
  %v471 = vunpack.c.l.b16 %v135
  %v472 = vunpack.c.l.b16 %v136
  %v473 = vunpack.c.l.b16 %v137
  %v474 = vunpack.c.l.b16 %v138
  %v475 = vunpack.c.l.b16 %v139
  %v476 = vunpack.c.l.b16 %v140
  %v477 = vunpack.c.l.b16 %v141
  %v478 = vunpack.c.l.b16 %v142
  %v479 = vunpack.c.l.b16 %v143
  %v480 = vunpack.c.l.b16 %v144
  %v481 = vunpack.c.l.b16 %v145
  %v482 = vunpack.c.l.b16 %v146
  %v483 = vunpack.c.l.b16 %v147
  %v484 = vunpack.c.l.b16 %v148
  %v485 = vunpack.c.l.b16 %v149
  %v486 = vunpack.c.l.b16 %v150
  %v487 = vunpack.c.l.b16 %v151
  %v488 = vunpack.c.l.b16 %v152
  %v489 = vunpack.c.l.b16 %v153
  %v490 = vunpack.c.l.b16 %v154
  %v491 = vunpack.c.l.b16 %v155
  %v492 = vunpack.c.l.b16 %v156
  %v493 = vpack.c.b16 %v366, %v365
  %v494 = vpack.c.b16 %v368, %v367
  %v495 = vpack.c.b16 %v370, %v369
  %v496 = vpack.c.b16 %v372, %v371
  %v497 = vpack.c.b16 %v374, %v373
  %v498 = vpack.c.b16 %v376, %v375
  %v499 = vpack.c.b16 %v378, %v377
  %v500 = vpack.c.b16 %v380, %v379
  %v501 = vpack.c.b16 %v382, %v381
  %v502 = vpack.c.b16 %v384, %v383
  %v503 = vpack.c.b16 %v386, %v385
  %v504 = vpack.c.b16 %v388, %v387
  %v505 = vpack.c.b16 %v390, %v389
  %v506 = vpack.c.b16 %v392, %v391
  %v507 = vpack.c.b16 %v394, %v393
  %v508 = vpack.c.b16 %v396, %v395
  %v509 = vpack.c.b16 %v398, %v397
  %v510 = vpack.c.b16 %v400, %v399
  %v511 = vpack.c.b16 %v402, %v401
  %v512 = vpack.c.b16 %v404, %v403
  %v513 = vpack.c.b16 %v406, %v405
  %v514 = vpack.c.b16 %v408, %v407
  %v515 = vpack.c.b16 %v410, %v409
  %v516 = vpack.c.b16 %v412, %v411
  %v517 = vpack.c.b16 %v414, %v413
  %v518 = vpack.c.b16 %v416, %v415
  %v519 = vpack.c.b16 %v418, %v417
  %v520 = vpack.c.b16 %v420, %v419
  %v521 = vpack.c.b16 %v422, %v421
  %v522 = vpack.c.b16 %v424, %v423
  %v523 = vpack.c.b16 %v426, %v425
  %v524 = vpack.c.b16 %v428, %v427
  %v525 = vpack.c.b16 %v430, %v429
  %v526 = vpack.c.b16 %v432, %v431
  %v527 = vpack.c.b16 %v434, %v433
  %v528 = vpack.c.b16 %v436, %v435
  %v529 = vpack.c.b16 %v438, %v437
  %v530 = vpack.c.b16 %v440, %v439
  %v531 = vpack.c.b16 %v442, %v441
  %v532 = vpack.c.b16 %v444, %v443
  %v533 = vpack.c.b16 %v446, %v445
  %v534 = vpack.c.b16 %v448, %v447
  %v535 = vpack.c.b16 %v450, %v449
  %v536 = vpack.c.b16 %v452, %v451
  %v537 = vpack.c.b16 %v454, %v453
  %v538 = vpack.c.b16 %v456, %v455
  %v539 = vpack.c.b16 %v458, %v457
  %v540 = vpack.c.b16 %v460, %v459
  %v541 = vpack.c.b16 %v462, %v461
  %v542 = vpack.c.b16 %v464, %v463
  %v543 = vpack.c.b16 %v466, %v465
  %v544 = vpack.c.b16 %v468, %v467
  %v545 = vpack.c.b16 %v470, %v469
  %v546 = vpack.c.b16 %v472, %v471
  %v547 = vpack.c.b16 %v474, %v473
  %v548 = vpack.c.b16 %v476, %v475
  %v549 = vpack.c.b16 %v478, %v477
  %v550 = vpack.c.b16 %v480, %v479
  %v551 = vpack.c.b16 %v482, %v481
  %v552 = vpack.c.b16 %v484, %v483
  %v553 = vpack.c.b16 %v486, %v485
  %v554 = vpack.c.b16 %v488, %v487
  %v555 = vpack.c.b16 %v490, %v489
  %v556 = vpack.c.b16 %v492, %v491
  %621 = vmatpush.bf16.msra.mxu0 %v500
  %622 = vmatpush.bf16.msra.mxu0 %v499
  %623 = vmatpush.bf16.msra.mxu0 %v498
  %624 = vmatpush.bf16.msra.mxu0 %v497
  %625 = vmatpush.bf16.msra.mxu0 %v496
  %626 = vmatpush.bf16.msra.mxu0 %v495
  %627 = vmatpush.bf16.msra.mxu0 %v494
  %628 = vmatpush.bf16.msra.mxu0 %v493
  %629 = vmatmul.bf16.gmra.mxu0 %v205
  %v630 = vpop.f32.mrf.mxu0
  %v631 = vadd.f32 0.0, %v630
  %v632 = vpop.f32.mrf.mxu0
  %v633 = vadd.f32 0.0, %v632
  %634 = vmatmul.bf16.gmra.mxu0 %v213
  %v635 = vpop.f32.mrf.mxu0
  %v636 = vadd.f32 0.0, %v635
  %v637 = vpop.f32.mrf.mxu0
  %v638 = vadd.f32 0.0, %v637
  %639 = vdwg.mxu0
  %640 = vmatpush.bf16.msra.mxu0 %v508
  %641 = vmatpush.bf16.msra.mxu0 %v507
  %642 = vmatpush.bf16.msra.mxu0 %v506
  %643 = vmatpush.bf16.msra.mxu0 %v505
  %644 = vmatpush.bf16.msra.mxu0 %v504
  %645 = vmatpush.bf16.msra.mxu0 %v503
  %646 = vmatpush.bf16.msra.mxu0 %v502
  %647 = vmatpush.bf16.msra.mxu0 %v501
  %648 = vmatmul.bf16.gmra.mxu0 %v206
  %v649 = vpop.f32.mrf.mxu0
  %v650 = vadd.f32 %v631, %v649
  %v651 = vpop.f32.mrf.mxu0
  %v652 = vadd.f32 %v633, %v651
  %653 = vmatmul.bf16.gmra.mxu0 %v214
  %v654 = vpop.f32.mrf.mxu0
  %v655 = vadd.f32 %v636, %v654
  %v656 = vpop.f32.mrf.mxu0
  %v657 = vadd.f32 %v638, %v656
  %658 = vdwg.mxu0
  %659 = vmatpush.bf16.msra.mxu0 %v516
  %660 = vmatpush.bf16.msra.mxu0 %v515
  %661 = vmatpush.bf16.msra.mxu0 %v514
  %662 = vmatpush.bf16.msra.mxu0 %v513
  %663 = vmatpush.bf16.msra.mxu0 %v512
  %664 = vmatpush.bf16.msra.mxu0 %v511
  %665 = vmatpush.bf16.msra.mxu0 %v510
  %666 = vmatpush.bf16.msra.mxu0 %v509
  %667 = vmatmul.bf16.gmra.mxu0 %v207
  %v668 = vpop.f32.mrf.mxu0
  %v669 = vadd.f32 %v650, %v668
  %v670 = vpop.f32.mrf.mxu0
  %v671 = vadd.f32 %v652, %v670
  %672 = vmatmul.bf16.gmra.mxu0 %v215
  %v673 = vpop.f32.mrf.mxu0
  %v674 = vadd.f32 %v655, %v673
  %v675 = vpop.f32.mrf.mxu0
  %v676 = vadd.f32 %v657, %v675
  %677 = vdwg.mxu0
  %678 = vmatpush.bf16.msra.mxu0 %v524
  %679 = vmatpush.bf16.msra.mxu0 %v523
  %680 = vmatpush.bf16.msra.mxu0 %v522
  %681 = vmatpush.bf16.msra.mxu0 %v521
  %682 = vmatpush.bf16.msra.mxu0 %v520
  %683 = vmatpush.bf16.msra.mxu0 %v519
  %684 = vmatpush.bf16.msra.mxu0 %v518
  %685 = vmatpush.bf16.msra.mxu0 %v517
  %686 = vmatmul.bf16.gmra.mxu0 %v208
  %v687 = vpop.f32.mrf.mxu0
  %v688 = vadd.f32 %v669, %v687
  %v689 = vpop.f32.mrf.mxu0
  %v690 = vadd.f32 %v671, %v689
  %691 = vmatmul.bf16.gmra.mxu0 %v216
  %v692 = vpop.f32.mrf.mxu0
  %v693 = vadd.f32 %v674, %v692
  %v694 = vpop.f32.mrf.mxu0
  %v695 = vadd.f32 %v676, %v694
  %696 = vdwg.mxu0
  %697 = vmatpush.bf16.msra.mxu0 %v532
  %698 = vmatpush.bf16.msra.mxu0 %v531
  %699 = vmatpush.bf16.msra.mxu0 %v530
  %700 = vmatpush.bf16.msra.mxu0 %v529
  %701 = vmatpush.bf16.msra.mxu0 %v528
  %702 = vmatpush.bf16.msra.mxu0 %v527
  %703 = vmatpush.bf16.msra.mxu0 %v526
  %704 = vmatpush.bf16.msra.mxu0 %v525
  %705 = vmatmul.bf16.gmra.mxu0 %v209
  %v706 = vpop.f32.mrf.mxu0
  %v707 = vadd.f32 %v688, %v706
  %v708 = vpop.f32.mrf.mxu0
  %v709 = vadd.f32 %v690, %v708
  %710 = vmatmul.bf16.gmra.mxu0 %v217
  %v711 = vpop.f32.mrf.mxu0
  %v712 = vadd.f32 %v693, %v711
  %v713 = vpop.f32.mrf.mxu0
  %v714 = vadd.f32 %v695, %v713
  %715 = vdwg.mxu0
  %716 = vmatpush.bf16.msra.mxu0 %v540
  %717 = vmatpush.bf16.msra.mxu0 %v539
  %718 = vmatpush.bf16.msra.mxu0 %v538
  %719 = vmatpush.bf16.msra.mxu0 %v537
  %720 = vmatpush.bf16.msra.mxu0 %v536
  %721 = vmatpush.bf16.msra.mxu0 %v535
  %722 = vmatpush.bf16.msra.mxu0 %v534
  %723 = vmatpush.bf16.msra.mxu0 %v533
  %724 = vmatmul.bf16.gmra.mxu0 %v210
  %v725 = vpop.f32.mrf.mxu0
  %v726 = vadd.f32 %v707, %v725
  %v727 = vpop.f32.mrf.mxu0
  %v728 = vadd.f32 %v709, %v727
  %729 = vmatmul.bf16.gmra.mxu0 %v218
  %v730 = vpop.f32.mrf.mxu0
  %v731 = vadd.f32 %v712, %v730
  %v732 = vpop.f32.mrf.mxu0
  %v733 = vadd.f32 %v714, %v732
  %734 = vdwg.mxu0
  %735 = vmatpush.bf16.msra.mxu0 %v548
  %736 = vmatpush.bf16.msra.mxu0 %v547
  %737 = vmatpush.bf16.msra.mxu0 %v546
  %738 = vmatpush.bf16.msra.mxu0 %v545
  %739 = vmatpush.bf16.msra.mxu0 %v544
  %740 = vmatpush.bf16.msra.mxu0 %v543
  %741 = vmatpush.bf16.msra.mxu0 %v542
  %742 = vmatpush.bf16.msra.mxu0 %v541
  %743 = vmatmul.bf16.gmra.mxu0 %v211
  %v744 = vpop.f32.mrf.mxu0
  %v745 = vadd.f32 %v726, %v744
  %v746 = vpop.f32.mrf.mxu0
  %v747 = vadd.f32 %v728, %v746
  %748 = vmatmul.bf16.gmra.mxu0 %v219
  %v749 = vpop.f32.mrf.mxu0
  %v750 = vadd.f32 %v731, %v749
  %v751 = vpop.f32.mrf.mxu0
  %v752 = vadd.f32 %v733, %v751
  %753 = vdwg.mxu0
  %754 = vmatpush.bf16.msra.mxu0 %v556
  %755 = vmatpush.bf16.msra.mxu0 %v555
  %756 = vmatpush.bf16.msra.mxu0 %v554
  %757 = vmatpush.bf16.msra.mxu0 %v553
  %758 = vmatpush.bf16.msra.mxu0 %v552
  %759 = vmatpush.bf16.msra.mxu0 %v551
  %760 = vmatpush.bf16.msra.mxu0 %v550
  %761 = vmatpush.bf16.msra.mxu0 %v549
  %762 = vmatmul.bf16.gmra.mxu0 %v212
  %v763 = vpop.f32.mrf.mxu0
  %v764 = vadd.f32 %v745, %v763
  %v765 = vpop.f32.mrf.mxu0
  %v766 = vadd.f32 %v747, %v765
  %767 = vmatmul.bf16.gmra.mxu0 %v220
  %v768 = vpop.f32.mrf.mxu0
  %v769 = vadd.f32 %v750, %v768
  %v770 = vpop.f32.mrf.mxu0
  %v771 = vadd.f32 %v752, %v770
  %772 = vdwg.mxu0
  %773 = vst [vmem:[%s2] sm:$0xff] %v764
  %774 = vst [vmem:[%s2 + $0x8] sm:$0xff] %v766
  %775 = vst [vmem:[%s2 + $0x10] sm:$0xff] %v769
  %776 = vst [vmem:[%s2 + $0x18] sm:$0xff] %v771
  %v777 = vadd.f32 %v764, %v766
  %v778 = vadd.f32 %v777, %v769
  %v779 = vadd.f32 %v778, %v771
  %v780 = vrot.slane %v779, 4
  %v781 = vadd.f32 %v779, %v780
  %v782 = vrot.slane %v781, 2
  %v783 = vadd.f32 %v781, %v782
  %v784 = vrot.slane %v783, 1
  %v785 = vadd.f32 %v783, %v784
  %v786 = vmul.f32 %v764, %v764
  %v787 = vmul.f32 %v766, %v766
  %v788 = vmul.f32 %v769, %v769
  %v789 = vmul.f32 %v771, %v771
  %v790 = vadd.f32 %v786, %v787
  %v791 = vadd.f32 %v790, %v788
  %v792 = vadd.f32 %v791, %v789
  %v793 = vrot.slane %v792, 4
  %v794 = vadd.f32 %v792, %v793
  %v795 = vrot.slane %v794, 2
  %v796 = vadd.f32 %v794, %v795
  %v797 = vrot.slane %v796, 1
  %v798 = vadd.f32 %v796, %v797
  %vm799 = vcmask 1040384
  %v800 = vsel %vm799, %v785, %v798
  %p801 = scmp.eq.s32.totalorder 0, 0
  // Predicated region
  $region10: #{_lambda_.13} parent=0 // pred_check
    %p802 = pneg %p801
  $region11: #{_lambda_.13} parent=0 // pred_check_branch
    %804 = sbr.rel (%p802) target = $region13
  $region12: #{_lambda_.13} parent=0 // pred_region
    %805 = vst [vmem:[%s3] sm:$0x3] %v800
  $region13: #{_lambda_.13} parent=0 // pred_fallthru
    _
  %p806 = scmp.ne.s32.totalorder 0, 0
  // Predicated region
  $region14: #{_lambda_.13} parent=0 // pred_check
    %p807 = pneg %p806
  $region15: #{_lambda_.13} parent=0 // pred_check_branch
    %809 = sbr.rel (%p807) target = $region17
  $region16: #{_lambda_.13} parent=0 // pred_region
    %v810 = vld [vmem:[%s3] sm:$0x3]
    %v811 = vadd.f32 %v810, %v800
    %812 = vst [vmem:[%s3] sm:$0x3] %v811
  $region17: #{_lambda_.13} parent=0 // pred_fallthru
    _
  // Predicated region
  $region18: #{_lambda_.13} parent=0 // pred_check
    _
  $region19: #{_lambda_.13} parent=0 // pred_check_branch
    %814 = sbr.rel (0) target = $region21
  $region20: #{_lambda_.13} parent=0 // pred_region
    _
  $region21: #{_lambda_.13} parent=0 // pred_fallthru
    _
  // Predicated region
  $region22: #{_lambda_.13} parent=0 // pred_check
    _
  $region23: #{_lambda_.13} parent=0 // pred_check_branch
    %816 = sbr.rel (0) target = $region25
  $region24: #{_lambda_.13} parent=0 // pred_region
    _
  $region25: #{_lambda_.13} parent=0 // pred_fallthru
    _
  // Predicated region
  $region26: #{_lambda_.13} parent=0 // pred_check
    _
  $region27: #{_lambda_.13} parent=0 // pred_check_branch
    %818 = sbr.rel (0) target = $region29
  $region28: #{_lambda_.13} parent=0 // pred_region
    _
  $region29: #{_lambda_.13} parent=0 // pred_fallthru
    _
  // Predicated region
  $region30: #{_lambda_.13} parent=0 // pred_check
    _
  $region31: #{_lambda_.13} parent=0 // pred_check_branch
    %820 = sbr.rel (0) target = $region33
  $region32: #{_lambda_.13} parent=0 // pred_region
    _
  $region33: #{_lambda_.13} parent=0 // pred_fallthru
    _

// kernel: _lambda_.15
$region0: #{_lambda_.15}
  #allocation0 [shape = 'u32[]', space=smem, size = 0x4, offset = 0x4, fixed_abs, tag = 'smem constant byte address 0x4 - core index']
  #allocation1 [shape = 'u32[72,128]{1,0:T(1,128)}', space=vmem, size = 0x9000, scoped, tag = 'internal scratch']
  %s0 = inlined_call_operand.vmem [shape: bf16[2,2048], index: 0, kind: input, shape index: {}]
  %s1 = inlined_call_operand.vmem [shape: bf16[2048,1], index: 1, kind: input, shape index: {}]
  %s2 = inlined_call_operand.vmem [shape: f32[2,1], index: 2, kind: output, shape index: {}]
  %s3 = sld [smem:[#allocation0]]
  $region18: #{_lambda_.15} parent=0
    _
  %s5 = ssub.s32 1, %s3
  %s6 = scalar_select 0, %s5, %s3
  // Predicated region
  $region2: #{_lambda_.15} parent=0 // pred_check
    _
  $region3: #{_lambda_.15} parent=0 // pred_check_branch
    %8 = sbr.rel (0) target = $region5
  $region4: #{_lambda_.15} parent=0 // pred_region
    _
  $region5: #{_lambda_.15} parent=0 // pred_fallthru
    _
  // Predicated region
  $region6: #{_lambda_.15} parent=0 // pred_check
    _
  $region7: #{_lambda_.15} parent=0 // pred_check_branch
    %10 = sbr.rel (0) target = $region9
  $region8: #{_lambda_.15} parent=0 // pred_region
    _
  $region9: #{_lambda_.15} parent=0 // pred_fallthru
    _
  %v11 = vld [vmem:[%s0] sm:$0xff]
  %v12 = vld [vmem:[%s0 + $0x8] sm:$0xff]
  %v13 = vld [vmem:[%s1] sm:$0xf]
  %v14 = vld [vmem:[%s1 + $0x4] sm:$0xf]
  %v15 = vld [vmem:[%s1 + $0x8] sm:$0xf]
  %v16 = vld [vmem:[%s1 + $0xc] sm:$0xf]
  %v17 = vld [vmem:[%s1 + $0x10] sm:$0xf]
  %v18 = vld [vmem:[%s1 + $0x14] sm:$0xf]
  %v19 = vld [vmem:[%s1 + $0x18] sm:$0xf]
  %v20 = vld [vmem:[%s1 + $0x1c] sm:$0xf]
  %v21 = vld [vmem:[%s1 + $0x20] sm:$0xf]
  %v22 = vld [vmem:[%s1 + $0x24] sm:$0xf]
  %v23 = vld [vmem:[%s1 + $0x28] sm:$0xf]
  %v24 = vld [vmem:[%s1 + $0x2c] sm:$0xf]
  %v25 = vld [vmem:[%s1 + $0x30] sm:$0xf]
  %v26 = vld [vmem:[%s1 + $0x34] sm:$0xf]
  %v27 = vld [vmem:[%s1 + $0x38] sm:$0xf]
  %v28 = vld [vmem:[%s1 + $0x3c] sm:$0xf]
  %v29 = vld [vmem:[%s1 + $0x40] sm:$0xf]
  %v30 = vld [vmem:[%s1 + $0x44] sm:$0xf]
  %v31 = vld [vmem:[%s1 + $0x48] sm:$0xf]
  %v32 = vld [vmem:[%s1 + $0x4c] sm:$0xf]
  %v33 = vld [vmem:[%s1 + $0x50] sm:$0xf]
  %v34 = vld [vmem:[%s1 + $0x54] sm:$0xf]
  %v35 = vld [vmem:[%s1 + $0x58] sm:$0xf]
  %v36 = vld [vmem:[%s1 + $0x5c] sm:$0xf]
  %v37 = vld [vmem:[%s1 + $0x60] sm:$0xf]
  %v38 = vld [vmem:[%s1 + $0x64] sm:$0xf]
  %v39 = vld [vmem:[%s1 + $0x68] sm:$0xf]
  %v40 = vld [vmem:[%s1 + $0x6c] sm:$0xf]
  %v41 = vld [vmem:[%s1 + $0x70] sm:$0xf]
  %v42 = vld [vmem:[%s1 + $0x74] sm:$0xf]
  %v43 = vld [vmem:[%s1 + $0x78] sm:$0xf]
  %v44 = vld [vmem:[%s1 + $0x7c] sm:$0xf]
  %v45 = vld [vmem:[%s1 + $0x80] sm:$0xf]
  %v46 = vld [vmem:[%s1 + $0x84] sm:$0xf]
  %v47 = vld [vmem:[%s1 + $0x88] sm:$0xf]
  %v48 = vld [vmem:[%s1 + $0x8c] sm:$0xf]
  %v49 = vld [vmem:[%s1 + $0x90] sm:$0xf]
  %v50 = vld [vmem:[%s1 + $0x94] sm:$0xf]
  %v51 = vld [vmem:[%s1 + $0x98] sm:$0xf]
  %v52 = vld [vmem:[%s1 + $0x9c] sm:$0xf]
  %v53 = vld [vmem:[%s1 + $0xa0] sm:$0xf]
  %v54 = vld [vmem:[%s1 + $0xa4] sm:$0xf]
  %v55 = vld [vmem:[%s1 + $0xa8] sm:$0xf]
  %v56 = vld [vmem:[%s1 + $0xac] sm:$0xf]
  %v57 = vld [vmem:[%s1 + $0xb0] sm:$0xf]
  %v58 = vld [vmem:[%s1 + $0xb4] sm:$0xf]
  %v59 = vld [vmem:[%s1 + $0xb8] sm:$0xf]
  %v60 = vld [vmem:[%s1 + $0xbc] sm:$0xf]
  %v61 = vld [vmem:[%s1 + $0xc0] sm:$0xf]
  %v62 = vld [vmem:[%s1 + $0xc4] sm:$0xf]
  %v63 = vld [vmem:[%s1 + $0xc8] sm:$0xf]
  %v64 = vld [vmem:[%s1 + $0xcc] sm:$0xf]
  %v65 = vld [vmem:[%s1 + $0xd0] sm:$0xf]
  %v66 = vld [vmem:[%s1 + $0xd4] sm:$0xf]
  %v67 = vld [vmem:[%s1 + $0xd8] sm:$0xf]
  %v68 = vld [vmem:[%s1 + $0xdc] sm:$0xf]
  %v69 = vld [vmem:[%s1 + $0xe0] sm:$0xf]
  %v70 = vld [vmem:[%s1 + $0xe4] sm:$0xf]
  %v71 = vld [vmem:[%s1 + $0xe8] sm:$0xf]
  %v72 = vld [vmem:[%s1 + $0xec] sm:$0xf]
  %v73 = vld [vmem:[%s1 + $0xf0] sm:$0xf]
  %v74 = vld [vmem:[%s1 + $0xf4] sm:$0xf]
  %v75 = vld [vmem:[%s1 + $0xf8] sm:$0xf]
  %v76 = vld [vmem:[%s1 + $0xfc] sm:$0xf]
  %v77 = vld [vmem:[%s1 + $0x100] sm:$0xf]
  %v78 = vld [vmem:[%s1 + $0x104] sm:$0xf]
  %v79 = vld [vmem:[%s1 + $0x108] sm:$0xf]
  %v80 = vld [vmem:[%s1 + $0x10c] sm:$0xf]
  %v81 = vld [vmem:[%s1 + $0x110] sm:$0xf]
  %v82 = vld [vmem:[%s1 + $0x114] sm:$0xf]
  %v83 = vld [vmem:[%s1 + $0x118] sm:$0xf]
  %v84 = vld [vmem:[%s1 + $0x11c] sm:$0xf]
  %v85 = vld [vmem:[%s1 + $0x120] sm:$0xf]
  %v86 = vld [vmem:[%s1 + $0x124] sm:$0xf]
  %v87 = vld [vmem:[%s1 + $0x128] sm:$0xf]
  %v88 = vld [vmem:[%s1 + $0x12c] sm:$0xf]
  %v89 = vld [vmem:[%s1 + $0x130] sm:$0xf]
  %v90 = vld [vmem:[%s1 + $0x134] sm:$0xf]
  %v91 = vld [vmem:[%s1 + $0x138] sm:$0xf]
  %v92 = vld [vmem:[%s1 + $0x13c] sm:$0xf]
  %v93 = vld [vmem:[%s1 + $0x140] sm:$0xf]
  %v94 = vld [vmem:[%s1 + $0x144] sm:$0xf]
  %v95 = vld [vmem:[%s1 + $0x148] sm:$0xf]
  %v96 = vld [vmem:[%s1 + $0x14c] sm:$0xf]
  %v97 = vld [vmem:[%s1 + $0x150] sm:$0xf]
  %v98 = vld [vmem:[%s1 + $0x154] sm:$0xf]
  %v99 = vld [vmem:[%s1 + $0x158] sm:$0xf]
  %v100 = vld [vmem:[%s1 + $0x15c] sm:$0xf]
  %v101 = vld [vmem:[%s1 + $0x160] sm:$0xf]
  %v102 = vld [vmem:[%s1 + $0x164] sm:$0xf]
  %v103 = vld [vmem:[%s1 + $0x168] sm:$0xf]
  %v104 = vld [vmem:[%s1 + $0x16c] sm:$0xf]
  %v105 = vld [vmem:[%s1 + $0x170] sm:$0xf]
  %v106 = vld [vmem:[%s1 + $0x174] sm:$0xf]
  %v107 = vld [vmem:[%s1 + $0x178] sm:$0xf]
  %v108 = vld [vmem:[%s1 + $0x17c] sm:$0xf]
  %v109 = vld [vmem:[%s1 + $0x180] sm:$0xf]
  %v110 = vld [vmem:[%s1 + $0x184] sm:$0xf]
  %v111 = vld [vmem:[%s1 + $0x188] sm:$0xf]
  %v112 = vld [vmem:[%s1 + $0x18c] sm:$0xf]
  %v113 = vld [vmem:[%s1 + $0x190] sm:$0xf]
  %v114 = vld [vmem:[%s1 + $0x194] sm:$0xf]
  %v115 = vld [vmem:[%s1 + $0x198] sm:$0xf]
  %v116 = vld [vmem:[%s1 + $0x19c] sm:$0xf]
  %v117 = vld [vmem:[%s1 + $0x1a0] sm:$0xf]
  %v118 = vld [vmem:[%s1 + $0x1a4] sm:$0xf]
  %v119 = vld [vmem:[%s1 + $0x1a8] sm:$0xf]
  %v120 = vld [vmem:[%s1 + $0x1ac] sm:$0xf]
  %v121 = vld [vmem:[%s1 + $0x1b0] sm:$0xf]
  %v122 = vld [vmem:[%s1 + $0x1b4] sm:$0xf]
  %v123 = vld [vmem:[%s1 + $0x1b8] sm:$0xf]
  %v124 = vld [vmem:[%s1 + $0x1bc] sm:$0xf]
  %v125 = vld [vmem:[%s1 + $0x1c0] sm:$0xf]
  %v126 = vld [vmem:[%s1 + $0x1c4] sm:$0xf]
  %v127 = vld [vmem:[%s1 + $0x1c8] sm:$0xf]
  %v128 = vld [vmem:[%s1 + $0x1cc] sm:$0xf]
  %v129 = vld [vmem:[%s1 + $0x1d0] sm:$0xf]
  %v130 = vld [vmem:[%s1 + $0x1d4] sm:$0xf]
  %v131 = vld [vmem:[%s1 + $0x1d8] sm:$0xf]
  %v132 = vld [vmem:[%s1 + $0x1dc] sm:$0xf]
  %v133 = vld [vmem:[%s1 + $0x1e0] sm:$0xf]
  %v134 = vld [vmem:[%s1 + $0x1e4] sm:$0xf]
  %v135 = vld [vmem:[%s1 + $0x1e8] sm:$0xf]
  %v136 = vld [vmem:[%s1 + $0x1ec] sm:$0xf]
  %v137 = vld [vmem:[%s1 + $0x1f0] sm:$0xf]
  %v138 = vld [vmem:[%s1 + $0x1f4] sm:$0xf]
  %v139 = vld [vmem:[%s1 + $0x1f8] sm:$0xf]
  %v140 = vld [vmem:[%s1 + $0x1fc] sm:$0xf]
  %v141 = vld [vmem:[%s1 + $0x200] sm:$0xf]
  %v142 = vld [vmem:[%s1 + $0x204] sm:$0xf]
  %v143 = vld [vmem:[%s1 + $0x208] sm:$0xf]
  %v144 = vld [vmem:[%s1 + $0x20c] sm:$0xf]
  %v145 = vld [vmem:[%s1 + $0x210] sm:$0xf]
  %v146 = vld [vmem:[%s1 + $0x214] sm:$0xf]
  %v147 = vld [vmem:[%s1 + $0x218] sm:$0xf]
  %v148 = vld [vmem:[%s1 + $0x21c] sm:$0xf]
  %v149 = vld [vmem:[%s1 + $0x220] sm:$0xf]
  %v150 = vld [vmem:[%s1 + $0x224] sm:$0xf]
  %v151 = vld [vmem:[%s1 + $0x228] sm:$0xf]
  %v152 = vld [vmem:[%s1 + $0x22c] sm:$0xf]
  %v153 = vld [vmem:[%s1 + $0x230] sm:$0xf]
  %v154 = vld [vmem:[%s1 + $0x234] sm:$0xf]
  %v155 = vld [vmem:[%s1 + $0x238] sm:$0xf]
  %v156 = vld [vmem:[%s1 + $0x23c] sm:$0xf]
  %v157 = vld [vmem:[%s1 + $0x240] sm:$0xf]
  %v158 = vld [vmem:[%s1 + $0x244] sm:$0xf]
  %v159 = vld [vmem:[%s1 + $0x248] sm:$0xf]
  %v160 = vld [vmem:[%s1 + $0x24c] sm:$0xf]
  %v161 = vld [vmem:[%s1 + $0x250] sm:$0xf]
  %v162 = vld [vmem:[%s1 + $0x254] sm:$0xf]
  %v163 = vld [vmem:[%s1 + $0x258] sm:$0xf]
  %v164 = vld [vmem:[%s1 + $0x25c] sm:$0xf]
  %v165 = vld [vmem:[%s1 + $0x260] sm:$0xf]
  %v166 = vld [vmem:[%s1 + $0x264] sm:$0xf]
  %v167 = vld [vmem:[%s1 + $0x268] sm:$0xf]
  %v168 = vld [vmem:[%s1 + $0x26c] sm:$0xf]
  %v169 = vld [vmem:[%s1 + $0x270] sm:$0xf]
  %v170 = vld [vmem:[%s1 + $0x274] sm:$0xf]
  %v171 = vld [vmem:[%s1 + $0x278] sm:$0xf]
  %v172 = vld [vmem:[%s1 + $0x27c] sm:$0xf]
  %v173 = vld [vmem:[%s1 + $0x280] sm:$0xf]
  %v174 = vld [vmem:[%s1 + $0x284] sm:$0xf]
  %v175 = vld [vmem:[%s1 + $0x288] sm:$0xf]
  %v176 = vld [vmem:[%s1 + $0x28c] sm:$0xf]
  %v177 = vld [vmem:[%s1 + $0x290] sm:$0xf]
  %v178 = vld [vmem:[%s1 + $0x294] sm:$0xf]
  %v179 = vld [vmem:[%s1 + $0x298] sm:$0xf]
  %v180 = vld [vmem:[%s1 + $0x29c] sm:$0xf]
  %v181 = vld [vmem:[%s1 + $0x2a0] sm:$0xf]
  %v182 = vld [vmem:[%s1 + $0x2a4] sm:$0xf]
  %v183 = vld [vmem:[%s1 + $0x2a8] sm:$0xf]
  %v184 = vld [vmem:[%s1 + $0x2ac] sm:$0xf]
  %v185 = vld [vmem:[%s1 + $0x2b0] sm:$0xf]
  %v186 = vld [vmem:[%s1 + $0x2b4] sm:$0xf]
  %v187 = vld [vmem:[%s1 + $0x2b8] sm:$0xf]
  %v188 = vld [vmem:[%s1 + $0x2bc] sm:$0xf]
  %v189 = vld [vmem:[%s1 + $0x2c0] sm:$0xf]
  %v190 = vld [vmem:[%s1 + $0x2c4] sm:$0xf]
  %v191 = vld [vmem:[%s1 + $0x2c8] sm:$0xf]
  %v192 = vld [vmem:[%s1 + $0x2cc] sm:$0xf]
  %v193 = vld [vmem:[%s1 + $0x2d0] sm:$0xf]
  %v194 = vld [vmem:[%s1 + $0x2d4] sm:$0xf]
  %v195 = vld [vmem:[%s1 + $0x2d8] sm:$0xf]
  %v196 = vld [vmem:[%s1 + $0x2dc] sm:$0xf]
  %v197 = vld [vmem:[%s1 + $0x2e0] sm:$0xf]
  %v198 = vld [vmem:[%s1 + $0x2e4] sm:$0xf]
  %v199 = vld [vmem:[%s1 + $0x2e8] sm:$0xf]
  %v200 = vld [vmem:[%s1 + $0x2ec] sm:$0xf]
  %v201 = vld [vmem:[%s1 + $0x2f0] sm:$0xf]
  %v202 = vld [vmem:[%s1 + $0x2f4] sm:$0xf]
  %v203 = vld [vmem:[%s1 + $0x2f8] sm:$0xf]
  %v204 = vld [vmem:[%s1 + $0x2fc] sm:$0xf]
  %v205 = vld [vmem:[%s1 + $0x300] sm:$0xf]
  %v206 = vld [vmem:[%s1 + $0x304] sm:$0xf]
  %v207 = vld [vmem:[%s1 + $0x308] sm:$0xf]
  %v208 = vld [vmem:[%s1 + $0x30c] sm:$0xf]
  %v209 = vld [vmem:[%s1 + $0x310] sm:$0xf]
  %v210 = vld [vmem:[%s1 + $0x314] sm:$0xf]
  %v211 = vld [vmem:[%s1 + $0x318] sm:$0xf]
  %v212 = vld [vmem:[%s1 + $0x31c] sm:$0xf]
  %v213 = vld [vmem:[%s1 + $0x320] sm:$0xf]
  %v214 = vld [vmem:[%s1 + $0x324] sm:$0xf]
  %v215 = vld [vmem:[%s1 + $0x328] sm:$0xf]
  %v216 = vld [vmem:[%s1 + $0x32c] sm:$0xf]
  %v217 = vld [vmem:[%s1 + $0x330] sm:$0xf]
  %v218 = vld [vmem:[%s1 + $0x334] sm:$0xf]
  %v219 = vld [vmem:[%s1 + $0x338] sm:$0xf]
  %v220 = vld [vmem:[%s1 + $0x33c] sm:$0xf]
  %v221 = vld [vmem:[%s1 + $0x340] sm:$0xf]
  %v222 = vld [vmem:[%s1 + $0x344] sm:$0xf]
  %v223 = vld [vmem:[%s1 + $0x348] sm:$0xf]
  %v224 = vld [vmem:[%s1 + $0x34c] sm:$0xf]
  %v225 = vld [vmem:[%s1 + $0x350] sm:$0xf]
  %v226 = vld [vmem:[%s1 + $0x354] sm:$0xf]
  %v227 = vld [vmem:[%s1 + $0x358] sm:$0xf]
  %v228 = vld [vmem:[%s1 + $0x35c] sm:$0xf]
  %v229 = vld [vmem:[%s1 + $0x360] sm:$0xf]
  %v230 = vld [vmem:[%s1 + $0x364] sm:$0xf]
  %v231 = vld [vmem:[%s1 + $0x368] sm:$0xf]
  %v232 = vld [vmem:[%s1 + $0x36c] sm:$0xf]
  %v233 = vld [vmem:[%s1 + $0x370] sm:$0xf]
  %v234 = vld [vmem:[%s1 + $0x374] sm:$0xf]
  %v235 = vld [vmem:[%s1 + $0x378] sm:$0xf]
  %v236 = vld [vmem:[%s1 + $0x37c] sm:$0xf]
  %v237 = vld [vmem:[%s1 + $0x380] sm:$0xf]
  %v238 = vld [vmem:[%s1 + $0x384] sm:$0xf]
  %v239 = vld [vmem:[%s1 + $0x388] sm:$0xf]
  %v240 = vld [vmem:[%s1 + $0x38c] sm:$0xf]
  %v241 = vld [vmem:[%s1 + $0x390] sm:$0xf]
  %v242 = vld [vmem:[%s1 + $0x394] sm:$0xf]
  %v243 = vld [vmem:[%s1 + $0x398] sm:$0xf]
  %v244 = vld [vmem:[%s1 + $0x39c] sm:$0xf]
  %v245 = vld [vmem:[%s1 + $0x3a0] sm:$0xf]
  %v246 = vld [vmem:[%s1 + $0x3a4] sm:$0xf]
  %v247 = vld [vmem:[%s1 + $0x3a8] sm:$0xf]
  %v248 = vld [vmem:[%s1 + $0x3ac] sm:$0xf]
  %v249 = vld [vmem:[%s1 + $0x3b0] sm:$0xf]
  %v250 = vld [vmem:[%s1 + $0x3b4] sm:$0xf]
  %v251 = vld [vmem:[%s1 + $0x3b8] sm:$0xf]
  %v252 = vld [vmem:[%s1 + $0x3bc] sm:$0xf]
  %v253 = vld [vmem:[%s1 + $0x3c0] sm:$0xf]
  %v254 = vld [vmem:[%s1 + $0x3c4] sm:$0xf]
  %v255 = vld [vmem:[%s1 + $0x3c8] sm:$0xf]
  %v256 = vld [vmem:[%s1 + $0x3cc] sm:$0xf]
  %v257 = vld [vmem:[%s1 + $0x3d0] sm:$0xf]
  %v258 = vld [vmem:[%s1 + $0x3d4] sm:$0xf]
  %v259 = vld [vmem:[%s1 + $0x3d8] sm:$0xf]
  %v260 = vld [vmem:[%s1 + $0x3dc] sm:$0xf]
  %v261 = vld [vmem:[%s1 + $0x3e0] sm:$0xf]
  %v262 = vld [vmem:[%s1 + $0x3e4] sm:$0xf]
  %v263 = vld [vmem:[%s1 + $0x3e8] sm:$0xf]
  %v264 = vld [vmem:[%s1 + $0x3ec] sm:$0xf]
  %v265 = vld [vmem:[%s1 + $0x3f0] sm:$0xf]
  %v266 = vld [vmem:[%s1 + $0x3f4] sm:$0xf]
  %v267 = vld [vmem:[%s1 + $0x3f8] sm:$0xf]
  %v268 = vld [vmem:[%s1 + $0x3fc] sm:$0xf]
  %270 = vst [vmem:[#allocation1] ss:$9 sm:$0xff] %v11
  %v271 = vld [vmem:[#allocation1] sm:$0xff]
  %v272 = vld [vmem:[#allocation1 + $0x9] sm:$0xff]
  %v273 = vld [vmem:[#allocation1 + $0x12] sm:$0xff]
  %v274 = vld [vmem:[#allocation1 + $0x1b] sm:$0xff]
  %v275 = vld [vmem:[#allocation1 + $0x24] sm:$0xff]
  %v276 = vld [vmem:[#allocation1 + $0x2d] sm:$0xff]
  %v277 = vld [vmem:[#allocation1 + $0x36] sm:$0xff]
  %v278 = vld [vmem:[#allocation1 + $0x3f] sm:$0xff]
  %280 = vst [vmem:[#allocation1] ss:$9 sm:$0xff] %v12
  %v281 = vld [vmem:[#allocation1] sm:$0xff]
  %v282 = vld [vmem:[#allocation1 + $0x9] sm:$0xff]
  %v283 = vld [vmem:[#allocation1 + $0x12] sm:$0xff]
  %v284 = vld [vmem:[#allocation1 + $0x1b] sm:$0xff]
  %v285 = vld [vmem:[#allocation1 + $0x24] sm:$0xff]
  %v286 = vld [vmem:[#allocation1 + $0x2d] sm:$0xff]
  %v287 = vld [vmem:[#allocation1 + $0x36] sm:$0xff]
  %v288 = vld [vmem:[#allocation1 + $0x3f] sm:$0xff]
  %v561 = vunpack.c.l.b16 %v13
  %v562 = vunpack.c.l.b16 %v14
  %v563 = vunpack.c.l.b16 %v15
  %v564 = vunpack.c.l.b16 %v16
  %v565 = vunpack.c.l.b16 %v17
  %v566 = vunpack.c.l.b16 %v18
  %v567 = vunpack.c.l.b16 %v19
  %v568 = vunpack.c.l.b16 %v20
  %v569 = vunpack.c.l.b16 %v21
  %v570 = vunpack.c.l.b16 %v22
  %v571 = vunpack.c.l.b16 %v23
  %v572 = vunpack.c.l.b16 %v24
  %v573 = vunpack.c.l.b16 %v25
  %v574 = vunpack.c.l.b16 %v26
  %v575 = vunpack.c.l.b16 %v27
  %v576 = vunpack.c.l.b16 %v28
  %v577 = vunpack.c.l.b16 %v29
  %v578 = vunpack.c.l.b16 %v30
  %v579 = vunpack.c.l.b16 %v31
  %v580 = vunpack.c.l.b16 %v32
  %v581 = vunpack.c.l.b16 %v33
  %v582 = vunpack.c.l.b16 %v34
  %v583 = vunpack.c.l.b16 %v35
  %v584 = vunpack.c.l.b16 %v36
  %v585 = vunpack.c.l.b16 %v37
  %v586 = vunpack.c.l.b16 %v38
  %v587 = vunpack.c.l.b16 %v39
  %v588 = vunpack.c.l.b16 %v40
  %v589 = vunpack.c.l.b16 %v41
  %v590 = vunpack.c.l.b16 %v42
  %v591 = vunpack.c.l.b16 %v43
  %v592 = vunpack.c.l.b16 %v44
  %v593 = vunpack.c.l.b16 %v45
  %v594 = vunpack.c.l.b16 %v46
  %v595 = vunpack.c.l.b16 %v47
  %v596 = vunpack.c.l.b16 %v48
  %v597 = vunpack.c.l.b16 %v49
  %v598 = vunpack.c.l.b16 %v50
  %v599 = vunpack.c.l.b16 %v51
  %v600 = vunpack.c.l.b16 %v52
  %v601 = vunpack.c.l.b16 %v53
  %v602 = vunpack.c.l.b16 %v54
  %v603 = vunpack.c.l.b16 %v55
  %v604 = vunpack.c.l.b16 %v56
  %v605 = vunpack.c.l.b16 %v57
  %v606 = vunpack.c.l.b16 %v58
  %v607 = vunpack.c.l.b16 %v59
  %v608 = vunpack.c.l.b16 %v60
  %v609 = vunpack.c.l.b16 %v61
  %v610 = vunpack.c.l.b16 %v62
  %v611 = vunpack.c.l.b16 %v63
  %v612 = vunpack.c.l.b16 %v64
  %v613 = vunpack.c.l.b16 %v65
  %v614 = vunpack.c.l.b16 %v66
  %v615 = vunpack.c.l.b16 %v67
  %v616 = vunpack.c.l.b16 %v68
  %v617 = vunpack.c.l.b16 %v69
  %v618 = vunpack.c.l.b16 %v70
  %v619 = vunpack.c.l.b16 %v71
  %v620 = vunpack.c.l.b16 %v72
  %v621 = vunpack.c.l.b16 %v73
  %v622 = vunpack.c.l.b16 %v74
  %v623 = vunpack.c.l.b16 %v75
  %v624 = vunpack.c.l.b16 %v76
  %v625 = vunpack.c.l.b16 %v77
  %v626 = vunpack.c.l.b16 %v78
  %v627 = vunpack.c.l.b16 %v79
  %v628 = vunpack.c.l.b16 %v80
  %v629 = vunpack.c.l.b16 %v81
  %v630 = vunpack.c.l.b16 %v82
  %v631 = vunpack.c.l.b16 %v83
  %v632 = vunpack.c.l.b16 %v84
  %v633 = vunpack.c.l.b16 %v85
  %v634 = vunpack.c.l.b16 %v86
  %v635 = vunpack.c.l.b16 %v87
  %v636 = vunpack.c.l.b16 %v88
  %v637 = vunpack.c.l.b16 %v89
  %v638 = vunpack.c.l.b16 %v90
  %v639 = vunpack.c.l.b16 %v91
  %v640 = vunpack.c.l.b16 %v92
  %v641 = vunpack.c.l.b16 %v93
  %v642 = vunpack.c.l.b16 %v94
  %v643 = vunpack.c.l.b16 %v95
  %v644 = vunpack.c.l.b16 %v96
  %v645 = vunpack.c.l.b16 %v97
  %v646 = vunpack.c.l.b16 %v98
  %v647 = vunpack.c.l.b16 %v99
  %v648 = vunpack.c.l.b16 %v100
  %v649 = vunpack.c.l.b16 %v101
  %v650 = vunpack.c.l.b16 %v102
  %v651 = vunpack.c.l.b16 %v103
  %v652 = vunpack.c.l.b16 %v104
  %v653 = vunpack.c.l.b16 %v105
  %v654 = vunpack.c.l.b16 %v106
  %v655 = vunpack.c.l.b16 %v107
  %v656 = vunpack.c.l.b16 %v108
  %v657 = vunpack.c.l.b16 %v109
  %v658 = vunpack.c.l.b16 %v110
  %v659 = vunpack.c.l.b16 %v111
  %v660 = vunpack.c.l.b16 %v112
  %v661 = vunpack.c.l.b16 %v113
  %v662 = vunpack.c.l.b16 %v114
  %v663 = vunpack.c.l.b16 %v115
  %v664 = vunpack.c.l.b16 %v116
  %v665 = vunpack.c.l.b16 %v117
  %v666 = vunpack.c.l.b16 %v118
  %v667 = vunpack.c.l.b16 %v119
  %v668 = vunpack.c.l.b16 %v120
  %v669 = vunpack.c.l.b16 %v121
  %v670 = vunpack.c.l.b16 %v122
  %v671 = vunpack.c.l.b16 %v123
  %v672 = vunpack.c.l.b16 %v124
  %v673 = vunpack.c.l.b16 %v125
  %v674 = vunpack.c.l.b16 %v126
  %v675 = vunpack.c.l.b16 %v127
  %v676 = vunpack.c.l.b16 %v128
  %v677 = vunpack.c.l.b16 %v129
  %v678 = vunpack.c.l.b16 %v130
  %v679 = vunpack.c.l.b16 %v131
  %v680 = vunpack.c.l.b16 %v132
  %v681 = vunpack.c.l.b16 %v133
  %v682 = vunpack.c.l.b16 %v134
  %v683 = vunpack.c.l.b16 %v135
  %v684 = vunpack.c.l.b16 %v136
  %v685 = vunpack.c.l.b16 %v137
  %v686 = vunpack.c.l.b16 %v138
  %v687 = vunpack.c.l.b16 %v139
  %v688 = vunpack.c.l.b16 %v140
  %v689 = vunpack.c.l.b16 %v141
  %v690 = vunpack.c.l.b16 %v142
  %v691 = vunpack.c.l.b16 %v143
  %v692 = vunpack.c.l.b16 %v144
  %v693 = vunpack.c.l.b16 %v145
  %v694 = vunpack.c.l.b16 %v146
  %v695 = vunpack.c.l.b16 %v147
  %v696 = vunpack.c.l.b16 %v148
  %v697 = vunpack.c.l.b16 %v149
  %v698 = vunpack.c.l.b16 %v150
  %v699 = vunpack.c.l.b16 %v151
  %v700 = vunpack.c.l.b16 %v152
  %v701 = vunpack.c.l.b16 %v153
  %v702 = vunpack.c.l.b16 %v154
  %v703 = vunpack.c.l.b16 %v155
  %v704 = vunpack.c.l.b16 %v156
  %v705 = vunpack.c.l.b16 %v157
  %v706 = vunpack.c.l.b16 %v158
  %v707 = vunpack.c.l.b16 %v159
  %v708 = vunpack.c.l.b16 %v160
  %v709 = vunpack.c.l.b16 %v161
  %v710 = vunpack.c.l.b16 %v162
  %v711 = vunpack.c.l.b16 %v163
  %v712 = vunpack.c.l.b16 %v164
  %v713 = vunpack.c.l.b16 %v165
  %v714 = vunpack.c.l.b16 %v166
  %v715 = vunpack.c.l.b16 %v167
  %v716 = vunpack.c.l.b16 %v168
  %v717 = vunpack.c.l.b16 %v169
  %v718 = vunpack.c.l.b16 %v170
  %v719 = vunpack.c.l.b16 %v171
  %v720 = vunpack.c.l.b16 %v172
  %v721 = vunpack.c.l.b16 %v173
  %v722 = vunpack.c.l.b16 %v174
  %v723 = vunpack.c.l.b16 %v175
  %v724 = vunpack.c.l.b16 %v176
  %v725 = vunpack.c.l.b16 %v177
  %v726 = vunpack.c.l.b16 %v178
  %v727 = vunpack.c.l.b16 %v179
  %v728 = vunpack.c.l.b16 %v180
  %v729 = vunpack.c.l.b16 %v181
  %v730 = vunpack.c.l.b16 %v182
  %v731 = vunpack.c.l.b16 %v183
  %v732 = vunpack.c.l.b16 %v184
  %v733 = vunpack.c.l.b16 %v185
  %v734 = vunpack.c.l.b16 %v186
  %v735 = vunpack.c.l.b16 %v187
  %v736 = vunpack.c.l.b16 %v188
  %v737 = vunpack.c.l.b16 %v189
  %v738 = vunpack.c.l.b16 %v190
  %v739 = vunpack.c.l.b16 %v191
  %v740 = vunpack.c.l.b16 %v192
  %v741 = vunpack.c.l.b16 %v193
  %v742 = vunpack.c.l.b16 %v194
  %v743 = vunpack.c.l.b16 %v195
  %v744 = vunpack.c.l.b16 %v196
  %v745 = vunpack.c.l.b16 %v197
  %v746 = vunpack.c.l.b16 %v198
  %v747 = vunpack.c.l.b16 %v199
  %v748 = vunpack.c.l.b16 %v200
  %v749 = vunpack.c.l.b16 %v201
  %v750 = vunpack.c.l.b16 %v202
  %v751 = vunpack.c.l.b16 %v203
  %v752 = vunpack.c.l.b16 %v204
  %v753 = vunpack.c.l.b16 %v205
  %v754 = vunpack.c.l.b16 %v206
  %v755 = vunpack.c.l.b16 %v207
  %v756 = vunpack.c.l.b16 %v208
  %v757 = vunpack.c.l.b16 %v209
  %v758 = vunpack.c.l.b16 %v210
  %v759 = vunpack.c.l.b16 %v211
  %v760 = vunpack.c.l.b16 %v212
  %v761 = vunpack.c.l.b16 %v213
  %v762 = vunpack.c.l.b16 %v214
  %v763 = vunpack.c.l.b16 %v215
  %v764 = vunpack.c.l.b16 %v216
  %v765 = vunpack.c.l.b16 %v217
  %v766 = vunpack.c.l.b16 %v218
  %v767 = vunpack.c.l.b16 %v219
  %v768 = vunpack.c.l.b16 %v220
  %v769 = vunpack.c.l.b16 %v221
  %v770 = vunpack.c.l.b16 %v222
  %v771 = vunpack.c.l.b16 %v223
  %v772 = vunpack.c.l.b16 %v224
  %v773 = vunpack.c.l.b16 %v225
  %v774 = vunpack.c.l.b16 %v226
  %v775 = vunpack.c.l.b16 %v227
  %v776 = vunpack.c.l.b16 %v228
  %v777 = vunpack.c.l.b16 %v229
  %v778 = vunpack.c.l.b16 %v230
  %v779 = vunpack.c.l.b16 %v231
  %v780 = vunpack.c.l.b16 %v232
  %v781 = vunpack.c.l.b16 %v233
  %v782 = vunpack.c.l.b16 %v234
  %v783 = vunpack.c.l.b16 %v235
  %v784 = vunpack.c.l.b16 %v236
  %v785 = vunpack.c.l.b16 %v237
  %v786 = vunpack.c.l.b16 %v238
  %v787 = vunpack.c.l.b16 %v239
  %v788 = vunpack.c.l.b16 %v240
  %v789 = vunpack.c.l.b16 %v241
  %v790 = vunpack.c.l.b16 %v242
  %v791 = vunpack.c.l.b16 %v243
  %v792 = vunpack.c.l.b16 %v244
  %v793 = vunpack.c.l.b16 %v245
  %v794 = vunpack.c.l.b16 %v246
  %v795 = vunpack.c.l.b16 %v247
  %v796 = vunpack.c.l.b16 %v248
  %v797 = vunpack.c.l.b16 %v249
  %v798 = vunpack.c.l.b16 %v250
  %v799 = vunpack.c.l.b16 %v251
  %v800 = vunpack.c.l.b16 %v252
  %v801 = vunpack.c.l.b16 %v253
  %v802 = vunpack.c.l.b16 %v254
  %v803 = vunpack.c.l.b16 %v255
  %v804 = vunpack.c.l.b16 %v256
  %v805 = vunpack.c.l.b16 %v257
  %v806 = vunpack.c.l.b16 %v258
  %v807 = vunpack.c.l.b16 %v259
  %v808 = vunpack.c.l.b16 %v260
  %v809 = vunpack.c.l.b16 %v261
  %v810 = vunpack.c.l.b16 %v262
  %v811 = vunpack.c.l.b16 %v263
  %v812 = vunpack.c.l.b16 %v264
  %v813 = vunpack.c.l.b16 %v265
  %v814 = vunpack.c.l.b16 %v266
  %v815 = vunpack.c.l.b16 %v267
  %v816 = vunpack.c.l.b16 %v268
  %v817 = vpack.c.b16 %v562, %v561
  %v818 = vpack.c.b16 %v564, %v563
  %v819 = vpack.c.b16 %v566, %v565
  %v820 = vpack.c.b16 %v568, %v567
  %v821 = vpack.c.b16 %v570, %v569
  %v822 = vpack.c.b16 %v572, %v571
  %v823 = vpack.c.b16 %v574, %v573
  %v824 = vpack.c.b16 %v576, %v575
  %v825 = vpack.c.b16 %v578, %v577
  %v826 = vpack.c.b16 %v580, %v579
  %v827 = vpack.c.b16 %v582, %v581
  %v828 = vpack.c.b16 %v584, %v583
  %v829 = vpack.c.b16 %v586, %v585
  %v830 = vpack.c.b16 %v588, %v587
  %v831 = vpack.c.b16 %v590, %v589
  %v832 = vpack.c.b16 %v592, %v591
  %v833 = vpack.c.b16 %v594, %v593
  %v834 = vpack.c.b16 %v596, %v595
  %v835 = vpack.c.b16 %v598, %v597
  %v836 = vpack.c.b16 %v600, %v599
  %v837 = vpack.c.b16 %v602, %v601
  %v838 = vpack.c.b16 %v604, %v603
  %v839 = vpack.c.b16 %v606, %v605
  %v840 = vpack.c.b16 %v608, %v607
  %v841 = vpack.c.b16 %v610, %v609
  %v842 = vpack.c.b16 %v612, %v611
  %v843 = vpack.c.b16 %v614, %v613
  %v844 = vpack.c.b16 %v616, %v615
  %v845 = vpack.c.b16 %v618, %v617
  %v846 = vpack.c.b16 %v620, %v619
  %v847 = vpack.c.b16 %v622, %v621
  %v848 = vpack.c.b16 %v624, %v623
  %v849 = vpack.c.b16 %v626, %v625
  %v850 = vpack.c.b16 %v628, %v627
  %v851 = vpack.c.b16 %v630, %v629
  %v852 = vpack.c.b16 %v632, %v631
  %v853 = vpack.c.b16 %v634, %v633
  %v854 = vpack.c.b16 %v636, %v635
  %v855 = vpack.c.b16 %v638, %v637
  %v856 = vpack.c.b16 %v640, %v639
  %v857 = vpack.c.b16 %v642, %v641
  %v858 = vpack.c.b16 %v644, %v643
  %v859 = vpack.c.b16 %v646, %v645
  %v860 = vpack.c.b16 %v648, %v647
  %v861 = vpack.c.b16 %v650, %v649
  %v862 = vpack.c.b16 %v652, %v651
  %v863 = vpack.c.b16 %v654, %v653
  %v864 = vpack.c.b16 %v656, %v655
  %v865 = vpack.c.b16 %v658, %v657
  %v866 = vpack.c.b16 %v660, %v659
  %v867 = vpack.c.b16 %v662, %v661
  %v868 = vpack.c.b16 %v664, %v663
  %v869 = vpack.c.b16 %v666, %v665
  %v870 = vpack.c.b16 %v668, %v667
  %v871 = vpack.c.b16 %v670, %v669
  %v872 = vpack.c.b16 %v672, %v671
  %v873 = vpack.c.b16 %v674, %v673
  %v874 = vpack.c.b16 %v676, %v675
  %v875 = vpack.c.b16 %v678, %v677
  %v876 = vpack.c.b16 %v680, %v679
  %v877 = vpack.c.b16 %v682, %v681
  %v878 = vpack.c.b16 %v684, %v683
  %v879 = vpack.c.b16 %v686, %v685
  %v880 = vpack.c.b16 %v688, %v687
  %v881 = vpack.c.b16 %v690, %v689
  %v882 = vpack.c.b16 %v692, %v691
  %v883 = vpack.c.b16 %v694, %v693
  %v884 = vpack.c.b16 %v696, %v695
  %v885 = vpack.c.b16 %v698, %v697
  %v886 = vpack.c.b16 %v700, %v699
  %v887 = vpack.c.b16 %v702, %v701
  %v888 = vpack.c.b16 %v704, %v703
  %v889 = vpack.c.b16 %v706, %v705
  %v890 = vpack.c.b16 %v708, %v707
  %v891 = vpack.c.b16 %v710, %v709
  %v892 = vpack.c.b16 %v712, %v711
  %v893 = vpack.c.b16 %v714, %v713
  %v894 = vpack.c.b16 %v716, %v715
  %v895 = vpack.c.b16 %v718, %v717
  %v896 = vpack.c.b16 %v720, %v719
  %v897 = vpack.c.b16 %v722, %v721
  %v898 = vpack.c.b16 %v724, %v723
  %v899 = vpack.c.b16 %v726, %v725
  %v900 = vpack.c.b16 %v728, %v727
  %v901 = vpack.c.b16 %v730, %v729
  %v902 = vpack.c.b16 %v732, %v731
  %v903 = vpack.c.b16 %v734, %v733
  %v904 = vpack.c.b16 %v736, %v735
  %v905 = vpack.c.b16 %v738, %v737
  %v906 = vpack.c.b16 %v740, %v739
  %v907 = vpack.c.b16 %v742, %v741
  %v908 = vpack.c.b16 %v744, %v743
  %v909 = vpack.c.b16 %v746, %v745
  %v910 = vpack.c.b16 %v748, %v747
  %v911 = vpack.c.b16 %v750, %v749
  %v912 = vpack.c.b16 %v752, %v751
  %v913 = vpack.c.b16 %v754, %v753
  %v914 = vpack.c.b16 %v756, %v755
  %v915 = vpack.c.b16 %v758, %v757
  %v916 = vpack.c.b16 %v760, %v759
  %v917 = vpack.c.b16 %v762, %v761
  %v918 = vpack.c.b16 %v764, %v763
  %v919 = vpack.c.b16 %v766, %v765
  %v920 = vpack.c.b16 %v768, %v767
  %v921 = vpack.c.b16 %v770, %v769
  %v922 = vpack.c.b16 %v772, %v771
  %v923 = vpack.c.b16 %v774, %v773
  %v924 = vpack.c.b16 %v776, %v775
  %v925 = vpack.c.b16 %v778, %v777
  %v926 = vpack.c.b16 %v780, %v779
  %v927 = vpack.c.b16 %v782, %v781
  %v928 = vpack.c.b16 %v784, %v783
  %v929 = vpack.c.b16 %v786, %v785
  %v930 = vpack.c.b16 %v788, %v787
  %v931 = vpack.c.b16 %v790, %v789
  %v932 = vpack.c.b16 %v792, %v791
  %v933 = vpack.c.b16 %v794, %v793
  %v934 = vpack.c.b16 %v796, %v795
  %v935 = vpack.c.b16 %v798, %v797
  %v936 = vpack.c.b16 %v800, %v799
  %v937 = vpack.c.b16 %v802, %v801
  %v938 = vpack.c.b16 %v804, %v803
  %v939 = vpack.c.b16 %v806, %v805
  %v940 = vpack.c.b16 %v808, %v807
  %v941 = vpack.c.b16 %v810, %v809
  %v942 = vpack.c.b16 %v812, %v811
  %v943 = vpack.c.b16 %v814, %v813
  %v944 = vpack.c.b16 %v816, %v815
  %1073 = vmatpush.bf16.msra.mxu0 %v824
  %1074 = vmatpush.bf16.msra.mxu0 %v823
  %1075 = vmatpush.bf16.msra.mxu0 %v822
  %1076 = vmatpush.bf16.msra.mxu0 %v821
  %1077 = vmatpush.bf16.msra.mxu0 %v820
  %1078 = vmatpush.bf16.msra.mxu0 %v819
  %1079 = vmatpush.bf16.msra.mxu0 %v818
  %1080 = vmatpush.bf16.msra.mxu0 %v817
  %1081 = vmatmul.bf16.gmra.mxu0 %v271
  %v1082 = vpop.f32.mrf.mxu0
  %v1083 = vadd.f32 0.0, %v1082
  %v1084 = vpop.f32.mrf.mxu0
  %1085 = vdwg.mxu0
  %1086 = vmatpush.bf16.msra.mxu0 %v832
  %1087 = vmatpush.bf16.msra.mxu0 %v831
  %1088 = vmatpush.bf16.msra.mxu0 %v830
  %1089 = vmatpush.bf16.msra.mxu0 %v829
  %1090 = vmatpush.bf16.msra.mxu0 %v828
  %1091 = vmatpush.bf16.msra.mxu0 %v827
  %1092 = vmatpush.bf16.msra.mxu0 %v826
  %1093 = vmatpush.bf16.msra.mxu0 %v825
  %1094 = vmatmul.bf16.gmra.mxu0 %v272
  %v1095 = vpop.f32.mrf.mxu0
  %v1096 = vadd.f32 %v1083, %v1095
  %v1097 = vpop.f32.mrf.mxu0
  %1098 = vdwg.mxu0
  %1099 = vmatpush.bf16.msra.mxu0 %v840
  %1100 = vmatpush.bf16.msra.mxu0 %v839
  %1101 = vmatpush.bf16.msra.mxu0 %v838
  %1102 = vmatpush.bf16.msra.mxu0 %v837
  %1103 = vmatpush.bf16.msra.mxu0 %v836
  %1104 = vmatpush.bf16.msra.mxu0 %v835
  %1105 = vmatpush.bf16.msra.mxu0 %v834
  %1106 = vmatpush.bf16.msra.mxu0 %v833
  %1107 = vmatmul.bf16.gmra.mxu0 %v273
  %v1108 = vpop.f32.mrf.mxu0
  %v1109 = vadd.f32 %v1096, %v1108
  %v1110 = vpop.f32.mrf.mxu0
  %1111 = vdwg.mxu0
  %1112 = vmatpush.bf16.msra.mxu0 %v848
  %1113 = vmatpush.bf16.msra.mxu0 %v847
  %1114 = vmatpush.bf16.msra.mxu0 %v846
  %1115 = vmatpush.bf16.msra.mxu0 %v845
  %1116 = vmatpush.bf16.msra.mxu0 %v844
  %1117 = vmatpush.bf16.msra.mxu0 %v843
  %1118 = vmatpush.bf16.msra.mxu0 %v842
  %1119 = vmatpush.bf16.msra.mxu0 %v841
  %1120 = vmatmul.bf16.gmra.mxu0 %v274
  %v1121 = vpop.f32.mrf.mxu0
  %v1122 = vadd.f32 %v1109, %v1121
  %v1123 = vpop.f32.mrf.mxu0
  %1124 = vdwg.mxu0
  %1125 = vmatpush.bf16.msra.mxu0 %v856
  %1126 = vmatpush.bf16.msra.mxu0 %v855
  %1127 = vmatpush.bf16.msra.mxu0 %v854
  %1128 = vmatpush.bf16.msra.mxu0 %v853
  %1129 = vmatpush.bf16.msra.mxu0 %v852
  %1130 = vmatpush.bf16.msra.mxu0 %v851
  %1131 = vmatpush.bf16.msra.mxu0 %v850
  %1132 = vmatpush.bf16.msra.mxu0 %v849
  %1133 = vmatmul.bf16.gmra.mxu0 %v275
  %v1134 = vpop.f32.mrf.mxu0
  %v1135 = vadd.f32 %v1122, %v1134
  %v1136 = vpop.f32.mrf.mxu0
  %1137 = vdwg.mxu0
  %1138 = vmatpush.bf16.msra.mxu0 %v864
  %1139 = vmatpush.bf16.msra.mxu0 %v863
  %1140 = vmatpush.bf16.msra.mxu0 %v862
  %1141 = vmatpush.bf16.msra.mxu0 %v861
  %1142 = vmatpush.bf16.msra.mxu0 %v860
  %1143 = vmatpush.bf16.msra.mxu0 %v859
  %1144 = vmatpush.bf16.msra.mxu0 %v858
  %1145 = vmatpush.bf16.msra.mxu0 %v857
  %1146 = vmatmul.bf16.gmra.mxu0 %v276
  %v1147 = vpop.f32.mrf.mxu0
  %v1148 = vadd.f32 %v1135, %v1147
  %v1149 = vpop.f32.mrf.mxu0
  %1150 = vdwg.mxu0
  %1151 = vmatpush.bf16.msra.mxu0 %v872
  %1152 = vmatpush.bf16.msra.mxu0 %v871
  %1153 = vmatpush.bf16.msra.mxu0 %v870
  %1154 = vmatpush.bf16.msra.mxu0 %v869
  %1155 = vmatpush.bf16.msra.mxu0 %v868
  %1156 = vmatpush.bf16.msra.mxu0 %v867
  %1157 = vmatpush.bf16.msra.mxu0 %v866
  %1158 = vmatpush.bf16.msra.mxu0 %v865
  %1159 = vmatmul.bf16.gmra.mxu0 %v277
  %v1160 = vpop.f32.mrf.mxu0
  %v1161 = vadd.f32 %v1148, %v1160
  %v1162 = vpop.f32.mrf.mxu0
  %1163 = vdwg.mxu0
  %1164 = vmatpush.bf16.msra.mxu0 %v880
  %1165 = vmatpush.bf16.msra.mxu0 %v879
  %1166 = vmatpush.bf16.msra.mxu0 %v878
  %1167 = vmatpush.bf16.msra.mxu0 %v877
  %1168 = vmatpush.bf16.msra.mxu0 %v876
  %1169 = vmatpush.bf16.msra.mxu0 %v875
  %1170 = vmatpush.bf16.msra.mxu0 %v874
  %1171 = vmatpush.bf16.msra.mxu0 %v873
  %1172 = vmatmul.bf16.gmra.mxu0 %v278
  %v1173 = vpop.f32.mrf.mxu0
  %v1174 = vadd.f32 %v1161, %v1173
  %v1175 = vpop.f32.mrf.mxu0
  %1176 = vdwg.mxu0
  %1177 = vmatpush.bf16.msra.mxu0 %v888
  %1178 = vmatpush.bf16.msra.mxu0 %v887
  %1179 = vmatpush.bf16.msra.mxu0 %v886
  %1180 = vmatpush.bf16.msra.mxu0 %v885
  %1181 = vmatpush.bf16.msra.mxu0 %v884
  %1182 = vmatpush.bf16.msra.mxu0 %v883
  %1183 = vmatpush.bf16.msra.mxu0 %v882
  %1184 = vmatpush.bf16.msra.mxu0 %v881
  %1185 = vmatmul.bf16.gmra.mxu0 %v281
  %v1186 = vpop.f32.mrf.mxu0
  %v1187 = vadd.f32 %v1174, %v1186
  %v1188 = vpop.f32.mrf.mxu0
  %1189 = vdwg.mxu0
  %1190 = vmatpush.bf16.msra.mxu0 %v896
  %1191 = vmatpush.bf16.msra.mxu0 %v895
  %1192 = vmatpush.bf16.msra.mxu0 %v894
  %1193 = vmatpush.bf16.msra.mxu0 %v893
  %1194 = vmatpush.bf16.msra.mxu0 %v892
  %1195 = vmatpush.bf16.msra.mxu0 %v891
  %1196 = vmatpush.bf16.msra.mxu0 %v890
  %1197 = vmatpush.bf16.msra.mxu0 %v889
  %1198 = vmatmul.bf16.gmra.mxu0 %v282
  %v1199 = vpop.f32.mrf.mxu0
  %v1200 = vadd.f32 %v1187, %v1199
  %v1201 = vpop.f32.mrf.mxu0
  %1202 = vdwg.mxu0
  %1203 = vmatpush.bf16.msra.mxu0 %v904
  %1204 = vmatpush.bf16.msra.mxu0 %v903
  %1205 = vmatpush.bf16.msra.mxu0 %v902
  %1206 = vmatpush.bf16.msra.mxu0 %v901
  %1207 = vmatpush.bf16.msra.mxu0 %v900
  %1208 = vmatpush.bf16.msra.mxu0 %v899
  %1209 = vmatpush.bf16.msra.mxu0 %v898
  %1210 = vmatpush.bf16.msra.mxu0 %v897
  %1211 = vmatmul.bf16.gmra.mxu0 %v283
  %v1212 = vpop.f32.mrf.mxu0
  %v1213 = vadd.f32 %v1200, %v1212
  %v1214 = vpop.f32.mrf.mxu0
  %1215 = vdwg.mxu0
  %1216 = vmatpush.bf16.msra.mxu0 %v912
  %1217 = vmatpush.bf16.msra.mxu0 %v911
  %1218 = vmatpush.bf16.msra.mxu0 %v910
  %1219 = vmatpush.bf16.msra.mxu0 %v909
  %1220 = vmatpush.bf16.msra.mxu0 %v908
  %1221 = vmatpush.bf16.msra.mxu0 %v907
  %1222 = vmatpush.bf16.msra.mxu0 %v906
  %1223 = vmatpush.bf16.msra.mxu0 %v905
  %1224 = vmatmul.bf16.gmra.mxu0 %v284
  %v1225 = vpop.f32.mrf.mxu0
  %v1226 = vadd.f32 %v1213, %v1225
  %v1227 = vpop.f32.mrf.mxu0
  %1228 = vdwg.mxu0
  %1229 = vmatpush.bf16.msra.mxu0 %v920
  %1230 = vmatpush.bf16.msra.mxu0 %v919
  %1231 = vmatpush.bf16.msra.mxu0 %v918
  %1232 = vmatpush.bf16.msra.mxu0 %v917
  %1233 = vmatpush.bf16.msra.mxu0 %v916
  %1234 = vmatpush.bf16.msra.mxu0 %v915
  %1235 = vmatpush.bf16.msra.mxu0 %v914
  %1236 = vmatpush.bf16.msra.mxu0 %v913
  %1237 = vmatmul.bf16.gmra.mxu0 %v285
  %v1238 = vpop.f32.mrf.mxu0
  %v1239 = vadd.f32 %v1226, %v1238
  %v1240 = vpop.f32.mrf.mxu0
  %1241 = vdwg.mxu0
  %1242 = vmatpush.bf16.msra.mxu0 %v928
  %1243 = vmatpush.bf16.msra.mxu0 %v927
  %1244 = vmatpush.bf16.msra.mxu0 %v926
  %1245 = vmatpush.bf16.msra.mxu0 %v925
  %1246 = vmatpush.bf16.msra.mxu0 %v924
  %1247 = vmatpush.bf16.msra.mxu0 %v923
  %1248 = vmatpush.bf16.msra.mxu0 %v922
  %1249 = vmatpush.bf16.msra.mxu0 %v921
  %1250 = vmatmul.bf16.gmra.mxu0 %v286
  %v1251 = vpop.f32.mrf.mxu0
  %v1252 = vadd.f32 %v1239, %v1251
  %v1253 = vpop.f32.mrf.mxu0
  %1254 = vdwg.mxu0
  %1255 = vmatpush.bf16.msra.mxu0 %v936
  %1256 = vmatpush.bf16.msra.mxu0 %v935
  %1257 = vmatpush.bf16.msra.mxu0 %v934
  %1258 = vmatpush.bf16.msra.mxu0 %v933
  %1259 = vmatpush.bf16.msra.mxu0 %v932
  %1260 = vmatpush.bf16.msra.mxu0 %v931
  %1261 = vmatpush.bf16.msra.mxu0 %v930
  %1262 = vmatpush.bf16.msra.mxu0 %v929
  %1263 = vmatmul.bf16.gmra.mxu0 %v287
  %v1264 = vpop.f32.mrf.mxu0
  %v1265 = vadd.f32 %v1252, %v1264
  %v1266 = vpop.f32.mrf.mxu0
  %1267 = vdwg.mxu0
  %1268 = vmatpush.bf16.msra.mxu0 %v944
  %1269 = vmatpush.bf16.msra.mxu0 %v943
  %1270 = vmatpush.bf16.msra.mxu0 %v942
  %1271 = vmatpush.bf16.msra.mxu0 %v941
  %1272 = vmatpush.bf16.msra.mxu0 %v940
  %1273 = vmatpush.bf16.msra.mxu0 %v939
  %1274 = vmatpush.bf16.msra.mxu0 %v938
  %1275 = vmatpush.bf16.msra.mxu0 %v937
  %1276 = vmatmul.bf16.gmra.mxu0 %v288
  %v1277 = vpop.f32.mrf.mxu0
  %v1278 = vadd.f32 %v1265, %v1277
  %v1279 = vpop.f32.mrf.mxu0
  %1280 = vdwg.mxu0
  %v1281 = vsub.f32 0.0, %v1278
  %v1282 = vmul.f32 %v1281, 1.442695
  %v1283 = vpow.pop %v1282
  %v1284 = vadd.f32 %v1283, 1.0
  %v1285 = vrcp.pop %v1284
  %v1286 = vmul.f32 %v1284, %v1285
  %v1287 = vsub.f32 1.0, %v1286
  %v1288 = vmul.f32 %v1285, %v1287
  %v1289 = vadd.f32 %v1285, %v1288
  %vm1290 = vweird.f32 %v1284
  %vm1291 = vweird.f32 %v1285
  %vm1292 = vmor %vm1290, %vm1291
  %v1293 = vsel %vm1292, %v1285, %v1289
  %v1294 = vand.u32 2147483647, %v1284
  %vm1295 = vcmp.eq.f32.partialorder %v1294, 8.507059e+37
  %v1296 = vand.u32 %v1284, 2147483648
  %v1297 = vor.u32 1.1754944e-38, %v1296
  %v1298 = vsel %vm1295, %v1297, %v1293
  %v1299 = vmul.f32 1.0, %v1298
  %vm1300 = vcmask 1024
  %1301 = vst.msk [vmem:[%s2] sm:$0x3] %vm1300, %v1299
  // Predicated region
  $region10: #{_lambda_.15} parent=0 // pred_check
    _
  $region11: #{_lambda_.15} parent=0 // pred_check_branch
    %1303 = sbr.rel (0) target = $region13
  $region12: #{_lambda_.15} parent=0 // pred_region
    _
  $region13: #{_lambda_.15} parent=0 // pred_fallthru
    _
  // Predicated region
  $region14: #{_lambda_.15} parent=0 // pred_check
    _
  $region15: #{_lambda_.15} parent=0 // pred_check_branch
    %1305 = sbr.rel (0) target = $region17
  $region16: #{_lambda_.15} parent=0 // pred_region
    _
  $region17: #{_lambda_.15} parent=0 // pred_fallthru
    _

</llo_original>
